<compile_context>
chip_gen: v7x
topology: tpu7x:2x2x1
jax: 0.10.0
libtpu: 0.0.40
codegen_flags: <defaults>
</compile_context>

<pallas_src>
import functools

import jax
import jax.numpy as jnp
from jax.experimental import pallas as pl
from jax.experimental.pallas import tpu as pltpu

LANE = 128  # TPU vreg lane width


def encoder_layer_kernel(src_ref, mask_ref,
                         wqkv_ref, bqkv_ref,
                         wo_ref, bo_ref,
                         ln1_g_ref, ln1_b_ref,
                         w1_ref, b1_ref, w2_ref, b2_ref,
                         ln2_g_ref, ln2_b_ref,
                         out_ref, *, n_heads, head_dim, embed_dim):
    Bt, S, Ep = src_ref.shape          # batch block, seq, padded embed
    H, hd = n_heads, head_dim
    hid = H * hd
    M = Bt * S
    pad = Ep - embed_dim               # zero-padded lanes on the embed axis

    # [Bt, S, Ep] -> [Bt*S, Ep]: give every matmul a real M dimension.
    x = src_ref[...].reshape(M, Ep).astype(jnp.float32)

    # ---- fused QKV projection: one big matmul instead of three skinny ones ----
    qkv = jnp.dot(x, wqkv_ref[...], preferred_element_type=jnp.float32) + bqkv_ref[...]
    inv_scale = jnp.float32(1.0) / jnp.sqrt(jnp.float32(hd))
    q = qkv[:, 0 * hid:1 * hid] * inv_scale      # fold 1/sqrt(hd) into Q once
    k = qkv[:, 1 * hid:2 * hid]
    v = qkv[:, 2 * hid:3 * hid]

    # ---- split heads -> [H*Bt, S, hd] (leading-dim stack/reshape, no lane concat)
    def to_heads(t):                              # t: [M, hid]
        t = jnp.stack([t[:, h * hd:(h + 1) * hd] for h in range(H)], axis=0)  # [H, M, hd]
        return t.reshape(H * Bt, S, hd)           # batch index = h*Bt + b
    q4, k4, v4 = to_heads(q), to_heads(k), to_heads(v)

    # ---- additive mask bias, hoisted out of the attention math ----------------
    mask = mask_ref[...]                          # [Bt, 1, S]
    bias = jnp.where(mask == 0, jnp.float32(-1e10), jnp.float32(0.0))
    bias = jnp.broadcast_to(bias[None], (H, Bt, 1, S)).reshape(H * Bt, 1, S)

    # ---- batched attention: single-batch-dim einsums, no explicit transpose ---
    energy = jnp.einsum('bqd,bkd->bqk', q4, k4,
                        preferred_element_type=jnp.float32) + bias   # [H*Bt, S, S]
    m = jnp.max(energy, axis=-1, keepdims=True)
    p = jnp.exp(energy - m)
    denom = jnp.sum(p, axis=-1, keepdims=True)
    attn = p * pl.reciprocal(denom, approx=True)                     # EUP reciprocal
    o = jnp.einsum('bqk,bkd->bqd', attn, v4,
                   preferred_element_type=jnp.float32)               # [H*Bt, S, hd]

    # ---- output projection with head-concat folded in: sum_h o_h @ wo_h -------
    wo3 = wo_ref[...]                                                # [H, hd, Ep]
    wo_b = jnp.broadcast_to(wo3[:, None], (H, Bt, hd, Ep)).reshape(H * Bt, hd, Ep)
    partial = jnp.einsum('bqd,bde->bqe', o, wo_b,
                         preferred_element_type=jnp.float32)         # [H*Bt, S, Ep]
    attn_out = jnp.sum(partial.reshape(H, Bt, S, Ep), axis=0).reshape(M, Ep)
    attn_out = attn_out + bo_ref[...]

    # ---- LayerNorm (biased variance, eps=1e-5) with zero-padding correction ----
    def layer_norm(y, g, b):
        mu = jnp.sum(y, axis=-1, keepdims=True) / embed_dim
        d = y - mu
        # padded lanes of y are exactly 0, so they contribute exactly mu^2 each
        var = (jnp.sum(d * d, axis=-1, keepdims=True) - pad * mu * mu) / embed_dim
        return d * jax.lax.rsqrt(var + jnp.float32(1e-5)) * g + b

    src1 = layer_norm(x + attn_out, ln1_g_ref[...], ln1_b_ref[...])

    # ---- positionwise feed-forward (dropout == identity, eval mode) ------------
    h1 = jnp.maximum(
        jnp.dot(src1, w1_ref[...], preferred_element_type=jnp.float32) + b1_ref[...],
        0.0)
    ff = jnp.dot(h1, w2_ref[...], preferred_element_type=jnp.float32) + b2_ref[...]

    out = layer_norm(src1 + ff, ln2_g_ref[...], ln2_b_ref[...])
    out_ref[...] = out.reshape(Bt, S, Ep).astype(out_ref.dtype)


def encoder_layer_pallas(src, src_mask, params, *, n_heads, block_b=None):
    B, S, E = src.shape
    hid = params["wq"].shape[1]
    pf = params["w1"].shape[1]
    hd = hid // n_heads
    Ep = ((E + LANE - 1) // LANE) * LANE          # lane-dense embed dim

    if block_b is None:
        # batch rows per grid step, but keep >= 2 grid steps (v7x has 2 TCs)
        block_b = 2 if (B % 2 == 0 and B >= 4) else 1
    assert B % block_b == 0

    pad_last = lambda a: jnp.pad(a, [(0, 0)] * (a.ndim - 1) + [(0, Ep - a.shape[-1])])
    pad_first = lambda a: jnp.pad(a, [(0, Ep - a.shape[0])] + [(0, 0)] * (a.ndim - 1))

    # Host-side weight fusion / padding (one-time, outside the kernel).
    src_p = pad_last(src)                                                   # [B,S,Ep]
    wqkv = pad_first(jnp.concatenate(
        [params["wq"], params["wk"], params["wv"]], axis=1))                # [Ep,3*hid]
    bqkv = jnp.concatenate([params["bq"], params["bk"], params["bv"]], axis=1)
    wo3 = pad_last(params["wo"]).reshape(n_heads, hd, Ep)                   # [H,hd,Ep]
    bo = pad_last(params["bo"])
    ln1_g, ln1_b = pad_last(params["ln1_g"]), pad_last(params["ln1_b"])
    w1 = pad_first(params["w1"])                                            # [Ep,pf]
    b1 = params["b1"]
    w2 = pad_last(params["w2"])                                             # [pf,Ep]
    b2 = pad_last(params["b2"])
    ln2_g, ln2_b = pad_last(params["ln2_g"]), pad_last(params["ln2_b"])

    kernel = functools.partial(encoder_layer_kernel,
                               n_heads=n_heads, head_dim=hd, embed_dim=E)

    # Grid-invariant weights: constant index_map, so they are only DMA'd once.
    full = lambda shape: pl.BlockSpec(shape, lambda b: (0,) * len(shape))

    out_p = pl.pallas_call(
        kernel,
        out_shape=jax.ShapeDtypeStruct((B, S, Ep), src.dtype),
        grid_spec=pltpu.PrefetchScalarGridSpec(
            num_scalar_prefetch=0,
            grid=(B // block_b,),
            in_specs=[
                pl.BlockSpec((block_b, S, Ep), lambda b: (b, 0, 0)),   # src (padded)
                pl.BlockSpec((block_b, 1, S), lambda b: (b, 0, 0)),    # mask
                full((Ep, 3 * hid)), full((1, 3 * hid)),               # fused Wqkv, bqkv
                full((n_heads, hd, Ep)), full((1, Ep)),                # Wo per head, bo
                full((1, Ep)), full((1, Ep)),                          # ln1 gamma, beta
                full((Ep, pf)), full((1, pf)),                         # W1, b1
                full((pf, Ep)), full((1, Ep)),                         # W2, b2
                full((1, Ep)), full((1, Ep)),                          # ln2 gamma, beta
            ],
            out_specs=pl.BlockSpec((block_b, S, Ep), lambda b: (b, 0, 0)),
        ),
        compiler_params=pltpu.CompilerParams(
            dimension_semantics=("parallel",),
            vmem_limit_bytes=48 * 1024 * 1024),
    )(src_p, src_mask, wqkv, bqkv, wo3, bo,
      ln1_g, ln1_b, w1, b1, w2, b2, ln2_g, ln2_b)

    return out_p[..., :E]


def encoder_layer_reference(src, src_mask, params, *, n_heads):
    """Pure-JAX reference mirroring the PyTorch forward (eval mode)."""
    B, S, E = src.shape
    hid = params["wq"].shape[1]
    hd = hid // n_heads
    x = src.astype(jnp.float32)

    q = x @ params["wq"] + params["bq"]
    k = x @ params["wk"] + params["bk"]
    v = x @ params["wv"] + params["bv"]
    split = lambda t: t.reshape(B, S, n_heads, hd).transpose(0, 2, 1, 3)
    qh, kh, vh = split(q), split(k), split(v)
    energy = jnp.einsum("bhqd,bhkd->bhqk", qh, kh) / jnp.sqrt(jnp.float32(hd))
    mask = src_mask[:, None, :, :]                       # [B,1,1,S]
    energy = jnp.where(mask == 0, -1e10, energy)
    attn = jax.nn.softmax(energy, axis=-1)
    o = jnp.einsum("bhqk,bhkd->bhqd", attn, vh).transpose(0, 2, 1, 3).reshape(B, S, hid)
    attn_out = o @ params["wo"] + params["bo"]

    def ln(y, g, b):
        mu = jnp.mean(y, -1, keepdims=True)
        var = jnp.mean((y - mu) ** 2, -1, keepdims=True)
        return (y - mu) / jnp.sqrt(var + 1e-5) * g + b

    src1 = ln(x + attn_out, params["ln1_g"], params["ln1_b"])
    ff = jnp.maximum(src1 @ params["w1"] + params["b1"], 0.0) @ params["w2"] + params["b2"]
    return ln(src1 + ff, params["ln2_g"], params["ln2_b"])


def init_params(key, embed_dim, hid_dim, pf_dim):
    ks = jax.random.split(key, 8)
    s = 0.05
    return {
        "wq": jax.random.normal(ks[0], (embed_dim, hid_dim), jnp.float32) * s,
        "bq": jnp.zeros((1, hid_dim), jnp.float32),
        "wk": jax.random.normal(ks[1], (embed_dim, hid_dim), jnp.float32) * s,
        "bk": jnp.zeros((1, hid_dim), jnp.float32),
        "wv": jax.random.normal(ks[2], (embed_dim, hid_dim), jnp.float32) * s,
        "bv": jnp.zeros((1, hid_dim), jnp.float32),
        "wo": jax.random.normal(ks[3], (hid_dim, embed_dim), jnp.float32) * s,
        "bo": jax.random.normal(ks[4], (1, embed_dim), jnp.float32) * s,
        "ln1_g": jnp.ones((1, embed_dim), jnp.float32),
        "ln1_b": jnp.zeros((1, embed_dim), jnp.float32),
        "w1": jax.random.normal(ks[5], (embed_dim, pf_dim), jnp.float32) * s,
        "b1": jax.random.normal(ks[6], (1, pf_dim), jnp.float32) * s,
        "w2": jax.random.normal(ks[7], (pf_dim, embed_dim), jnp.float32) * s,
        "b2": jnp.zeros((1, embed_dim), jnp.float32),
        "ln2_g": jnp.ones((1, embed_dim), jnp.float32),
        "ln2_b": jnp.zeros((1, embed_dim), jnp.float32),
    }


if __name__ == "__main__":
    B, S, E = 4, 8, 32          # batch, seq_len, embed_dim
    HID, HEADS, PF = 32, 4, 64  # hid_dim, n_heads, pf_dim

    key = jax.random.PRNGKey(0)
    k_src, k_params = jax.random.split(key)

    src = jax.random.normal(k_src, (B, S, E), jnp.float32)
    # mask layout [B, 1, S]; mask out some trailing key positions
    src_mask = jnp.ones((B, 1, S), jnp.float32)
    src_mask = src_mask.at[1, 0, S - 2:].set(0.0)
    src_mask = src_mask.at[3, 0, S - 3:].set(0.0)

    params = init_params(k_params, E, HID, PF)

    out = encoder_layer_pallas(src, src_mask, params, n_heads=HEADS)
    out = jax.block_until_ready(out)

    ref = encoder_layer_reference(src, src_mask, params, n_heads=HEADS)
    assert out.shape == (B, S, E)
    # tolerance accommodates the approximate (EUP) softmax reciprocal
    assert jnp.allclose(out, ref, atol=2e-3, rtol=2e-3), "mismatch vs JAX reference"

    print("KERNEL_OK")
</pallas_src>

<mosaic_0001>
module attributes {stable_mosaic.version = 11 : i64} {
  func.func @encoder_layer_kernel(%arg0: i32, %arg1: memref<2x8x128xf32, #tpu.memory_space<vmem>>, %arg2: memref<2x1x8xf32, #tpu.memory_space<vmem>>, %arg3: memref<128x96xf32, #tpu.memory_space<vmem>>, %arg4: memref<1x96xf32, #tpu.memory_space<vmem>>, %arg5: memref<4x8x128xf32, #tpu.memory_space<vmem>>, %arg6: memref<1x128xf32, #tpu.memory_space<vmem>>, %arg7: memref<1x128xf32, #tpu.memory_space<vmem>>, %arg8: memref<1x128xf32, #tpu.memory_space<vmem>>, %arg9: memref<128x64xf32, #tpu.memory_space<vmem>>, %arg10: memref<1x64xf32, #tpu.memory_space<vmem>>, %arg11: memref<64x128xf32, #tpu.memory_space<vmem>>, %arg12: memref<1x128xf32, #tpu.memory_space<vmem>>, %arg13: memref<1x128xf32, #tpu.memory_space<vmem>>, %arg14: memref<1x128xf32, #tpu.memory_space<vmem>>, %arg15: memref<2x8x128xf32, #tpu.memory_space<vmem>>) attributes {dimension_semantics = [#tpu.dimension_semantics<parallel>], iteration_bounds = array<i64: 2>, scalar_prefetch = 0 : i64, scratch_operands = 0 : i64, tpu.core_type = #tpu.core_type<tc>, window_params = [{transform_indices = @transform_0, window_bounds = array<i64: 2, 8, 128>}, {transform_indices = @transform_1, window_bounds = array<i64: 2, 1, 8>}, {pipeline_mode = #tpu.pipeline_mode<synchronous>, transform_indices = @transform_2, window_bounds = array<i64: 128, 96>}, {pipeline_mode = #tpu.pipeline_mode<synchronous>, transform_indices = @transform_3, window_bounds = array<i64: 1, 96>}, {pipeline_mode = #tpu.pipeline_mode<synchronous>, transform_indices = @transform_4, window_bounds = array<i64: 4, 8, 128>}, {pipeline_mode = #tpu.pipeline_mode<synchronous>, transform_indices = @transform_5, window_bounds = array<i64: 1, 128>}, {pipeline_mode = #tpu.pipeline_mode<synchronous>, transform_indices = @transform_6, window_bounds = array<i64: 1, 128>}, {pipeline_mode = #tpu.pipeline_mode<synchronous>, transform_indices = @transform_7, window_bounds = array<i64: 1, 128>}, {pipeline_mode = #tpu.pipeline_mode<synchronous>, transform_indices = @transform_8, window_bounds = array<i64: 128, 64>}, {pipeline_mode = #tpu.pipeline_mode<synchronous>, transform_indices = @transform_9, window_bounds = array<i64: 1, 64>}, {pipeline_mode = #tpu.pipeline_mode<synchronous>, transform_indices = @transform_10, window_bounds = array<i64: 64, 128>}, {pipeline_mode = #tpu.pipeline_mode<synchronous>, transform_indices = @transform_11, window_bounds = array<i64: 1, 128>}, {pipeline_mode = #tpu.pipeline_mode<synchronous>, transform_indices = @transform_12, window_bounds = array<i64: 1, 128>}, {pipeline_mode = #tpu.pipeline_mode<synchronous>, transform_indices = @transform_13, window_bounds = array<i64: 1, 128>}, {transform_indices = @transform_14, window_bounds = array<i64: 2, 8, 128>}]} {
    %c0 = arith.constant 0 : index
    %c0_0 = arith.constant 0 : index
    %c0_1 = arith.constant 0 : index
    %0 = vector.load %arg1[%c0, %c0_0, %c0_1] : memref<2x8x128xf32, #tpu.memory_space<vmem>>, vector<2x8x128xf32>
    %1 = vector.shape_cast %0 : vector<2x8x128xf32> to vector<16x128xf32>
    %c0_2 = arith.constant 0 : index
    %c0_3 = arith.constant 0 : index
    %2 = vector.load %arg3[%c0_2, %c0_3] : memref<128x96xf32, #tpu.memory_space<vmem>>, vector<128x96xf32>
    %cst = arith.constant dense<0.000000e+00> : vector<16x96xf32>
    %3 = tpu.matmul %1, %2, %cst {dimension_numbers = #tpu.dot_dimension_numbers<[1], [0], [0], [1], [0, 0, 1, 1], [], []>} : vector<16x128xf32>, vector<128x96xf32>, vector<16x96xf32> -> vector<16x96xf32>
    %c0_4 = arith.constant 0 : index
    %c0_5 = arith.constant 0 : index
    %4 = vector.load %arg4[%c0_4, %c0_5] : memref<1x96xf32, #tpu.memory_space<vmem>>, vector<1x96xf32>
    %5 = vector.broadcast %4 : vector<1x96xf32> to vector<16x96xf32>
    %6 = arith.addf %3, %5 : vector<16x96xf32>
    %cst_6 = arith.constant 8.000000e+00 : f32
    %7 = math.sqrt %cst_6 : f32
    %cst_7 = arith.constant 1.000000e+00 : f32
    %8 = arith.divf %cst_7, %7 : f32
    %9 = vector.extract_strided_slice %6 {offsets = [0, 0], sizes = [16, 32], strides = [1, 1]} : vector<16x96xf32> to vector<16x32xf32>
    %10 = vector.broadcast %8 : f32 to vector<16x32xf32>
    %11 = arith.mulf %9, %10 : vector<16x32xf32>
    %12 = vector.extract_strided_slice %6 {offsets = [0, 32], sizes = [16, 32], strides = [1, 1]} : vector<16x96xf32> to vector<16x32xf32>
    %13 = vector.extract_strided_slice %6 {offsets = [0, 64], sizes = [16, 32], strides = [1, 1]} : vector<16x96xf32> to vector<16x32xf32>
    %14 = vector.extract_strided_slice %11 {offsets = [0, 0], sizes = [16, 8], strides = [1, 1]} : vector<16x32xf32> to vector<16x8xf32>
    %15 = vector.extract_strided_slice %11 {offsets = [0, 8], sizes = [16, 8], strides = [1, 1]} : vector<16x32xf32> to vector<16x8xf32>
    %16 = vector.extract_strided_slice %11 {offsets = [0, 16], sizes = [16, 8], strides = [1, 1]} : vector<16x32xf32> to vector<16x8xf32>
    %17 = vector.extract_strided_slice %11 {offsets = [0, 24], sizes = [16, 8], strides = [1, 1]} : vector<16x32xf32> to vector<16x8xf32>
    %18 = vector.shape_cast %14 : vector<16x8xf32> to vector<1x16x8xf32>
    %19 = vector.shape_cast %15 : vector<16x8xf32> to vector<1x16x8xf32>
    %20 = vector.shape_cast %16 : vector<16x8xf32> to vector<1x16x8xf32>
    %21 = vector.shape_cast %17 : vector<16x8xf32> to vector<1x16x8xf32>
    %22 = tpu.concatenate %18, %19, %20, %21 in 0 : vector<1x16x8xf32>, vector<1x16x8xf32>, vector<1x16x8xf32>, vector<1x16x8xf32> -> vector<4x16x8xf32>
    %23 = vector.shape_cast %22 : vector<4x16x8xf32> to vector<8x8x8xf32>
    %24 = vector.extract_strided_slice %12 {offsets = [0, 0], sizes = [16, 8], strides = [1, 1]} : vector<16x32xf32> to vector<16x8xf32>
    %25 = vector.extract_strided_slice %12 {offsets = [0, 8], sizes = [16, 8], strides = [1, 1]} : vector<16x32xf32> to vector<16x8xf32>
    %26 = vector.extract_strided_slice %12 {offsets = [0, 16], sizes = [16, 8], strides = [1, 1]} : vector<16x32xf32> to vector<16x8xf32>
    %27 = vector.extract_strided_slice %12 {offsets = [0, 24], sizes = [16, 8], strides = [1, 1]} : vector<16x32xf32> to vector<16x8xf32>
    %28 = vector.shape_cast %24 : vector<16x8xf32> to vector<1x16x8xf32>
    %29 = vector.shape_cast %25 : vector<16x8xf32> to vector<1x16x8xf32>
    %30 = vector.shape_cast %26 : vector<16x8xf32> to vector<1x16x8xf32>
    %31 = vector.shape_cast %27 : vector<16x8xf32> to vector<1x16x8xf32>
    %32 = tpu.concatenate %28, %29, %30, %31 in 0 : vector<1x16x8xf32>, vector<1x16x8xf32>, vector<1x16x8xf32>, vector<1x16x8xf32> -> vector<4x16x8xf32>
    %33 = vector.shape_cast %32 : vector<4x16x8xf32> to vector<8x8x8xf32>
    %34 = vector.extract_strided_slice %13 {offsets = [0, 0], sizes = [16, 8], strides = [1, 1]} : vector<16x32xf32> to vector<16x8xf32>
    %35 = vector.extract_strided_slice %13 {offsets = [0, 8], sizes = [16, 8], strides = [1, 1]} : vector<16x32xf32> to vector<16x8xf32>
    %36 = vector.extract_strided_slice %13 {offsets = [0, 16], sizes = [16, 8], strides = [1, 1]} : vector<16x32xf32> to vector<16x8xf32>
    %37 = vector.extract_strided_slice %13 {offsets = [0, 24], sizes = [16, 8], strides = [1, 1]} : vector<16x32xf32> to vector<16x8xf32>
    %38 = vector.shape_cast %34 : vector<16x8xf32> to vector<1x16x8xf32>
    %39 = vector.shape_cast %35 : vector<16x8xf32> to vector<1x16x8xf32>
    %40 = vector.shape_cast %36 : vector<16x8xf32> to vector<1x16x8xf32>
    %41 = vector.shape_cast %37 : vector<16x8xf32> to vector<1x16x8xf32>
    %42 = tpu.concatenate %38, %39, %40, %41 in 0 : vector<1x16x8xf32>, vector<1x16x8xf32>, vector<1x16x8xf32>, vector<1x16x8xf32> -> vector<4x16x8xf32>
    %43 = vector.shape_cast %42 : vector<4x16x8xf32> to vector<8x8x8xf32>
    %c0_8 = arith.constant 0 : index
    %c0_9 = arith.constant 0 : index
    %c0_10 = arith.constant 0 : index
    %44 = vector.load %arg2[%c0_8, %c0_9, %c0_10] : memref<2x1x8xf32, #tpu.memory_space<vmem>>, vector<2x1x8xf32>
    %cst_11 = arith.constant 0.000000e+00 : f32
    %45 = vector.broadcast %cst_11 : f32 to vector<2x1x8xf32>
    %46 = arith.cmpf oeq, %44, %45 : vector<2x1x8xf32>
    %cst_12 = arith.constant -1.000000e+10 : f32
    %cst_13 = arith.constant 0.000000e+00 : f32
    %47 = vector.broadcast %cst_12 : f32 to vector<2x1x8xf32>
    %48 = vector.broadcast %cst_13 : f32 to vector<2x1x8xf32>
    %49 = arith.select %46, %47, %48 : vector<2x1x8xi1>, vector<2x1x8xf32>
    %50 = vector.shape_cast %49 : vector<2x1x8xf32> to vector<1x2x1x8xf32>
    %51 = vector.shape_cast %50 : vector<1x2x1x8xf32> to vector<1x2x1x8xf32>
    %52 = vector.broadcast %51 : vector<1x2x1x8xf32> to vector<4x2x1x8xf32>
    %53 = vector.shape_cast %52 : vector<4x2x1x8xf32> to vector<8x1x8xf32>
    "tpu.trace_start"() <{level = 10 : i32, message = "bqd,bkd->bqk"}> : () -> ()
    %cst_14 = arith.constant dense<0.000000e+00> : vector<8x8x8xf32>
    %54 = tpu.matmul %23, %33, %cst_14 {dimension_numbers = #tpu.dot_dimension_numbers<[2], [2], [1], [1], [0, 0, 0, 1, 1, 1], [0], [0]>} : vector<8x8x8xf32>, vector<8x8x8xf32>, vector<8x8x8xf32> -> vector<8x8x8xf32>
    "tpu.trace_stop"() : () -> ()
    %55 = vector.broadcast %53 : vector<8x1x8xf32> to vector<8x8x8xf32>
    %56 = arith.addf %54, %55 : vector<8x8x8xf32>
    %cst_15 = arith.constant dense<0xFF800000> : vector<8x8xf32>
    %57 = vector.multi_reduction <maximumf>, %56, %cst_15 [2] : vector<8x8x8xf32> to vector<8x8xf32>
    %58 = vector.shape_cast %57 : vector<8x8xf32> to vector<8x8x1xf32>
    %59 = vector.broadcast %58 : vector<8x8x1xf32> to vector<8x8x8xf32>
    %60 = arith.subf %56, %59 : vector<8x8x8xf32>
    %61 = math.exp %60 : vector<8x8x8xf32>
    %cst_16 = arith.constant dense<0.000000e+00> : vector<8x8xf32>
    %62 = vector.multi_reduction <add>, %61, %cst_16 [2] : vector<8x8x8xf32> to vector<8x8xf32>
    %63 = vector.shape_cast %62 : vector<8x8xf32> to vector<8x8x1xf32>
    %64 = tpu.reciprocal %63 {approx = true} : vector<8x8x1xf32> -> vector<8x8x1xf32>
    %65 = vector.broadcast %64 : vector<8x8x1xf32> to vector<8x8x8xf32>
    %66 = arith.mulf %61, %65 : vector<8x8x8xf32>
    "tpu.trace_start"() <{level = 10 : i32, message = "bqk,bkd->bqd"}> : () -> ()
    %cst_17 = arith.constant dense<0.000000e+00> : vector<8x8x8xf32>
    %67 = tpu.matmul %66, %43, %cst_17 {dimension_numbers = #tpu.dot_dimension_numbers<[2], [1], [1], [2], [0, 0, 0, 1, 1, 2], [0], [0]>} : vector<8x8x8xf32>, vector<8x8x8xf32>, vector<8x8x8xf32> -> vector<8x8x8xf32>
    "tpu.trace_stop"() : () -> ()
    %c0_18 = arith.constant 0 : index
    %c0_19 = arith.constant 0 : index
    %c0_20 = arith.constant 0 : index
    %68 = vector.load %arg5[%c0_18, %c0_19, %c0_20] : memref<4x8x128xf32, #tpu.memory_space<vmem>>, vector<4x8x128xf32>
    %69 = vector.shape_cast %68 : vector<4x8x128xf32> to vector<4x1x8x128xf32>
    %70 = vector.shape_cast %69 : vector<4x1x8x128xf32> to vector<4x1x8x128xf32>
    %71 = vector.broadcast %70 : vector<4x1x8x128xf32> to vector<4x2x8x128xf32>
    %72 = vector.shape_cast %71 : vector<4x2x8x128xf32> to vector<8x8x128xf32>
    "tpu.trace_start"() <{level = 10 : i32, message = "bqd,bde->bqe"}> : () -> ()
    %cst_21 = arith.constant dense<0.000000e+00> : vector<8x8x128xf32>
    %73 = tpu.matmul %67, %72, %cst_21 {dimension_numbers = #tpu.dot_dimension_numbers<[2], [1], [1], [2], [0, 0, 0, 1, 1, 2], [0], [0]>} : vector<8x8x8xf32>, vector<8x8x128xf32>, vector<8x8x128xf32> -> vector<8x8x128xf32>
    "tpu.trace_stop"() : () -> ()
    %74 = vector.shape_cast %73 : vector<8x8x128xf32> to vector<4x2x8x128xf32>
    %cst_22 = arith.constant dense<0.000000e+00> : vector<2x8x128xf32>
    %75 = vector.multi_reduction <add>, %74, %cst_22 [0] : vector<4x2x8x128xf32> to vector<2x8x128xf32>
    %76 = vector.shape_cast %75 : vector<2x8x128xf32> to vector<16x128xf32>
    %c0_23 = arith.constant 0 : index
    %c0_24 = arith.constant 0 : index
    %77 = vector.load %arg6[%c0_23, %c0_24] : memref<1x128xf32, #tpu.memory_space<vmem>>, vector<1x128xf32>
    %78 = vector.broadcast %77 : vector<1x128xf32> to vector<16x128xf32>
    %79 = arith.addf %76, %78 : vector<16x128xf32>
    %80 = arith.addf %1, %79 : vector<16x128xf32>
    %c0_25 = arith.constant 0 : index
    %c0_26 = arith.constant 0 : index
    %81 = vector.load %arg7[%c0_25, %c0_26] : memref<1x128xf32, #tpu.memory_space<vmem>>, vector<1x128xf32>
    %c0_27 = arith.constant 0 : index
    %c0_28 = arith.constant 0 : index
    %82 = vector.load %arg8[%c0_27, %c0_28] : memref<1x128xf32, #tpu.memory_space<vmem>>, vector<1x128xf32>
    %cst_29 = arith.constant dense<0.000000e+00> : vector<16xf32>
    %83 = vector.multi_reduction <add>, %80, %cst_29 [1] : vector<16x128xf32> to vector<16xf32>
    %84 = vector.shape_cast %83 : vector<16xf32> to vector<16x1xf32>
    %cst_30 = arith.constant 3.200000e+01 : f32
    %85 = vector.broadcast %cst_30 : f32 to vector<16x1xf32>
    %86 = arith.divf %84, %85 : vector<16x1xf32>
    %87 = vector.broadcast %86 : vector<16x1xf32> to vector<16x128xf32>
    %88 = arith.subf %80, %87 : vector<16x128xf32>
    %89 = arith.mulf %88, %88 : vector<16x128xf32>
    %cst_31 = arith.constant dense<0.000000e+00> : vector<16xf32>
    %90 = vector.multi_reduction <add>, %89, %cst_31 [1] : vector<16x128xf32> to vector<16xf32>
    %91 = vector.shape_cast %90 : vector<16xf32> to vector<16x1xf32>
    %cst_32 = arith.constant 9.600000e+01 : f32
    %92 = vector.broadcast %cst_32 : f32 to vector<16x1xf32>
    %93 = arith.mulf %92, %86 : vector<16x1xf32>
    %94 = arith.mulf %93, %86 : vector<16x1xf32>
    %95 = arith.subf %91, %94 : vector<16x1xf32>
    %cst_33 = arith.constant 3.200000e+01 : f32
    %96 = vector.broadcast %cst_33 : f32 to vector<16x1xf32>
    %97 = arith.divf %95, %96 : vector<16x1xf32>
    %cst_34 = arith.constant 9.99999974E-6 : f32
    %98 = vector.broadcast %cst_34 : f32 to vector<16x1xf32>
    %99 = arith.addf %97, %98 : vector<16x1xf32>
    %100 = math.rsqrt %99 : vector<16x1xf32>
    %101 = vector.broadcast %100 : vector<16x1xf32> to vector<16x128xf32>
    %102 = arith.mulf %88, %101 : vector<16x128xf32>
    %103 = vector.broadcast %81 : vector<1x128xf32> to vector<16x128xf32>
    %104 = arith.mulf %102, %103 : vector<16x128xf32>
    %105 = vector.broadcast %82 : vector<1x128xf32> to vector<16x128xf32>
    %106 = arith.addf %104, %105 : vector<16x128xf32>
    %c0_35 = arith.constant 0 : index
    %c0_36 = arith.constant 0 : index
    %107 = vector.load %arg9[%c0_35, %c0_36] : memref<128x64xf32, #tpu.memory_space<vmem>>, vector<128x64xf32>
    %cst_37 = arith.constant dense<0.000000e+00> : vector<16x64xf32>
    %108 = tpu.matmul %106, %107, %cst_37 {dimension_numbers = #tpu.dot_dimension_numbers<[1], [0], [0], [1], [0, 0, 1, 1], [], []>} : vector<16x128xf32>, vector<128x64xf32>, vector<16x64xf32> -> vector<16x64xf32>
    %c0_38 = arith.constant 0 : index
    %c0_39 = arith.constant 0 : index
    %109 = vector.load %arg10[%c0_38, %c0_39] : memref<1x64xf32, #tpu.memory_space<vmem>>, vector<1x64xf32>
    %110 = vector.broadcast %109 : vector<1x64xf32> to vector<16x64xf32>
    %111 = arith.addf %108, %110 : vector<16x64xf32>
    %cst_40 = arith.constant 0.000000e+00 : f32
    %112 = vector.broadcast %cst_40 : f32 to vector<16x64xf32>
    %113 = arith.maximumf %111, %112 : vector<16x64xf32>
    %c0_41 = arith.constant 0 : index
    %c0_42 = arith.constant 0 : index
    %114 = vector.load %arg11[%c0_41, %c0_42] : memref<64x128xf32, #tpu.memory_space<vmem>>, vector<64x128xf32>
    %cst_43 = arith.constant dense<0.000000e+00> : vector<16x128xf32>
    %115 = tpu.matmul %113, %114, %cst_43 {dimension_numbers = #tpu.dot_dimension_numbers<[1], [0], [0], [1], [0, 0, 1, 1], [], []>} : vector<16x64xf32>, vector<64x128xf32>, vector<16x128xf32> -> vector<16x128xf32>
    %c0_44 = arith.constant 0 : index
    %c0_45 = arith.constant 0 : index
    %116 = vector.load %arg12[%c0_44, %c0_45] : memref<1x128xf32, #tpu.memory_space<vmem>>, vector<1x128xf32>
    %117 = vector.broadcast %116 : vector<1x128xf32> to vector<16x128xf32>
    %118 = arith.addf %115, %117 : vector<16x128xf32>
    %119 = arith.addf %106, %118 : vector<16x128xf32>
    %c0_46 = arith.constant 0 : index
    %c0_47 = arith.constant 0 : index
    %120 = vector.load %arg13[%c0_46, %c0_47] : memref<1x128xf32, #tpu.memory_space<vmem>>, vector<1x128xf32>
    %c0_48 = arith.constant 0 : index
    %c0_49 = arith.constant 0 : index
    %121 = vector.load %arg14[%c0_48, %c0_49] : memref<1x128xf32, #tpu.memory_space<vmem>>, vector<1x128xf32>
    %cst_50 = arith.constant dense<0.000000e+00> : vector<16xf32>
    %122 = vector.multi_reduction <add>, %119, %cst_50 [1] : vector<16x128xf32> to vector<16xf32>
    %123 = vector.shape_cast %122 : vector<16xf32> to vector<16x1xf32>
    %cst_51 = arith.constant 3.200000e+01 : f32
    %124 = vector.broadcast %cst_51 : f32 to vector<16x1xf32>
    %125 = arith.divf %123, %124 : vector<16x1xf32>
    %126 = vector.broadcast %125 : vector<16x1xf32> to vector<16x128xf32>
    %127 = arith.subf %119, %126 : vector<16x128xf32>
    %128 = arith.mulf %127, %127 : vector<16x128xf32>
    %cst_52 = arith.constant dense<0.000000e+00> : vector<16xf32>
    %129 = vector.multi_reduction <add>, %128, %cst_52 [1] : vector<16x128xf32> to vector<16xf32>
    %130 = vector.shape_cast %129 : vector<16xf32> to vector<16x1xf32>
    %cst_53 = arith.constant 9.600000e+01 : f32
    %131 = vector.broadcast %cst_53 : f32 to vector<16x1xf32>
    %132 = arith.mulf %131, %125 : vector<16x1xf32>
    %133 = arith.mulf %132, %125 : vector<16x1xf32>
    %134 = arith.subf %130, %133 : vector<16x1xf32>
    %cst_54 = arith.constant 3.200000e+01 : f32
    %135 = vector.broadcast %cst_54 : f32 to vector<16x1xf32>
    %136 = arith.divf %134, %135 : vector<16x1xf32>
    %cst_55 = arith.constant 9.99999974E-6 : f32
    %137 = vector.broadcast %cst_55 : f32 to vector<16x1xf32>
    %138 = arith.addf %136, %137 : vector<16x1xf32>
    %139 = math.rsqrt %138 : vector<16x1xf32>
    %140 = vector.broadcast %139 : vector<16x1xf32> to vector<16x128xf32>
    %141 = arith.mulf %127, %140 : vector<16x128xf32>
    %142 = vector.broadcast %120 : vector<1x128xf32> to vector<16x128xf32>
    %143 = arith.mulf %141, %142 : vector<16x128xf32>
    %144 = vector.broadcast %121 : vector<1x128xf32> to vector<16x128xf32>
    %145 = arith.addf %143, %144 : vector<16x128xf32>
    %146 = vector.shape_cast %145 : vector<16x128xf32> to vector<2x8x128xf32>
    %c0_56 = arith.constant 0 : index
    %c0_57 = arith.constant 0 : index
    %c0_58 = arith.constant 0 : index
    %147 = vector.load %arg15[%c0_56, %c0_57, %c0_58] : memref<2x8x128xf32, #tpu.memory_space<vmem>>, vector<2x8x128xf32>
    tpu.vector_store %arg15[%c0_56, %c0_57, %c0_58], %146 {strides = array<i32>} : memref<2x8x128xf32, #tpu.memory_space<vmem>>, vector<2x8x128xf32>,
    return
  }
  func.func @transform_0(%arg0: i32) -> (i32, i32, i32) {
    %c0_i32 = arith.constant 0 : i32
    %c0_i32_0 = arith.constant 0 : i32
    %c0_i32_1 = arith.constant 0 : i32
    return %arg0, %c0_i32, %c0_i32_0 : i32, i32, i32
  }
  func.func @transform_1(%arg0: i32) -> (i32, i32, i32) {
    %c0_i32 = arith.constant 0 : i32
    %c0_i32_0 = arith.constant 0 : i32
    %c0_i32_1 = arith.constant 0 : i32
    return %arg0, %c0_i32, %c0_i32_0 : i32, i32, i32
  }
  func.func @transform_2(%arg0: i32) -> (i32, i32) {
    %c0_i32 = arith.constant 0 : i32
    %c0_i32_0 = arith.constant 0 : i32
    %c0_i32_1 = arith.constant 0 : i32
    return %c0_i32, %c0_i32_0 : i32, i32
  }
  func.func @transform_3(%arg0: i32) -> (i32, i32) {
    %c0_i32 = arith.constant 0 : i32
    %c0_i32_0 = arith.constant 0 : i32
    %c0_i32_1 = arith.constant 0 : i32
    return %c0_i32, %c0_i32_0 : i32, i32
  }
  func.func @transform_4(%arg0: i32) -> (i32, i32, i32) {
    %c0_i32 = arith.constant 0 : i32
    %c0_i32_0 = arith.constant 0 : i32
    %c0_i32_1 = arith.constant 0 : i32
    %c0_i32_2 = arith.constant 0 : i32
    return %c0_i32, %c0_i32_0, %c0_i32_1 : i32, i32, i32
  }
  func.func @transform_5(%arg0: i32) -> (i32, i32) {
    %c0_i32 = arith.constant 0 : i32
    %c0_i32_0 = arith.constant 0 : i32
    %c0_i32_1 = arith.constant 0 : i32
    return %c0_i32, %c0_i32_0 : i32, i32
  }
  func.func @transform_6(%arg0: i32) -> (i32, i32) {
    %c0_i32 = arith.constant 0 : i32
    %c0_i32_0 = arith.constant 0 : i32
    %c0_i32_1 = arith.constant 0 : i32
    return %c0_i32, %c0_i32_0 : i32, i32
  }
  func.func @transform_7(%arg0: i32) -> (i32, i32) {
    %c0_i32 = arith.constant 0 : i32
    %c0_i32_0 = arith.constant 0 : i32
    %c0_i32_1 = arith.constant 0 : i32
    return %c0_i32, %c0_i32_0 : i32, i32
  }
  func.func @transform_8(%arg0: i32) -> (i32, i32) {
    %c0_i32 = arith.constant 0 : i32
    %c0_i32_0 = arith.constant 0 : i32
    %c0_i32_1 = arith.constant 0 : i32
    return %c0_i32, %c0_i32_0 : i32, i32
  }
  func.func @transform_9(%arg0: i32) -> (i32, i32) {
    %c0_i32 = arith.constant 0 : i32
    %c0_i32_0 = arith.constant 0 : i32
    %c0_i32_1 = arith.constant 0 : i32
    return %c0_i32, %c0_i32_0 : i32, i32
  }
  func.func @transform_10(%arg0: i32) -> (i32, i32) {
    %c0_i32 = arith.constant 0 : i32
    %c0_i32_0 = arith.constant 0 : i32
    %c0_i32_1 = arith.constant 0 : i32
    return %c0_i32, %c0_i32_0 : i32, i32
  }
  func.func @transform_11(%arg0: i32) -> (i32, i32) {
    %c0_i32 = arith.constant 0 : i32
    %c0_i32_0 = arith.constant 0 : i32
    %c0_i32_1 = arith.constant 0 : i32
    return %c0_i32, %c0_i32_0 : i32, i32
  }
  func.func @transform_12(%arg0: i32) -> (i32, i32) {
    %c0_i32 = arith.constant 0 : i32
    %c0_i32_0 = arith.constant 0 : i32
    %c0_i32_1 = arith.constant 0 : i32
    return %c0_i32, %c0_i32_0 : i32, i32
  }
  func.func @transform_13(%arg0: i32) -> (i32, i32) {
    %c0_i32 = arith.constant 0 : i32
    %c0_i32_0 = arith.constant 0 : i32
    %c0_i32_1 = arith.constant 0 : i32
    return %c0_i32, %c0_i32_0 : i32, i32
  }
  func.func @transform_14(%arg0: i32) -> (i32, i32, i32) {
    %c0_i32 = arith.constant 0 : i32
    %c0_i32_0 = arith.constant 0 : i32
    %c0_i32_1 = arith.constant 0 : i32
    return %arg0, %c0_i32, %c0_i32_0 : i32, i32, i32
  }
}

</mosaic_0001>

<llo_original>
// kernel: tpu_custom_call.1
$region0: #{tpu_custom_call.1}
  #allocation0 [shape = 'u32[]', space=smem, size = 0x4, offset = 0x4, fixed_abs, tag = 'smem constant byte address 0x4 - core index']
  #allocation1 [shape = 'u32[144,128]{1,0:T(1,128)}', space=vmem, size = 0x12000, scoped, tag = 'internal scratch']
  %s0 = inlined_call_operand.vmem [shape: f32[4,8,128], index: 0, kind: input, shape index: {}]
  %s1 = inlined_call_operand.vmem [shape: f32[4,1,8], index: 1, kind: input, shape index: {}]
  %s2 = inlined_call_operand.vmem [shape: f32[128,96], index: 2, kind: input, shape index: {}]
  %s3 = inlined_call_operand.vmem [shape: f32[1,96], index: 3, kind: input, shape index: {}]
  %s4 = inlined_call_operand.vmem [shape: f32[4,8,128], index: 4, kind: input, shape index: {}]
  %s5 = inlined_call_operand.vmem [shape: f32[1,128], index: 5, kind: input, shape index: {}]
  %s6 = inlined_call_operand.vmem [shape: f32[1,128], index: 6, kind: input, shape index: {}]
  %s7 = inlined_call_operand.vmem [shape: f32[1,128], index: 7, kind: input, shape index: {}]
  %s8 = inlined_call_operand.vmem [shape: f32[128,64], index: 8, kind: input, shape index: {}]
  %s9 = inlined_call_operand.vmem [shape: f32[1,64], index: 9, kind: input, shape index: {}]
  %s10 = inlined_call_operand.vmem [shape: f32[64,128], index: 10, kind: input, shape index: {}]
  %s11 = inlined_call_operand.vmem [shape: f32[1,128], index: 11, kind: input, shape index: {}]
  %s12 = inlined_call_operand.vmem [shape: f32[1,128], index: 12, kind: input, shape index: {}]
  %s13 = inlined_call_operand.vmem [shape: f32[1,128], index: 13, kind: input, shape index: {}]
  %s14 = inlined_call_operand.hbm [shape: f32[4,8,128], index: 14, kind: output, shape index: {}]
  %s15 = sld [smem:[#allocation0]]
  $region89: #{tpu_custom_call.1} parent=0
    _
  %s17 = ssub.s32 1, %s15
  %s18 = scalar_select 0, %s17, %s15
  $region1: #{tpu_custom_call.1} parent=0
    #allocation2 [shape = 'u8[16384]{0}', space=vmem, size = 0x4000, scoped, tag = 'output window, operand 0']
    #allocation3 [shape = 's32[2]{0}', space=sflag, size = 0x8, scoped, tag = 'scoped memory for tpu_custom_call.1']
    %19 = vsyncpa [#allocation3], 0
    %s20 = scalar_lea.sflag [#allocation3], 1
    %21 = vsyncpa %s20, 0
    loop: start=0, step=1, limit=4
    $region2: #{tpu_custom_call.1} parent=1 // loop_pre_header
      _
    $region3: #{tpu_custom_call.1} parent=1 // loop_header
      %s23 = sphi 0, %s27
      %p24 = scmp.ge.s32.totalorder %s23, 4
      %s33 = sphi 0, %s35
      %s36 = sphi 0, %s33
      %s37 = sphi 0, %s36
      %s53 = sphi 0, %s37
      %s59 = sphi 0, %s61
      %s62 = sphi 0, %s59
      %s63 = sphi 0, %s62
      %s79 = sphi 0, %s63
      %s83 = sphi 0, %s83
      %s85 = sphi 0, %s83
      %s86 = sphi 0, %s85
      %s100 = sphi 0, %s86
      %s104 = sphi 0, %s104
      %s106 = sphi 0, %s104
      %s107 = sphi 0, %s106
      %s121 = sphi 0, %s107
      %s125 = sphi 0, %s125
      %s127 = sphi 0, %s125
      %s128 = sphi 0, %s127
      %s142 = sphi 0, %s128
      %s146 = sphi 0, %s146
      %s148 = sphi 0, %s146
      %s149 = sphi 0, %s148
      %s163 = sphi 0, %s149
      %s167 = sphi 0, %s167
      %s169 = sphi 0, %s167
      %s170 = sphi 0, %s169
      %s184 = sphi 0, %s170
      %s188 = sphi 0, %s188
      %s190 = sphi 0, %s188
      %s191 = sphi 0, %s190
      %s205 = sphi 0, %s191
      %s209 = sphi 0, %s209
      %s211 = sphi 0, %s209
      %s212 = sphi 0, %s211
      %s226 = sphi 0, %s212
      %s230 = sphi 0, %s230
      %s232 = sphi 0, %s230
      %s233 = sphi 0, %s232
      %s247 = sphi 0, %s233
      %s251 = sphi 0, %s251
      %s253 = sphi 0, %s251
      %s254 = sphi 0, %s253
      %s268 = sphi 0, %s254
      %s272 = sphi 0, %s272
      %s274 = sphi 0, %s272
      %s275 = sphi 0, %s274
      %s289 = sphi 0, %s275
      %s293 = sphi 0, %s293
      %s295 = sphi 0, %s293
      %s296 = sphi 0, %s295
      %s310 = sphi 0, %s296
      %s314 = sphi 0, %s314
      %s316 = sphi 0, %s314
      %s317 = sphi 0, %s316
      %s331 = sphi 0, %s317
      %s337 = sphi 0, %s339
      %s340 = sphi 0, %s337
      %s341 = sphi 0, %s340
      %s357 = sphi 0, %s341
    $region4: #{tpu_custom_call.1} parent=1 // loop_header_branch
      %26 = sbr.rel (%p24) target = $region8
    $region5: #{tpu_custom_call.1} parent=1 // loop_body
      %s28 = ssub.s32 %s23, 1
      %s29 = ssub.s32 %s23, 2
      %s30 = sadd.s32 %s23, 1
      %s31 = ssub.s32 %s23, %s30
      %p32 = scmp.eq.s32.totalorder %s31, 0
      %s34 = sadd.s32 %s33, 1
      %s35 = scalar_select %p32, %s33, %s34
      %p38 = pneg %p32
      %p39 = scmp.eq.s32.totalorder %s23, 1
      %p40 = por %p38, %p39
      %p41 = scmp.ne.s32.totalorder %s33, %s36
      %p42 = scmp.eq.s32.totalorder %s23, 0
      %p43 = por %p41, %p42
      %p44 = scmp.ne.s32.totalorder %s33, %s36
      %p45 = scmp.eq.s32.totalorder %s28, 1
      %p46 = por %p44, %p45
      %p47 = scmp.ne.s32.totalorder %s36, %s37
      %p48 = scmp.eq.s32.totalorder %s28, 0
      %p49 = por %p47, %p48
      %p50 = scmp.ne.s32.totalorder %s36, %s37
      %p51 = scmp.eq.s32.totalorder %s29, 1
      %p52 = por %p50, %p51
      %p54 = scmp.ne.s32.totalorder %s37, %s53
      %p55 = scmp.eq.s32.totalorder %s29, 0
      %p56 = por %p54, %p55
      %s57 = ssub.s32 %s23, %s30
      %p58 = scmp.eq.s32.totalorder %s57, 0
      %s60 = sadd.s32 %s59, 1
      %s61 = scalar_select %p58, %s59, %s60
      %p64 = pneg %p58
      %p65 = scmp.eq.s32.totalorder %s23, 1
      %p66 = por %p64, %p65
      %p67 = scmp.ne.s32.totalorder %s59, %s62
      %p68 = scmp.eq.s32.totalorder %s23, 0
      %p69 = por %p67, %p68
      %p70 = scmp.ne.s32.totalorder %s59, %s62
      %p71 = scmp.eq.s32.totalorder %s28, 1
      %p72 = por %p70, %p71
      %p73 = scmp.ne.s32.totalorder %s62, %s63
      %p74 = scmp.eq.s32.totalorder %s28, 0
      %p75 = por %p73, %p74
      %p76 = scmp.ne.s32.totalorder %s62, %s63
      %p77 = scmp.eq.s32.totalorder %s29, 1
      %p78 = por %p76, %p77
      %p80 = scmp.ne.s32.totalorder %s63, %s79
      %p81 = scmp.eq.s32.totalorder %s29, 0
      %p82 = por %p80, %p81
      %s84 = sadd.s32 %s83, 1
      %p87 = scmp.eq.s32.totalorder %s23, 1
      %p88 = scmp.ne.s32.totalorder %s83, %s85
      %p89 = scmp.eq.s32.totalorder %s23, 0
      %p90 = por %p88, %p89
      %p91 = scmp.ne.s32.totalorder %s83, %s85
      %p92 = scmp.eq.s32.totalorder %s28, 1
      %p93 = por %p91, %p92
      %p94 = scmp.ne.s32.totalorder %s85, %s86
      %p95 = scmp.eq.s32.totalorder %s28, 0
      %p96 = por %p94, %p95
      %p97 = scmp.ne.s32.totalorder %s85, %s86
      %p98 = scmp.eq.s32.totalorder %s29, 1
      %p99 = por %p97, %p98
      %p101 = scmp.ne.s32.totalorder %s86, %s100
      %p102 = scmp.eq.s32.totalorder %s29, 0
      %p103 = por %p101, %p102
      %s105 = sadd.s32 %s104, 1
      %p108 = scmp.eq.s32.totalorder %s23, 1
      %p109 = scmp.ne.s32.totalorder %s104, %s106
      %p110 = scmp.eq.s32.totalorder %s23, 0
      %p111 = por %p109, %p110
      %p112 = scmp.ne.s32.totalorder %s104, %s106
      %p113 = scmp.eq.s32.totalorder %s28, 1
      %p114 = por %p112, %p113
      %p115 = scmp.ne.s32.totalorder %s106, %s107
      %p116 = scmp.eq.s32.totalorder %s28, 0
      %p117 = por %p115, %p116
      %p118 = scmp.ne.s32.totalorder %s106, %s107
      %p119 = scmp.eq.s32.totalorder %s29, 1
      %p120 = por %p118, %p119
      %p122 = scmp.ne.s32.totalorder %s107, %s121
      %p123 = scmp.eq.s32.totalorder %s29, 0
      %p124 = por %p122, %p123
      %s126 = sadd.s32 %s125, 1
      %p129 = scmp.eq.s32.totalorder %s23, 1
      %p130 = scmp.ne.s32.totalorder %s125, %s127
      %p131 = scmp.eq.s32.totalorder %s23, 0
      %p132 = por %p130, %p131
      %p133 = scmp.ne.s32.totalorder %s125, %s127
      %p134 = scmp.eq.s32.totalorder %s28, 1
      %p135 = por %p133, %p134
      %p136 = scmp.ne.s32.totalorder %s127, %s128
      %p137 = scmp.eq.s32.totalorder %s28, 0
      %p138 = por %p136, %p137
      %p139 = scmp.ne.s32.totalorder %s127, %s128
      %p140 = scmp.eq.s32.totalorder %s29, 1
      %p141 = por %p139, %p140
      %p143 = scmp.ne.s32.totalorder %s128, %s142
      %p144 = scmp.eq.s32.totalorder %s29, 0
      %p145 = por %p143, %p144
      %s147 = sadd.s32 %s146, 1
      %p150 = scmp.eq.s32.totalorder %s23, 1
      %p151 = scmp.ne.s32.totalorder %s146, %s148
      %p152 = scmp.eq.s32.totalorder %s23, 0
      %p153 = por %p151, %p152
      %p154 = scmp.ne.s32.totalorder %s146, %s148
      %p155 = scmp.eq.s32.totalorder %s28, 1
      %p156 = por %p154, %p155
      %p157 = scmp.ne.s32.totalorder %s148, %s149
      %p158 = scmp.eq.s32.totalorder %s28, 0
      %p159 = por %p157, %p158
      %p160 = scmp.ne.s32.totalorder %s148, %s149
      %p161 = scmp.eq.s32.totalorder %s29, 1
      %p162 = por %p160, %p161
      %p164 = scmp.ne.s32.totalorder %s149, %s163
      %p165 = scmp.eq.s32.totalorder %s29, 0
      %p166 = por %p164, %p165
      %s168 = sadd.s32 %s167, 1
      %p171 = scmp.eq.s32.totalorder %s23, 1
      %p172 = scmp.ne.s32.totalorder %s167, %s169
      %p173 = scmp.eq.s32.totalorder %s23, 0
      %p174 = por %p172, %p173
      %p175 = scmp.ne.s32.totalorder %s167, %s169
      %p176 = scmp.eq.s32.totalorder %s28, 1
      %p177 = por %p175, %p176
      %p178 = scmp.ne.s32.totalorder %s169, %s170
      %p179 = scmp.eq.s32.totalorder %s28, 0
      %p180 = por %p178, %p179
      %p181 = scmp.ne.s32.totalorder %s169, %s170
      %p182 = scmp.eq.s32.totalorder %s29, 1
      %p183 = por %p181, %p182
      %p185 = scmp.ne.s32.totalorder %s170, %s184
      %p186 = scmp.eq.s32.totalorder %s29, 0
      %p187 = por %p185, %p186
      %s189 = sadd.s32 %s188, 1
      %p192 = scmp.eq.s32.totalorder %s23, 1
      %p193 = scmp.ne.s32.totalorder %s188, %s190
      %p194 = scmp.eq.s32.totalorder %s23, 0
      %p195 = por %p193, %p194
      %p196 = scmp.ne.s32.totalorder %s188, %s190
      %p197 = scmp.eq.s32.totalorder %s28, 1
      %p198 = por %p196, %p197
      %p199 = scmp.ne.s32.totalorder %s190, %s191
      %p200 = scmp.eq.s32.totalorder %s28, 0
      %p201 = por %p199, %p200
      %p202 = scmp.ne.s32.totalorder %s190, %s191
      %p203 = scmp.eq.s32.totalorder %s29, 1
      %p204 = por %p202, %p203
      %p206 = scmp.ne.s32.totalorder %s191, %s205
      %p207 = scmp.eq.s32.totalorder %s29, 0
      %p208 = por %p206, %p207
      %s210 = sadd.s32 %s209, 1
      %p213 = scmp.eq.s32.totalorder %s23, 1
      %p214 = scmp.ne.s32.totalorder %s209, %s211
      %p215 = scmp.eq.s32.totalorder %s23, 0
      %p216 = por %p214, %p215
      %p217 = scmp.ne.s32.totalorder %s209, %s211
      %p218 = scmp.eq.s32.totalorder %s28, 1
      %p219 = por %p217, %p218
      %p220 = scmp.ne.s32.totalorder %s211, %s212
      %p221 = scmp.eq.s32.totalorder %s28, 0
      %p222 = por %p220, %p221
      %p223 = scmp.ne.s32.totalorder %s211, %s212
      %p224 = scmp.eq.s32.totalorder %s29, 1
      %p225 = por %p223, %p224
      %p227 = scmp.ne.s32.totalorder %s212, %s226
      %p228 = scmp.eq.s32.totalorder %s29, 0
      %p229 = por %p227, %p228
      %s231 = sadd.s32 %s230, 1
      %p234 = scmp.eq.s32.totalorder %s23, 1
      %p235 = scmp.ne.s32.totalorder %s230, %s232
      %p236 = scmp.eq.s32.totalorder %s23, 0
      %p237 = por %p235, %p236
      %p238 = scmp.ne.s32.totalorder %s230, %s232
      %p239 = scmp.eq.s32.totalorder %s28, 1
      %p240 = por %p238, %p239
      %p241 = scmp.ne.s32.totalorder %s232, %s233
      %p242 = scmp.eq.s32.totalorder %s28, 0
      %p243 = por %p241, %p242
      %p244 = scmp.ne.s32.totalorder %s232, %s233
      %p245 = scmp.eq.s32.totalorder %s29, 1
      %p246 = por %p244, %p245
      %p248 = scmp.ne.s32.totalorder %s233, %s247
      %p249 = scmp.eq.s32.totalorder %s29, 0
      %p250 = por %p248, %p249
      %s252 = sadd.s32 %s251, 1
      %p255 = scmp.eq.s32.totalorder %s23, 1
      %p256 = scmp.ne.s32.totalorder %s251, %s253
      %p257 = scmp.eq.s32.totalorder %s23, 0
      %p258 = por %p256, %p257
      %p259 = scmp.ne.s32.totalorder %s251, %s253
      %p260 = scmp.eq.s32.totalorder %s28, 1
      %p261 = por %p259, %p260
      %p262 = scmp.ne.s32.totalorder %s253, %s254
      %p263 = scmp.eq.s32.totalorder %s28, 0
      %p264 = por %p262, %p263
      %p265 = scmp.ne.s32.totalorder %s253, %s254
      %p266 = scmp.eq.s32.totalorder %s29, 1
      %p267 = por %p265, %p266
      %p269 = scmp.ne.s32.totalorder %s254, %s268
      %p270 = scmp.eq.s32.totalorder %s29, 0
      %p271 = por %p269, %p270
      %s273 = sadd.s32 %s272, 1
      %p276 = scmp.eq.s32.totalorder %s23, 1
      %p277 = scmp.ne.s32.totalorder %s272, %s274
      %p278 = scmp.eq.s32.totalorder %s23, 0
      %p279 = por %p277, %p278
      %p280 = scmp.ne.s32.totalorder %s272, %s274
      %p281 = scmp.eq.s32.totalorder %s28, 1
      %p282 = por %p280, %p281
      %p283 = scmp.ne.s32.totalorder %s274, %s275
      %p284 = scmp.eq.s32.totalorder %s28, 0
      %p285 = por %p283, %p284
      %p286 = scmp.ne.s32.totalorder %s274, %s275
      %p287 = scmp.eq.s32.totalorder %s29, 1
      %p288 = por %p286, %p287
      %p290 = scmp.ne.s32.totalorder %s275, %s289
      %p291 = scmp.eq.s32.totalorder %s29, 0
      %p292 = por %p290, %p291
      %s294 = sadd.s32 %s293, 1
      %p297 = scmp.eq.s32.totalorder %s23, 1
      %p298 = scmp.ne.s32.totalorder %s293, %s295
      %p299 = scmp.eq.s32.totalorder %s23, 0
      %p300 = por %p298, %p299
      %p301 = scmp.ne.s32.totalorder %s293, %s295
      %p302 = scmp.eq.s32.totalorder %s28, 1
      %p303 = por %p301, %p302
      %p304 = scmp.ne.s32.totalorder %s295, %s296
      %p305 = scmp.eq.s32.totalorder %s28, 0
      %p306 = por %p304, %p305
      %p307 = scmp.ne.s32.totalorder %s295, %s296
      %p308 = scmp.eq.s32.totalorder %s29, 1
      %p309 = por %p307, %p308
      %p311 = scmp.ne.s32.totalorder %s296, %s310
      %p312 = scmp.eq.s32.totalorder %s29, 0
      %p313 = por %p311, %p312
      %s315 = sadd.s32 %s314, 1
      %p318 = scmp.eq.s32.totalorder %s23, 1
      %p319 = scmp.ne.s32.totalorder %s314, %s316
      %p320 = scmp.eq.s32.totalorder %s23, 0
      %p321 = por %p319, %p320
      %p322 = scmp.ne.s32.totalorder %s314, %s316
      %p323 = scmp.eq.s32.totalorder %s28, 1
      %p324 = por %p322, %p323
      %p325 = scmp.ne.s32.totalorder %s316, %s317
      %p326 = scmp.eq.s32.totalorder %s28, 0
      %p327 = por %p325, %p326
      %p328 = scmp.ne.s32.totalorder %s316, %s317
      %p329 = scmp.eq.s32.totalorder %s29, 1
      %p330 = por %p328, %p329
      %p332 = scmp.ne.s32.totalorder %s317, %s331
      %p333 = scmp.eq.s32.totalorder %s29, 0
      %p334 = por %p332, %p333
      %s335 = ssub.s32 %s23, %s30
      %p336 = scmp.eq.s32.totalorder %s335, 0
      %s338 = sadd.s32 %s337, 1
      %s339 = scalar_select %p336, %s337, %s338
      %p342 = pneg %p336
      %p343 = scmp.eq.s32.totalorder %s23, 1
      %p344 = por %p342, %p343
      %p345 = scmp.ne.s32.totalorder %s337, %s340
      %p346 = scmp.eq.s32.totalorder %s23, 0
      %p347 = por %p345, %p346
      %p348 = scmp.ne.s32.totalorder %s337, %s340
      %p349 = scmp.eq.s32.totalorder %s28, 1
      %p350 = por %p348, %p349
      %p351 = scmp.ne.s32.totalorder %s340, %s341
      %p352 = scmp.eq.s32.totalorder %s28, 0
      %p353 = por %p351, %p352
      %p354 = scmp.ne.s32.totalorder %s340, %s341
      %p355 = scmp.eq.s32.totalorder %s29, 1
      %p356 = por %p354, %p355
      %p358 = scmp.ne.s32.totalorder %s341, %s357
      %p359 = scmp.eq.s32.totalorder %s29, 0
      %p360 = por %p358, %p359
      %p361 = scmp.le.s32.totalorder 1, %s23
      %p362 = scmp.lt.s32.totalorder %s23, 3
      %p363 = pnand %p361, %p362
      %p364 = pneg %p363
      // Predicated region
      $region9: #{tpu_custom_call.1} parent=5 // pred_check
        _
      $region10: #{tpu_custom_call.1} parent=5 // pred_check_branch
        %366 = sbr.rel (%p363) target = $region12
      $region11: #{tpu_custom_call.1} parent=5 // pred_region
        %s367 = ssub.s32 %s23, 1
        // Predicated region
        $region13: #{tpu_custom_call.1} parent=11 // pred_check
          %p368 = pneg %p96
        $region14: #{tpu_custom_call.1} parent=11 // pred_check_branch
          %370 = sbr.rel (%p368) target = $region16
        $region15: #{tpu_custom_call.1} parent=11 // pred_region
          _
        $region16: #{tpu_custom_call.1} parent=11 // pred_fallthru
          _
        // Predicated region
        $region17: #{tpu_custom_call.1} parent=11 // pred_check
          %p371 = pneg %p117
        $region18: #{tpu_custom_call.1} parent=11 // pred_check_branch
          %373 = sbr.rel (%p371) target = $region20
        $region19: #{tpu_custom_call.1} parent=11 // pred_region
          _
        $region20: #{tpu_custom_call.1} parent=11 // pred_fallthru
          _
        // Predicated region
        $region21: #{tpu_custom_call.1} parent=11 // pred_check
          %p374 = pneg %p138
        $region22: #{tpu_custom_call.1} parent=11 // pred_check_branch
          %376 = sbr.rel (%p374) target = $region24
        $region23: #{tpu_custom_call.1} parent=11 // pred_region
          _
        $region24: #{tpu_custom_call.1} parent=11 // pred_fallthru
          _
        // Predicated region
        $region25: #{tpu_custom_call.1} parent=11 // pred_check
          %p377 = pneg %p159
        $region26: #{tpu_custom_call.1} parent=11 // pred_check_branch
          %379 = sbr.rel (%p377) target = $region28
        $region27: #{tpu_custom_call.1} parent=11 // pred_region
          _
        $region28: #{tpu_custom_call.1} parent=11 // pred_fallthru
          _
        // Predicated region
        $region29: #{tpu_custom_call.1} parent=11 // pred_check
          %p380 = pneg %p180
        $region30: #{tpu_custom_call.1} parent=11 // pred_check_branch
          %382 = sbr.rel (%p380) target = $region32
        $region31: #{tpu_custom_call.1} parent=11 // pred_region
          _
        $region32: #{tpu_custom_call.1} parent=11 // pred_fallthru
          _
        // Predicated region
        $region33: #{tpu_custom_call.1} parent=11 // pred_check
          %p383 = pneg %p201
        $region34: #{tpu_custom_call.1} parent=11 // pred_check_branch
          %385 = sbr.rel (%p383) target = $region36
        $region35: #{tpu_custom_call.1} parent=11 // pred_region
          _
        $region36: #{tpu_custom_call.1} parent=11 // pred_fallthru
          _
        // Predicated region
        $region37: #{tpu_custom_call.1} parent=11 // pred_check
          %p386 = pneg %p222
        $region38: #{tpu_custom_call.1} parent=11 // pred_check_branch
          %388 = sbr.rel (%p386) target = $region40
        $region39: #{tpu_custom_call.1} parent=11 // pred_region
          _
        $region40: #{tpu_custom_call.1} parent=11 // pred_fallthru
          _
        // Predicated region
        $region41: #{tpu_custom_call.1} parent=11 // pred_check
          %p389 = pneg %p243
        $region42: #{tpu_custom_call.1} parent=11 // pred_check_branch
          %391 = sbr.rel (%p389) target = $region44
        $region43: #{tpu_custom_call.1} parent=11 // pred_region
          _
        $region44: #{tpu_custom_call.1} parent=11 // pred_fallthru
          _
        // Predicated region
        $region45: #{tpu_custom_call.1} parent=11 // pred_check
          %p392 = pneg %p264
        $region46: #{tpu_custom_call.1} parent=11 // pred_check_branch
          %394 = sbr.rel (%p392) target = $region48
        $region47: #{tpu_custom_call.1} parent=11 // pred_region
          _
        $region48: #{tpu_custom_call.1} parent=11 // pred_fallthru
          _
        // Predicated region
        $region49: #{tpu_custom_call.1} parent=11 // pred_check
          %p395 = pneg %p285
        $region50: #{tpu_custom_call.1} parent=11 // pred_check_branch
          %397 = sbr.rel (%p395) target = $region52
        $region51: #{tpu_custom_call.1} parent=11 // pred_region
          _
        $region52: #{tpu_custom_call.1} parent=11 // pred_fallthru
          _
        // Predicated region
        $region53: #{tpu_custom_call.1} parent=11 // pred_check
          %p398 = pneg %p306
        $region54: #{tpu_custom_call.1} parent=11 // pred_check_branch
          %400 = sbr.rel (%p398) target = $region56
        $region55: #{tpu_custom_call.1} parent=11 // pred_region
          _
        $region56: #{tpu_custom_call.1} parent=11 // pred_fallthru
          _
        // Predicated region
        $region57: #{tpu_custom_call.1} parent=11 // pred_check
          %p401 = pneg %p327
        $region58: #{tpu_custom_call.1} parent=11 // pred_check_branch
          %403 = sbr.rel (%p401) target = $region60
        $region59: #{tpu_custom_call.1} parent=11 // pred_region
          _
        $region60: #{tpu_custom_call.1} parent=11 // pred_fallthru
          _
      $region12: #{tpu_custom_call.1} parent=5 // pred_fallthru
        _
      %p404 = scmp.lt.s32.totalorder %s23, 2
      // Predicated region
      $region61: #{tpu_custom_call.1} parent=5 // pred_check
        %p405 = pneg %p404
      $region62: #{tpu_custom_call.1} parent=5 // pred_check_branch
        %407 = sbr.rel (%p405) target = $region64
      $region63: #{tpu_custom_call.1} parent=5 // pred_region
        // Predicated region
        $region65: #{tpu_custom_call.1} parent=63 // pred_check
          %p408 = pneg %p43
        $region66: #{tpu_custom_call.1} parent=63 // pred_check_branch
          %410 = sbr.rel (%p408) target = $region68
        $region67: #{tpu_custom_call.1} parent=63 // pred_region
          %s411 = smul.u32 2, %s23
          %p412 = scmp.lt.s32.totalorder %s411, 3
          %s413 = scalar_select %p412, %s411, 3
          %s414 = smul.addr %s413, 8
          %s415 = scalar_lea.vmem %s0, %s414
          %s416 = smul.u32 2, %s23
        $region68: #{tpu_custom_call.1} parent=63 // pred_fallthru
          _
        // Predicated region
        $region69: #{tpu_custom_call.1} parent=63 // pred_check
          %p417 = pneg %p69
        $region70: #{tpu_custom_call.1} parent=63 // pred_check_branch
          %419 = sbr.rel (%p417) target = $region72
        $region71: #{tpu_custom_call.1} parent=63 // pred_region
          %s420 = smul.u32 2, %s23
          %p421 = scmp.lt.s32.totalorder %s420, 3
          %s422 = scalar_select %p421, %s420, 3
          %s423 = scalar_lea.vmem %s1, %s422
          %s424 = smul.u32 2, %s23
        $region72: #{tpu_custom_call.1} parent=63 // pred_fallthru
          _
      $region64: #{tpu_custom_call.1} parent=5 // pred_fallthru
        _
      %p425 = scmp.le.s32.totalorder 1, %s23
      %p426 = scmp.lt.s32.totalorder %s23, 3
      %p427 = pnand %p425, %p426
      %p428 = pneg %p427
      // Predicated region
      $region73: #{tpu_custom_call.1} parent=5 // pred_check
        _
      $region74: #{tpu_custom_call.1} parent=5 // pred_check_branch
        %430 = sbr.rel (%p427) target = $region76
      $region75: #{tpu_custom_call.1} parent=5 // pred_region
        %s431 = ssub.s32 %s23, 1
        %s432 = smul.u32 2, %s28
        %p433 = scmp.lt.s32.totalorder %s432, 3
        %s434 = scalar_select %p433, %s432, 3
        %s435 = smul.addr %s434, 8
        %s436 = scalar_lea.vmem %s0, %s435
        %p437 = pneg %p49
        %p438 = pneg %p46
        %s439 = smul.u32 2, %s28
        %p440 = scmp.lt.s32.totalorder %s439, 3
        %s441 = scalar_select %p440, %s439, 3
        %s442 = scalar_lea.vmem %s1, %s441
        %p443 = pneg %p75
        %p444 = pneg %p72
        %p445 = pneg %p96
        %p446 = pneg %p93
        %p447 = pneg %p117
        %p448 = pneg %p114
        %p449 = pneg %p138
        %p450 = pneg %p135
        %p451 = pneg %p159
        %p452 = pneg %p156
        %p453 = pneg %p180
        %p454 = pneg %p177
        %p455 = pneg %p201
        %p456 = pneg %p198
        %p457 = pneg %p222
        %p458 = pneg %p219
        %p459 = pneg %p243
        %p460 = pneg %p240
        %p461 = pneg %p264
        %p462 = pneg %p261
        %p463 = pneg %p285
        %p464 = pneg %p282
        %p465 = pneg %p306
        %p466 = pneg %p303
        %p467 = pneg %p327
        %p468 = pneg %p324
        %p469 = pneg %p353
        %p470 = pneg %p350
        %s471 = sand.u32 %s340, 1
        %s472 = scalar_lea.sflag [#allocation3], %s471
        %s473 = sand.u32 %s340, 1
        %s474 = smul.addr %s473, 16
        %s475 = scalar_lea.vmem [#allocation2], %s474
        %s476 = smul.u32 2, %s28
        %p477 = scmp.lt.s32.totalorder %s476, 3
        %s478 = scalar_select %p477, %s476, 3
        %s479 = smul.addr %s478, 8
        %s480 = scalar_lea.vmem %s0, %s479
        %s481 = smul.u32 2, %s28
        %s482 = smul.u32 2, %s28
        %p483 = scmp.lt.s32.totalorder %s482, 3
        %s484 = scalar_select %p483, %s482, 3
        %s485 = scalar_lea.vmem %s1, %s484
        %s486 = smul.u32 2, %s28
        %s487 = smul.u32 2, %s28
        %v488 = vld [vmem:[%s480] sm:$0xff]
        %v489 = vld [vmem:[%s480 + $0x8] sm:$0xff]
        %v490 = vld [vmem:[%s2] sm:$0xff]
        %v491 = vld [vmem:[%s2 + $0x8] sm:$0xff]
        %v492 = vld [vmem:[%s2 + $0x10] sm:$0xff]
        %v493 = vld [vmem:[%s2 + $0x18] sm:$0xff]
        %v494 = vld [vmem:[%s2 + $0x20] sm:$0xff]
        %v495 = vld [vmem:[%s2 + $0x28] sm:$0xff]
        %v496 = vld [vmem:[%s2 + $0x30] sm:$0xff]
        %v497 = vld [vmem:[%s2 + $0x38] sm:$0xff]
        %v498 = vld [vmem:[%s2 + $0x40] sm:$0xff]
        %v499 = vld [vmem:[%s2 + $0x48] sm:$0xff]
        %v500 = vld [vmem:[%s2 + $0x50] sm:$0xff]
        %v501 = vld [vmem:[%s2 + $0x58] sm:$0xff]
        %v502 = vld [vmem:[%s2 + $0x60] sm:$0xff]
        %v503 = vld [vmem:[%s2 + $0x68] sm:$0xff]
        %v504 = vld [vmem:[%s2 + $0x70] sm:$0xff]
        %v505 = vld [vmem:[%s2 + $0x78] sm:$0xff]
        %v506 = vld [vmem:[%s3] sm:$0x1]
        %v508 = vlaneseq
        %v509 = vshrl.u32 %v508, 7
        %v510 = vsub.s32 0, %v509
        %v511 = vrot.slane %v506, %v510
        %513 = vmatprep.subr.mxu0 0.0
        %514 = vmatpush1.msra.mxu0 %v490
        %515 = vmatprep.subr.mxu0 0.0
        %516 = vmatpush1.msra.mxu0 %v491
        %517 = vmatprep.subr.mxu0 0.0
        %518 = vmatpush1.msra.mxu0 %v492
        %519 = vmatprep.subr.mxu0 0.0
        %520 = vmatpush1.msra.mxu0 %v493
        %521 = vmatprep.subr.mxu0 0.0
        %522 = vmatpush1.msra.mxu0 %v494
        %523 = vmatprep.subr.mxu0 0.0
        %524 = vmatpush1.msra.mxu0 %v495
        %525 = vmatprep.subr.mxu0 0.0
        %526 = vmatpush1.msra.mxu0 %v496
        %527 = vmatprep.subr.mxu0 0.0
        %528 = vmatpush1.msra.mxu0 %v497
        %529 = vmatprep.subr.mxu0 0.0
        %530 = vmatpush1.msra.mxu0 %v498
        %531 = vmatprep.subr.mxu0 0.0
        %532 = vmatpush1.msra.mxu0 %v499
        %533 = vmatprep.subr.mxu0 0.0
        %534 = vmatpush1.msra.mxu0 %v500
        %535 = vmatprep.subr.mxu0 0.0
        %536 = vmatpush1.msra.mxu0 %v501
        %537 = vmatprep.subr.mxu0 0.0
        %538 = vmatpush1.msra.mxu0 %v502
        %539 = vmatprep.subr.mxu0 0.0
        %540 = vmatpush1.msra.mxu0 %v503
        %541 = vmatprep.subr.mxu0 0.0
        %542 = vmatpush1.msra.mxu0 %v504
        %543 = vmatprep.subr.mxu0 0.0
        %544 = vmatpush1.msra.mxu0 %v505
        %545 = vmatprep.subr.mxu0 0.0
        %546 = vmatpush1.msra.mxu0 0.0
        %547 = vmatprep.subr.mxu0 0.0
        %548 = vmatpush1.msra.mxu0 0.0
        %549 = vmatprep.subr.mxu0 0.0
        %550 = vmatpush1.msra.mxu0 0.0
        %551 = vmatprep.subr.mxu0 0.0
        %552 = vmatpush1.msra.mxu0 0.0
        %553 = vmatprep.subr.mxu0 0.0
        %554 = vmatpush1.msra.mxu0 0.0
        %555 = vmatprep.subr.mxu0 0.0
        %556 = vmatpush1.msra.mxu0 0.0
        %557 = vmatprep.subr.mxu0 0.0
        %558 = vmatpush1.msra.mxu0 0.0
        %559 = vmatprep.subr.mxu0 0.0
        %560 = vmatpush1.msra.mxu0 0.0
        %561 = vmatprep.subr.mxu0 0.0
        %562 = vmatpush1.msra.mxu0 0.0
        %563 = vmatprep.subr.mxu0 0.0
        %564 = vmatpush1.msra.mxu0 0.0
        %565 = vmatprep.subr.mxu0 0.0
        %566 = vmatpush1.msra.mxu0 0.0
        %567 = vmatprep.subr.mxu0 0.0
        %568 = vmatpush1.msra.mxu0 0.0
        %569 = vmatprep.subr.mxu0 0.0
        %570 = vmatpush1.msra.mxu0 0.0
        %571 = vmatprep.subr.mxu0 0.0
        %572 = vmatpush1.msra.mxu0 0.0
        %573 = vmatprep.subr.mxu0 0.0
        %574 = vmatpush1.msra.mxu0 0.0
        %575 = vmatprep.subr.mxu0 0.0
        %576 = vmatpush1.msra.mxu0 0.0
        %577 = vmatprep.mubr.f32.mxu0 0.0
        %578 = vmatmul.mubr.f32.gmra.mrb[0].mxu0 %v488
        %v579 = vpop.f32.mrb[0].mxu0
        %v580 = vadd.f32 %v511, %v579
        %v581 = vpop.f32.mrb[0].mxu0
        %582 = vmatprep.mubr.f32.mxu0 0.0
        %583 = vmatmul.mubr.f32.gmra.mrb[0].mxu0 %v489
        %v584 = vpop.f32.mrb[0].mxu0
        %v585 = vadd.f32 %v511, %v584
        %v586 = vpop.f32.mrb[0].mxu0
        %587 = vdwg.mxu0
        %v588 = vmul.f32 %v580, 0.35355338
        %v589 = vmul.f32 %v585, 0.35355338
        %592 = vrot.lane.b32.xlu0 %v588, 120
        %v593 = vpop.permute.xlu0 %592
        %594 = vrot.lane.b32.xlu0 %v589, 120
        %v595 = vpop.permute.xlu0 %594
        %596 = vrot.lane.b32.xlu0 %v588, 112
        %v597 = vpop.permute.xlu0 %596
        %598 = vrot.lane.b32.xlu0 %v589, 112
        %v599 = vpop.permute.xlu0 %598
        %600 = vrot.lane.b32.xlu0 %v588, 104
        %v601 = vpop.permute.xlu0 %600
        %602 = vrot.lane.b32.xlu0 %v589, 104
        %v603 = vpop.permute.xlu0 %602
        %606 = vrot.lane.b32.xlu0 %v580, 120
        %v607 = vpop.permute.xlu0 %606
        %608 = vrot.lane.b32.xlu0 %v585, 120
        %v609 = vpop.permute.xlu0 %608
        %610 = vrot.lane.b32.xlu0 %v580, 112
        %v611 = vpop.permute.xlu0 %610
        %612 = vrot.lane.b32.xlu0 %v585, 112
        %v613 = vpop.permute.xlu0 %612
        %614 = vrot.lane.b32.xlu0 %v580, 104
        %v615 = vpop.permute.xlu0 %614
        %616 = vrot.lane.b32.xlu0 %v585, 104
        %v617 = vpop.permute.xlu0 %616
        %v618 = vld [vmem:[%s485] sm:$0x1]
        %v619 = vld [vmem:[%s485 + $0x1] sm:$0x1]
        %vm620 = vcmp.eq.f32.partialorder %v618, 0.0
        %vm621 = vcmp.eq.f32.partialorder %v619, 0.0
        %v622 = vsel %vm620, -1e+10, 0.0
        %v623 = vsel %vm621, -1e+10, 0.0
        %v626 = vlaneseq
        %v627 = vshrl.u32 %v626, 7
        %v628 = vsub.s32 0, %v627
        %v629 = vrot.slane %v622, %v628
        %v630 = vlaneseq
        %v631 = vshrl.u32 %v630, 7
        %v632 = vsub.s32 0, %v631
        %v633 = vrot.slane %v623, %v632
        %636 = vrot.lane.b32.xlu0 %v580, 96
        %v637 = vpop.permute.xlu0 %636
        %vm638 = vcmask 64512
        %v639 = vsel %vm638, %v588, 0
        %v641 = vsel %vm638, %v637, 0
        %643 = vmatprep.subr.mxu0 0.0
        %644 = vmatpush1.xpose.msra.mxu0 %v641
        %645 = vmatprep.subr.mxu0 0.0
        %646 = vmatpush1.xpose.msra.mxu0 0.0
        %647 = vmatprep.subr.mxu0 0.0
        %648 = vmatpush1.xpose.msra.mxu0 0.0
        %649 = vmatprep.subr.mxu0 0.0
        %650 = vmatpush1.xpose.msra.mxu0 0.0
        %651 = vmatprep.subr.mxu0 0.0
        %652 = vmatpush1.xpose.msra.mxu0 0.0
        %653 = vmatprep.subr.mxu0 0.0
        %654 = vmatpush1.xpose.msra.mxu0 0.0
        %655 = vmatprep.subr.mxu0 0.0
        %656 = vmatpush1.xpose.msra.mxu0 0.0
        %657 = vmatprep.subr.mxu0 0.0
        %658 = vmatpush1.xpose.msra.mxu0 0.0
        %659 = vmatprep.subr.mxu0 0.0
        %660 = vmatpush1.xpose.msra.mxu0 0.0
        %661 = vmatprep.subr.mxu0 0.0
        %662 = vmatpush1.xpose.msra.mxu0 0.0
        %663 = vmatprep.subr.mxu0 0.0
        %664 = vmatpush1.xpose.msra.mxu0 0.0
        %665 = vmatprep.subr.mxu0 0.0
        %666 = vmatpush1.xpose.msra.mxu0 0.0
        %667 = vmatprep.subr.mxu0 0.0
        %668 = vmatpush1.xpose.msra.mxu0 0.0
        %669 = vmatprep.subr.mxu0 0.0
        %670 = vmatpush1.xpose.msra.mxu0 0.0
        %671 = vmatprep.subr.mxu0 0.0
        %672 = vmatpush1.xpose.msra.mxu0 0.0
        %673 = vmatprep.subr.mxu0 0.0
        %674 = vmatpush1.xpose.msra.mxu0 0.0
        %675 = vmatprep.subr.mxu0 0.0
        %676 = vmatpush1.xpose.msra.mxu0 0.0
        %677 = vmatprep.subr.mxu0 0.0
        %678 = vmatpush1.xpose.msra.mxu0 0.0
        %679 = vmatprep.subr.mxu0 0.0
        %680 = vmatpush1.xpose.msra.mxu0 0.0
        %681 = vmatprep.subr.mxu0 0.0
        %682 = vmatpush1.xpose.msra.mxu0 0.0
        %683 = vmatprep.subr.mxu0 0.0
        %684 = vmatpush1.xpose.msra.mxu0 0.0
        %685 = vmatprep.subr.mxu0 0.0
        %686 = vmatpush1.xpose.msra.mxu0 0.0
        %687 = vmatprep.subr.mxu0 0.0
        %688 = vmatpush1.xpose.msra.mxu0 0.0
        %689 = vmatprep.subr.mxu0 0.0
        %690 = vmatpush1.xpose.msra.mxu0 0.0
        %691 = vmatprep.subr.mxu0 0.0
        %692 = vmatpush1.xpose.msra.mxu0 0.0
        %693 = vmatprep.subr.mxu0 0.0
        %694 = vmatpush1.xpose.msra.mxu0 0.0
        %695 = vmatprep.subr.mxu0 0.0
        %696 = vmatpush1.xpose.msra.mxu0 0.0
        %697 = vmatprep.subr.mxu0 0.0
        %698 = vmatpush1.xpose.msra.mxu0 0.0
        %699 = vmatprep.subr.mxu0 0.0
        %700 = vmatpush1.xpose.msra.mxu0 0.0
        %701 = vmatprep.subr.mxu0 0.0
        %702 = vmatpush1.xpose.msra.mxu0 0.0
        %703 = vmatprep.subr.mxu0 0.0
        %704 = vmatpush1.xpose.msra.mxu0 0.0
        %705 = vmatprep.subr.mxu0 0.0
        %706 = vmatpush1.xpose.msra.mxu0 0.0
        %707 = vmatprep.mubr.f32.mxu0 0.0
        %708 = vmatmul.mubr.f32.gmra.mrb[0].mxu0 %v639
        %v709 = vpop.f32.mrb[0].mxu0
        %v710 = vadd.f32 %v629, %v709
        %v711 = vpop.f32.mrb[0].mxu0
        %712 = vdwg.mxu0
        %713 = vrot.lane.b32.xlu0 %v585, 96
        %v714 = vpop.permute.xlu0 %713
        %v715 = vsel %vm638, %v589, 0
        %v717 = vsel %vm638, %v714, 0
        %719 = vmatprep.subr.mxu0 0.0
        %720 = vmatpush1.xpose.msra.mxu0 %v717
        %721 = vmatprep.subr.mxu0 0.0
        %722 = vmatpush1.xpose.msra.mxu0 0.0
        %723 = vmatprep.subr.mxu0 0.0
        %724 = vmatpush1.xpose.msra.mxu0 0.0
        %725 = vmatprep.subr.mxu0 0.0
        %726 = vmatpush1.xpose.msra.mxu0 0.0
        %727 = vmatprep.subr.mxu0 0.0
        %728 = vmatpush1.xpose.msra.mxu0 0.0
        %729 = vmatprep.subr.mxu0 0.0
        %730 = vmatpush1.xpose.msra.mxu0 0.0
        %731 = vmatprep.subr.mxu0 0.0
        %732 = vmatpush1.xpose.msra.mxu0 0.0
        %733 = vmatprep.subr.mxu0 0.0
        %734 = vmatpush1.xpose.msra.mxu0 0.0
        %735 = vmatprep.subr.mxu0 0.0
        %736 = vmatpush1.xpose.msra.mxu0 0.0
        %737 = vmatprep.subr.mxu0 0.0
        %738 = vmatpush1.xpose.msra.mxu0 0.0
        %739 = vmatprep.subr.mxu0 0.0
        %740 = vmatpush1.xpose.msra.mxu0 0.0
        %741 = vmatprep.subr.mxu0 0.0
        %742 = vmatpush1.xpose.msra.mxu0 0.0
        %743 = vmatprep.subr.mxu0 0.0
        %744 = vmatpush1.xpose.msra.mxu0 0.0
        %745 = vmatprep.subr.mxu0 0.0
        %746 = vmatpush1.xpose.msra.mxu0 0.0
        %747 = vmatprep.subr.mxu0 0.0
        %748 = vmatpush1.xpose.msra.mxu0 0.0
        %749 = vmatprep.subr.mxu0 0.0
        %750 = vmatpush1.xpose.msra.mxu0 0.0
        %751 = vmatprep.subr.mxu0 0.0
        %752 = vmatpush1.xpose.msra.mxu0 0.0
        %753 = vmatprep.subr.mxu0 0.0
        %754 = vmatpush1.xpose.msra.mxu0 0.0
        %755 = vmatprep.subr.mxu0 0.0
        %756 = vmatpush1.xpose.msra.mxu0 0.0
        %757 = vmatprep.subr.mxu0 0.0
        %758 = vmatpush1.xpose.msra.mxu0 0.0
        %759 = vmatprep.subr.mxu0 0.0
        %760 = vmatpush1.xpose.msra.mxu0 0.0
        %761 = vmatprep.subr.mxu0 0.0
        %762 = vmatpush1.xpose.msra.mxu0 0.0
        %763 = vmatprep.subr.mxu0 0.0
        %764 = vmatpush1.xpose.msra.mxu0 0.0
        %765 = vmatprep.subr.mxu0 0.0
        %766 = vmatpush1.xpose.msra.mxu0 0.0
        %767 = vmatprep.subr.mxu0 0.0
        %768 = vmatpush1.xpose.msra.mxu0 0.0
        %769 = vmatprep.subr.mxu0 0.0
        %770 = vmatpush1.xpose.msra.mxu0 0.0
        %771 = vmatprep.subr.mxu0 0.0
        %772 = vmatpush1.xpose.msra.mxu0 0.0
        %773 = vmatprep.subr.mxu0 0.0
        %774 = vmatpush1.xpose.msra.mxu0 0.0
        %775 = vmatprep.subr.mxu0 0.0
        %776 = vmatpush1.xpose.msra.mxu0 0.0
        %777 = vmatprep.subr.mxu0 0.0
        %778 = vmatpush1.xpose.msra.mxu0 0.0
        %779 = vmatprep.subr.mxu0 0.0
        %780 = vmatpush1.xpose.msra.mxu0 0.0
        %781 = vmatprep.subr.mxu0 0.0
        %782 = vmatpush1.xpose.msra.mxu0 0.0
        %783 = vmatprep.mubr.f32.mxu0 0.0
        %784 = vmatmul.mubr.f32.gmra.mrb[0].mxu0 %v715
        %v785 = vpop.f32.mrb[0].mxu0
        %v786 = vadd.f32 %v633, %v785
        %v787 = vpop.f32.mrb[0].mxu0
        %788 = vdwg.mxu0
        %789 = vrot.lane.b32.xlu0 %v607, 96
        %v790 = vpop.permute.xlu0 %789
        %v791 = vsel %vm638, %v593, 0
        %v793 = vsel %vm638, %v790, 0
        %795 = vmatprep.subr.mxu0 0.0
        %796 = vmatpush1.xpose.msra.mxu0 %v793
        %797 = vmatprep.subr.mxu0 0.0
        %798 = vmatpush1.xpose.msra.mxu0 0.0
        %799 = vmatprep.subr.mxu0 0.0
        %800 = vmatpush1.xpose.msra.mxu0 0.0
        %801 = vmatprep.subr.mxu0 0.0
        %802 = vmatpush1.xpose.msra.mxu0 0.0
        %803 = vmatprep.subr.mxu0 0.0
        %804 = vmatpush1.xpose.msra.mxu0 0.0
        %805 = vmatprep.subr.mxu0 0.0
        %806 = vmatpush1.xpose.msra.mxu0 0.0
        %807 = vmatprep.subr.mxu0 0.0
        %808 = vmatpush1.xpose.msra.mxu0 0.0
        %809 = vmatprep.subr.mxu0 0.0
        %810 = vmatpush1.xpose.msra.mxu0 0.0
        %811 = vmatprep.subr.mxu0 0.0
        %812 = vmatpush1.xpose.msra.mxu0 0.0
        %813 = vmatprep.subr.mxu0 0.0
        %814 = vmatpush1.xpose.msra.mxu0 0.0
        %815 = vmatprep.subr.mxu0 0.0
        %816 = vmatpush1.xpose.msra.mxu0 0.0
        %817 = vmatprep.subr.mxu0 0.0
        %818 = vmatpush1.xpose.msra.mxu0 0.0
        %819 = vmatprep.subr.mxu0 0.0
        %820 = vmatpush1.xpose.msra.mxu0 0.0
        %821 = vmatprep.subr.mxu0 0.0
        %822 = vmatpush1.xpose.msra.mxu0 0.0
        %823 = vmatprep.subr.mxu0 0.0
        %824 = vmatpush1.xpose.msra.mxu0 0.0
        %825 = vmatprep.subr.mxu0 0.0
        %826 = vmatpush1.xpose.msra.mxu0 0.0
        %827 = vmatprep.subr.mxu0 0.0
        %828 = vmatpush1.xpose.msra.mxu0 0.0
        %829 = vmatprep.subr.mxu0 0.0
        %830 = vmatpush1.xpose.msra.mxu0 0.0
        %831 = vmatprep.subr.mxu0 0.0
        %832 = vmatpush1.xpose.msra.mxu0 0.0
        %833 = vmatprep.subr.mxu0 0.0
        %834 = vmatpush1.xpose.msra.mxu0 0.0
        %835 = vmatprep.subr.mxu0 0.0
        %836 = vmatpush1.xpose.msra.mxu0 0.0
        %837 = vmatprep.subr.mxu0 0.0
        %838 = vmatpush1.xpose.msra.mxu0 0.0
        %839 = vmatprep.subr.mxu0 0.0
        %840 = vmatpush1.xpose.msra.mxu0 0.0
        %841 = vmatprep.subr.mxu0 0.0
        %842 = vmatpush1.xpose.msra.mxu0 0.0
        %843 = vmatprep.subr.mxu0 0.0
        %844 = vmatpush1.xpose.msra.mxu0 0.0
        %845 = vmatprep.subr.mxu0 0.0
        %846 = vmatpush1.xpose.msra.mxu0 0.0
        %847 = vmatprep.subr.mxu0 0.0
        %848 = vmatpush1.xpose.msra.mxu0 0.0
        %849 = vmatprep.subr.mxu0 0.0
        %850 = vmatpush1.xpose.msra.mxu0 0.0
        %851 = vmatprep.subr.mxu0 0.0
        %852 = vmatpush1.xpose.msra.mxu0 0.0
        %853 = vmatprep.subr.mxu0 0.0
        %854 = vmatpush1.xpose.msra.mxu0 0.0
        %855 = vmatprep.subr.mxu0 0.0
        %856 = vmatpush1.xpose.msra.mxu0 0.0
        %857 = vmatprep.subr.mxu0 0.0
        %858 = vmatpush1.xpose.msra.mxu0 0.0
        %859 = vmatprep.mubr.f32.mxu0 0.0
        %860 = vmatmul.mubr.f32.gmra.mrb[0].mxu0 %v791
        %v861 = vpop.f32.mrb[0].mxu0
        %v862 = vadd.f32 %v629, %v861
        %v863 = vpop.f32.mrb[0].mxu0
        %864 = vdwg.mxu0
        %865 = vrot.lane.b32.xlu0 %v609, 96
        %v866 = vpop.permute.xlu0 %865
        %v867 = vsel %vm638, %v595, 0
        %v869 = vsel %vm638, %v866, 0
        %871 = vmatprep.subr.mxu0 0.0
        %872 = vmatpush1.xpose.msra.mxu0 %v869
        %873 = vmatprep.subr.mxu0 0.0
        %874 = vmatpush1.xpose.msra.mxu0 0.0
        %875 = vmatprep.subr.mxu0 0.0
        %876 = vmatpush1.xpose.msra.mxu0 0.0
        %877 = vmatprep.subr.mxu0 0.0
        %878 = vmatpush1.xpose.msra.mxu0 0.0
        %879 = vmatprep.subr.mxu0 0.0
        %880 = vmatpush1.xpose.msra.mxu0 0.0
        %881 = vmatprep.subr.mxu0 0.0
        %882 = vmatpush1.xpose.msra.mxu0 0.0
        %883 = vmatprep.subr.mxu0 0.0
        %884 = vmatpush1.xpose.msra.mxu0 0.0
        %885 = vmatprep.subr.mxu0 0.0
        %886 = vmatpush1.xpose.msra.mxu0 0.0
        %887 = vmatprep.subr.mxu0 0.0
        %888 = vmatpush1.xpose.msra.mxu0 0.0
        %889 = vmatprep.subr.mxu0 0.0
        %890 = vmatpush1.xpose.msra.mxu0 0.0
        %891 = vmatprep.subr.mxu0 0.0
        %892 = vmatpush1.xpose.msra.mxu0 0.0
        %893 = vmatprep.subr.mxu0 0.0
        %894 = vmatpush1.xpose.msra.mxu0 0.0
        %895 = vmatprep.subr.mxu0 0.0
        %896 = vmatpush1.xpose.msra.mxu0 0.0
        %897 = vmatprep.subr.mxu0 0.0
        %898 = vmatpush1.xpose.msra.mxu0 0.0
        %899 = vmatprep.subr.mxu0 0.0
        %900 = vmatpush1.xpose.msra.mxu0 0.0
        %901 = vmatprep.subr.mxu0 0.0
        %902 = vmatpush1.xpose.msra.mxu0 0.0
        %903 = vmatprep.subr.mxu0 0.0
        %904 = vmatpush1.xpose.msra.mxu0 0.0
        %905 = vmatprep.subr.mxu0 0.0
        %906 = vmatpush1.xpose.msra.mxu0 0.0
        %907 = vmatprep.subr.mxu0 0.0
        %908 = vmatpush1.xpose.msra.mxu0 0.0
        %909 = vmatprep.subr.mxu0 0.0
        %910 = vmatpush1.xpose.msra.mxu0 0.0
        %911 = vmatprep.subr.mxu0 0.0
        %912 = vmatpush1.xpose.msra.mxu0 0.0
        %913 = vmatprep.subr.mxu0 0.0
        %914 = vmatpush1.xpose.msra.mxu0 0.0
        %915 = vmatprep.subr.mxu0 0.0
        %916 = vmatpush1.xpose.msra.mxu0 0.0
        %917 = vmatprep.subr.mxu0 0.0
        %918 = vmatpush1.xpose.msra.mxu0 0.0
        %919 = vmatprep.subr.mxu0 0.0
        %920 = vmatpush1.xpose.msra.mxu0 0.0
        %921 = vmatprep.subr.mxu0 0.0
        %922 = vmatpush1.xpose.msra.mxu0 0.0
        %923 = vmatprep.subr.mxu0 0.0
        %924 = vmatpush1.xpose.msra.mxu0 0.0
        %925 = vmatprep.subr.mxu0 0.0
        %926 = vmatpush1.xpose.msra.mxu0 0.0
        %927 = vmatprep.subr.mxu0 0.0
        %928 = vmatpush1.xpose.msra.mxu0 0.0
        %929 = vmatprep.subr.mxu0 0.0
        %930 = vmatpush1.xpose.msra.mxu0 0.0
        %931 = vmatprep.subr.mxu0 0.0
        %932 = vmatpush1.xpose.msra.mxu0 0.0
        %933 = vmatprep.subr.mxu0 0.0
        %934 = vmatpush1.xpose.msra.mxu0 0.0
        %935 = vmatprep.mubr.f32.mxu0 0.0
        %936 = vmatmul.mubr.f32.gmra.mrb[0].mxu0 %v867
        %v937 = vpop.f32.mrb[0].mxu0
        %v938 = vadd.f32 %v633, %v937
        %v939 = vpop.f32.mrb[0].mxu0
        %940 = vdwg.mxu0
        %941 = vrot.lane.b32.xlu0 %v611, 96
        %v942 = vpop.permute.xlu0 %941
        %v943 = vsel %vm638, %v597, 0
        %v945 = vsel %vm638, %v942, 0
        %947 = vmatprep.subr.mxu0 0.0
        %948 = vmatpush1.xpose.msra.mxu0 %v945
        %949 = vmatprep.subr.mxu0 0.0
        %950 = vmatpush1.xpose.msra.mxu0 0.0
        %951 = vmatprep.subr.mxu0 0.0
        %952 = vmatpush1.xpose.msra.mxu0 0.0
        %953 = vmatprep.subr.mxu0 0.0
        %954 = vmatpush1.xpose.msra.mxu0 0.0
        %955 = vmatprep.subr.mxu0 0.0
        %956 = vmatpush1.xpose.msra.mxu0 0.0
        %957 = vmatprep.subr.mxu0 0.0
        %958 = vmatpush1.xpose.msra.mxu0 0.0
        %959 = vmatprep.subr.mxu0 0.0
        %960 = vmatpush1.xpose.msra.mxu0 0.0
        %961 = vmatprep.subr.mxu0 0.0
        %962 = vmatpush1.xpose.msra.mxu0 0.0
        %963 = vmatprep.subr.mxu0 0.0
        %964 = vmatpush1.xpose.msra.mxu0 0.0
        %965 = vmatprep.subr.mxu0 0.0
        %966 = vmatpush1.xpose.msra.mxu0 0.0
        %967 = vmatprep.subr.mxu0 0.0
        %968 = vmatpush1.xpose.msra.mxu0 0.0
        %969 = vmatprep.subr.mxu0 0.0
        %970 = vmatpush1.xpose.msra.mxu0 0.0
        %971 = vmatprep.subr.mxu0 0.0
        %972 = vmatpush1.xpose.msra.mxu0 0.0
        %973 = vmatprep.subr.mxu0 0.0
        %974 = vmatpush1.xpose.msra.mxu0 0.0
        %975 = vmatprep.subr.mxu0 0.0
        %976 = vmatpush1.xpose.msra.mxu0 0.0
        %977 = vmatprep.subr.mxu0 0.0
        %978 = vmatpush1.xpose.msra.mxu0 0.0
        %979 = vmatprep.subr.mxu0 0.0
        %980 = vmatpush1.xpose.msra.mxu0 0.0
        %981 = vmatprep.subr.mxu0 0.0
        %982 = vmatpush1.xpose.msra.mxu0 0.0
        %983 = vmatprep.subr.mxu0 0.0
        %984 = vmatpush1.xpose.msra.mxu0 0.0
        %985 = vmatprep.subr.mxu0 0.0
        %986 = vmatpush1.xpose.msra.mxu0 0.0
        %987 = vmatprep.subr.mxu0 0.0
        %988 = vmatpush1.xpose.msra.mxu0 0.0
        %989 = vmatprep.subr.mxu0 0.0
        %990 = vmatpush1.xpose.msra.mxu0 0.0
        %991 = vmatprep.subr.mxu0 0.0
        %992 = vmatpush1.xpose.msra.mxu0 0.0
        %993 = vmatprep.subr.mxu0 0.0
        %994 = vmatpush1.xpose.msra.mxu0 0.0
        %995 = vmatprep.subr.mxu0 0.0
        %996 = vmatpush1.xpose.msra.mxu0 0.0
        %997 = vmatprep.subr.mxu0 0.0
        %998 = vmatpush1.xpose.msra.mxu0 0.0
        %999 = vmatprep.subr.mxu0 0.0
        %1000 = vmatpush1.xpose.msra.mxu0 0.0
        %1001 = vmatprep.subr.mxu0 0.0
        %1002 = vmatpush1.xpose.msra.mxu0 0.0
        %1003 = vmatprep.subr.mxu0 0.0
        %1004 = vmatpush1.xpose.msra.mxu0 0.0
        %1005 = vmatprep.subr.mxu0 0.0
        %1006 = vmatpush1.xpose.msra.mxu0 0.0
        %1007 = vmatprep.subr.mxu0 0.0
        %1008 = vmatpush1.xpose.msra.mxu0 0.0
        %1009 = vmatprep.subr.mxu0 0.0
        %1010 = vmatpush1.xpose.msra.mxu0 0.0
        %1011 = vmatprep.mubr.f32.mxu0 0.0
        %1012 = vmatmul.mubr.f32.gmra.mrb[0].mxu0 %v943
        %v1013 = vpop.f32.mrb[0].mxu0
        %v1014 = vadd.f32 %v629, %v1013
        %v1015 = vpop.f32.mrb[0].mxu0
        %1016 = vdwg.mxu0
        %1017 = vrot.lane.b32.xlu0 %v613, 96
        %v1018 = vpop.permute.xlu0 %1017
        %v1019 = vsel %vm638, %v599, 0
        %v1021 = vsel %vm638, %v1018, 0
        %1023 = vmatprep.subr.mxu0 0.0
        %1024 = vmatpush1.xpose.msra.mxu0 %v1021
        %1025 = vmatprep.subr.mxu0 0.0
        %1026 = vmatpush1.xpose.msra.mxu0 0.0
        %1027 = vmatprep.subr.mxu0 0.0
        %1028 = vmatpush1.xpose.msra.mxu0 0.0
        %1029 = vmatprep.subr.mxu0 0.0
        %1030 = vmatpush1.xpose.msra.mxu0 0.0
        %1031 = vmatprep.subr.mxu0 0.0
        %1032 = vmatpush1.xpose.msra.mxu0 0.0
        %1033 = vmatprep.subr.mxu0 0.0
        %1034 = vmatpush1.xpose.msra.mxu0 0.0
        %1035 = vmatprep.subr.mxu0 0.0
        %1036 = vmatpush1.xpose.msra.mxu0 0.0
        %1037 = vmatprep.subr.mxu0 0.0
        %1038 = vmatpush1.xpose.msra.mxu0 0.0
        %1039 = vmatprep.subr.mxu0 0.0
        %1040 = vmatpush1.xpose.msra.mxu0 0.0
        %1041 = vmatprep.subr.mxu0 0.0
        %1042 = vmatpush1.xpose.msra.mxu0 0.0
        %1043 = vmatprep.subr.mxu0 0.0
        %1044 = vmatpush1.xpose.msra.mxu0 0.0
        %1045 = vmatprep.subr.mxu0 0.0
        %1046 = vmatpush1.xpose.msra.mxu0 0.0
        %1047 = vmatprep.subr.mxu0 0.0
        %1048 = vmatpush1.xpose.msra.mxu0 0.0
        %1049 = vmatprep.subr.mxu0 0.0
        %1050 = vmatpush1.xpose.msra.mxu0 0.0
        %1051 = vmatprep.subr.mxu0 0.0
        %1052 = vmatpush1.xpose.msra.mxu0 0.0
        %1053 = vmatprep.subr.mxu0 0.0
        %1054 = vmatpush1.xpose.msra.mxu0 0.0
        %1055 = vmatprep.subr.mxu0 0.0
        %1056 = vmatpush1.xpose.msra.mxu0 0.0
        %1057 = vmatprep.subr.mxu0 0.0
        %1058 = vmatpush1.xpose.msra.mxu0 0.0
        %1059 = vmatprep.subr.mxu0 0.0
        %1060 = vmatpush1.xpose.msra.mxu0 0.0
        %1061 = vmatprep.subr.mxu0 0.0
        %1062 = vmatpush1.xpose.msra.mxu0 0.0
        %1063 = vmatprep.subr.mxu0 0.0
        %1064 = vmatpush1.xpose.msra.mxu0 0.0
        %1065 = vmatprep.subr.mxu0 0.0
        %1066 = vmatpush1.xpose.msra.mxu0 0.0
        %1067 = vmatprep.subr.mxu0 0.0
        %1068 = vmatpush1.xpose.msra.mxu0 0.0
        %1069 = vmatprep.subr.mxu0 0.0
        %1070 = vmatpush1.xpose.msra.mxu0 0.0
        %1071 = vmatprep.subr.mxu0 0.0
        %1072 = vmatpush1.xpose.msra.mxu0 0.0
        %1073 = vmatprep.subr.mxu0 0.0
        %1074 = vmatpush1.xpose.msra.mxu0 0.0
        %1075 = vmatprep.subr.mxu0 0.0
        %1076 = vmatpush1.xpose.msra.mxu0 0.0
        %1077 = vmatprep.subr.mxu0 0.0
        %1078 = vmatpush1.xpose.msra.mxu0 0.0
        %1079 = vmatprep.subr.mxu0 0.0
        %1080 = vmatpush1.xpose.msra.mxu0 0.0
        %1081 = vmatprep.subr.mxu0 0.0
        %1082 = vmatpush1.xpose.msra.mxu0 0.0
        %1083 = vmatprep.subr.mxu0 0.0
        %1084 = vmatpush1.xpose.msra.mxu0 0.0
        %1085 = vmatprep.subr.mxu0 0.0
        %1086 = vmatpush1.xpose.msra.mxu0 0.0
        %1087 = vmatprep.mubr.f32.mxu0 0.0
        %1088 = vmatmul.mubr.f32.gmra.mrb[0].mxu0 %v1019
        %v1089 = vpop.f32.mrb[0].mxu0
        %v1090 = vadd.f32 %v633, %v1089
        %v1091 = vpop.f32.mrb[0].mxu0
        %1092 = vdwg.mxu0
        %1093 = vrot.lane.b32.xlu0 %v615, 96
        %v1094 = vpop.permute.xlu0 %1093
        %v1095 = vsel %vm638, %v601, 0
        %v1097 = vsel %vm638, %v1094, 0
        %1099 = vmatprep.subr.mxu0 0.0
        %1100 = vmatpush1.xpose.msra.mxu0 %v1097
        %1101 = vmatprep.subr.mxu0 0.0
        %1102 = vmatpush1.xpose.msra.mxu0 0.0
        %1103 = vmatprep.subr.mxu0 0.0
        %1104 = vmatpush1.xpose.msra.mxu0 0.0
        %1105 = vmatprep.subr.mxu0 0.0
        %1106 = vmatpush1.xpose.msra.mxu0 0.0
        %1107 = vmatprep.subr.mxu0 0.0
        %1108 = vmatpush1.xpose.msra.mxu0 0.0
        %1109 = vmatprep.subr.mxu0 0.0
        %1110 = vmatpush1.xpose.msra.mxu0 0.0
        %1111 = vmatprep.subr.mxu0 0.0
        %1112 = vmatpush1.xpose.msra.mxu0 0.0
        %1113 = vmatprep.subr.mxu0 0.0
        %1114 = vmatpush1.xpose.msra.mxu0 0.0
        %1115 = vmatprep.subr.mxu0 0.0
        %1116 = vmatpush1.xpose.msra.mxu0 0.0
        %1117 = vmatprep.subr.mxu0 0.0
        %1118 = vmatpush1.xpose.msra.mxu0 0.0
        %1119 = vmatprep.subr.mxu0 0.0
        %1120 = vmatpush1.xpose.msra.mxu0 0.0
        %1121 = vmatprep.subr.mxu0 0.0
        %1122 = vmatpush1.xpose.msra.mxu0 0.0
        %1123 = vmatprep.subr.mxu0 0.0
        %1124 = vmatpush1.xpose.msra.mxu0 0.0
        %1125 = vmatprep.subr.mxu0 0.0
        %1126 = vmatpush1.xpose.msra.mxu0 0.0
        %1127 = vmatprep.subr.mxu0 0.0
        %1128 = vmatpush1.xpose.msra.mxu0 0.0
        %1129 = vmatprep.subr.mxu0 0.0
        %1130 = vmatpush1.xpose.msra.mxu0 0.0
        %1131 = vmatprep.subr.mxu0 0.0
        %1132 = vmatpush1.xpose.msra.mxu0 0.0
        %1133 = vmatprep.subr.mxu0 0.0
        %1134 = vmatpush1.xpose.msra.mxu0 0.0
        %1135 = vmatprep.subr.mxu0 0.0
        %1136 = vmatpush1.xpose.msra.mxu0 0.0
        %1137 = vmatprep.subr.mxu0 0.0
        %1138 = vmatpush1.xpose.msra.mxu0 0.0
        %1139 = vmatprep.subr.mxu0 0.0
        %1140 = vmatpush1.xpose.msra.mxu0 0.0
        %1141 = vmatprep.subr.mxu0 0.0
        %1142 = vmatpush1.xpose.msra.mxu0 0.0
        %1143 = vmatprep.subr.mxu0 0.0
        %1144 = vmatpush1.xpose.msra.mxu0 0.0
        %1145 = vmatprep.subr.mxu0 0.0
        %1146 = vmatpush1.xpose.msra.mxu0 0.0
        %1147 = vmatprep.subr.mxu0 0.0
        %1148 = vmatpush1.xpose.msra.mxu0 0.0
        %1149 = vmatprep.subr.mxu0 0.0
        %1150 = vmatpush1.xpose.msra.mxu0 0.0
        %1151 = vmatprep.subr.mxu0 0.0
        %1152 = vmatpush1.xpose.msra.mxu0 0.0
        %1153 = vmatprep.subr.mxu0 0.0
        %1154 = vmatpush1.xpose.msra.mxu0 0.0
        %1155 = vmatprep.subr.mxu0 0.0
        %1156 = vmatpush1.xpose.msra.mxu0 0.0
        %1157 = vmatprep.subr.mxu0 0.0
        %1158 = vmatpush1.xpose.msra.mxu0 0.0
        %1159 = vmatprep.subr.mxu0 0.0
        %1160 = vmatpush1.xpose.msra.mxu0 0.0
        %1161 = vmatprep.subr.mxu0 0.0
        %1162 = vmatpush1.xpose.msra.mxu0 0.0
        %1163 = vmatprep.mubr.f32.mxu0 0.0
        %1164 = vmatmul.mubr.f32.gmra.mrb[0].mxu0 %v1095
        %v1165 = vpop.f32.mrb[0].mxu0
        %v1166 = vadd.f32 %v629, %v1165
        %v1167 = vpop.f32.mrb[0].mxu0
        %1168 = vdwg.mxu0
        %1169 = vrot.lane.b32.xlu0 %v617, 96
        %v1170 = vpop.permute.xlu0 %1169
        %v1171 = vsel %vm638, %v603, 0
        %v1173 = vsel %vm638, %v1170, 0
        %1175 = vmatprep.subr.mxu0 0.0
        %1176 = vmatpush1.xpose.msra.mxu0 %v1173
        %1177 = vmatprep.subr.mxu0 0.0
        %1178 = vmatpush1.xpose.msra.mxu0 0.0
        %1179 = vmatprep.subr.mxu0 0.0
        %1180 = vmatpush1.xpose.msra.mxu0 0.0
        %1181 = vmatprep.subr.mxu0 0.0
        %1182 = vmatpush1.xpose.msra.mxu0 0.0
        %1183 = vmatprep.subr.mxu0 0.0
        %1184 = vmatpush1.xpose.msra.mxu0 0.0
        %1185 = vmatprep.subr.mxu0 0.0
        %1186 = vmatpush1.xpose.msra.mxu0 0.0
        %1187 = vmatprep.subr.mxu0 0.0
        %1188 = vmatpush1.xpose.msra.mxu0 0.0
        %1189 = vmatprep.subr.mxu0 0.0
        %1190 = vmatpush1.xpose.msra.mxu0 0.0
        %1191 = vmatprep.subr.mxu0 0.0
        %1192 = vmatpush1.xpose.msra.mxu0 0.0
        %1193 = vmatprep.subr.mxu0 0.0
        %1194 = vmatpush1.xpose.msra.mxu0 0.0
        %1195 = vmatprep.subr.mxu0 0.0
        %1196 = vmatpush1.xpose.msra.mxu0 0.0
        %1197 = vmatprep.subr.mxu0 0.0
        %1198 = vmatpush1.xpose.msra.mxu0 0.0
        %1199 = vmatprep.subr.mxu0 0.0
        %1200 = vmatpush1.xpose.msra.mxu0 0.0
        %1201 = vmatprep.subr.mxu0 0.0
        %1202 = vmatpush1.xpose.msra.mxu0 0.0
        %1203 = vmatprep.subr.mxu0 0.0
        %1204 = vmatpush1.xpose.msra.mxu0 0.0
        %1205 = vmatprep.subr.mxu0 0.0
        %1206 = vmatpush1.xpose.msra.mxu0 0.0
        %1207 = vmatprep.subr.mxu0 0.0
        %1208 = vmatpush1.xpose.msra.mxu0 0.0
        %1209 = vmatprep.subr.mxu0 0.0
        %1210 = vmatpush1.xpose.msra.mxu0 0.0
        %1211 = vmatprep.subr.mxu0 0.0
        %1212 = vmatpush1.xpose.msra.mxu0 0.0
        %1213 = vmatprep.subr.mxu0 0.0
        %1214 = vmatpush1.xpose.msra.mxu0 0.0
        %1215 = vmatprep.subr.mxu0 0.0
        %1216 = vmatpush1.xpose.msra.mxu0 0.0
        %1217 = vmatprep.subr.mxu0 0.0
        %1218 = vmatpush1.xpose.msra.mxu0 0.0
        %1219 = vmatprep.subr.mxu0 0.0
        %1220 = vmatpush1.xpose.msra.mxu0 0.0
        %1221 = vmatprep.subr.mxu0 0.0
        %1222 = vmatpush1.xpose.msra.mxu0 0.0
        %1223 = vmatprep.subr.mxu0 0.0
        %1224 = vmatpush1.xpose.msra.mxu0 0.0
        %1225 = vmatprep.subr.mxu0 0.0
        %1226 = vmatpush1.xpose.msra.mxu0 0.0
        %1227 = vmatprep.subr.mxu0 0.0
        %1228 = vmatpush1.xpose.msra.mxu0 0.0
        %1229 = vmatprep.subr.mxu0 0.0
        %1230 = vmatpush1.xpose.msra.mxu0 0.0
        %1231 = vmatprep.subr.mxu0 0.0
        %1232 = vmatpush1.xpose.msra.mxu0 0.0
        %1233 = vmatprep.subr.mxu0 0.0
        %1234 = vmatpush1.xpose.msra.mxu0 0.0
        %1235 = vmatprep.subr.mxu0 0.0
        %1236 = vmatpush1.xpose.msra.mxu0 0.0
        %1237 = vmatprep.subr.mxu0 0.0
        %1238 = vmatpush1.xpose.msra.mxu0 0.0
        %1239 = vmatprep.mubr.f32.mxu0 0.0
        %1240 = vmatmul.mubr.f32.gmra.mrb[0].mxu0 %v1171
        %v1241 = vpop.f32.mrb[0].mxu0
        %v1242 = vadd.f32 %v633, %v1241
        %v1243 = vpop.f32.mrb[0].mxu0
        %1244 = vdwg.mxu0
        %v1245 = vsel %vm638, %v710, -inf
        %1246 = vmax.xlane.f32.xlu0 %v1245
        %v1247 = vpop.xlane.xlu0 %1246
        %v1248 = vsel %vm638, %v786, -inf
        %1249 = vmax.xlane.f32.xlu0 %v1248
        %v1250 = vpop.xlane.xlu0 %1249
        %v1251 = vsel %vm638, %v862, -inf
        %1252 = vmax.xlane.f32.xlu0 %v1251
        %v1253 = vpop.xlane.xlu0 %1252
        %v1254 = vsel %vm638, %v938, -inf
        %1255 = vmax.xlane.f32.xlu0 %v1254
        %v1256 = vpop.xlane.xlu0 %1255
        %v1257 = vsel %vm638, %v1014, -inf
        %1258 = vmax.xlane.f32.xlu0 %v1257
        %v1259 = vpop.xlane.xlu0 %1258
        %v1260 = vsel %vm638, %v1090, -inf
        %1261 = vmax.xlane.f32.xlu0 %v1260
        %v1262 = vpop.xlane.xlu0 %1261
        %v1263 = vsel %vm638, %v1166, -inf
        %1264 = vmax.xlane.f32.xlu0 %v1263
        %v1265 = vpop.xlane.xlu0 %1264
        %v1266 = vsel %vm638, %v1242, -inf
        %1267 = vmax.xlane.f32.xlu0 %v1266
        %v1268 = vpop.xlane.xlu0 %1267
        %v1269 = vsub.f32 %v710, %v1247
        %v1270 = vsub.f32 %v786, %v1250
        %v1271 = vsub.f32 %v862, %v1253
        %v1272 = vsub.f32 %v938, %v1256
        %v1273 = vsub.f32 %v1014, %v1259
        %v1274 = vsub.f32 %v1090, %v1262
        %v1275 = vsub.f32 %v1166, %v1265
        %v1276 = vsub.f32 %v1242, %v1268
        %v1277 = vmul.f32 %v1269, 1.442695
        %v1278 = vpow.pop %v1277
        %v1279 = vmul.f32 %v1270, 1.442695
        %v1280 = vpow.pop %v1279
        %v1281 = vmul.f32 %v1271, 1.442695
        %v1282 = vpow.pop %v1281
        %v1283 = vmul.f32 %v1272, 1.442695
        %v1284 = vpow.pop %v1283
        %v1285 = vmul.f32 %v1273, 1.442695
        %v1286 = vpow.pop %v1285
        %v1287 = vmul.f32 %v1274, 1.442695
        %v1288 = vpow.pop %v1287
        %v1289 = vmul.f32 %v1275, 1.442695
        %v1290 = vpow.pop %v1289
        %v1291 = vmul.f32 %v1276, 1.442695
        %v1292 = vpow.pop %v1291
        %v1293 = vsel %vm638, %v1278, 0.0
        %1294 = vadd.xlane.f32.xlu0 %v1293
        %v1295 = vpop.xlane.xlu0 %1294
        %v1296 = vsel %vm638, %v1280, 0.0
        %1297 = vadd.xlane.f32.xlu0 %v1296
        %v1298 = vpop.xlane.xlu0 %1297
        %v1299 = vsel %vm638, %v1282, 0.0
        %1300 = vadd.xlane.f32.xlu0 %v1299
        %v1301 = vpop.xlane.xlu0 %1300
        %v1302 = vsel %vm638, %v1284, 0.0
        %1303 = vadd.xlane.f32.xlu0 %v1302
        %v1304 = vpop.xlane.xlu0 %1303
        %v1305 = vsel %vm638, %v1286, 0.0
        %1306 = vadd.xlane.f32.xlu0 %v1305
        %v1307 = vpop.xlane.xlu0 %1306
        %v1308 = vsel %vm638, %v1288, 0.0
        %1309 = vadd.xlane.f32.xlu0 %v1308
        %v1310 = vpop.xlane.xlu0 %1309
        %v1311 = vsel %vm638, %v1290, 0.0
        %1312 = vadd.xlane.f32.xlu0 %v1311
        %v1313 = vpop.xlane.xlu0 %1312
        %v1314 = vsel %vm638, %v1292, 0.0
        %1315 = vadd.xlane.f32.xlu0 %v1314
        %v1316 = vpop.xlane.xlu0 %1315
        %v1317 = vrcp.pop %v1295
        %v1318 = vrcp.pop %v1298
        %v1319 = vrcp.pop %v1301
        %v1320 = vrcp.pop %v1304
        %v1321 = vrcp.pop %v1307
        %v1322 = vrcp.pop %v1310
        %v1323 = vrcp.pop %v1313
        %v1324 = vrcp.pop %v1316
        %v1325 = vmul.f32 %v1278, %v1317
        %v1326 = vmul.f32 %v1280, %v1318
        %v1327 = vmul.f32 %v1282, %v1319
        %v1328 = vmul.f32 %v1284, %v1320
        %v1329 = vmul.f32 %v1286, %v1321
        %v1330 = vmul.f32 %v1288, %v1322
        %v1331 = vmul.f32 %v1290, %v1323
        %v1332 = vmul.f32 %v1292, %v1324
        %1333 = vrot.lane.b32.xlu0 %v580, 64
        %v1334 = vpop.permute.xlu0 %1333
        %v1337 = vsel %vm638, %v1325, 0
        %1339 = vmatprep.subr.mxu0 0.0
        %1340 = vmatpush1.msra.mxu0 %v1334
        %1341 = vmatprep.subr.mxu0 0.0
        %1342 = vmatpush1.msra.mxu0 0.0
        %1343 = vmatprep.subr.mxu0 0.0
        %1344 = vmatpush1.msra.mxu0 0.0
        %1345 = vmatprep.subr.mxu0 0.0
        %1346 = vmatpush1.msra.mxu0 0.0
        %1347 = vmatprep.subr.mxu0 0.0
        %1348 = vmatpush1.msra.mxu0 0.0
        %1349 = vmatprep.subr.mxu0 0.0
        %1350 = vmatpush1.msra.mxu0 0.0
        %1351 = vmatprep.subr.mxu0 0.0
        %1352 = vmatpush1.msra.mxu0 0.0
        %1353 = vmatprep.subr.mxu0 0.0
        %1354 = vmatpush1.msra.mxu0 0.0
        %1355 = vmatprep.subr.mxu0 0.0
        %1356 = vmatpush1.msra.mxu0 0.0
        %1357 = vmatprep.subr.mxu0 0.0
        %1358 = vmatpush1.msra.mxu0 0.0
        %1359 = vmatprep.subr.mxu0 0.0
        %1360 = vmatpush1.msra.mxu0 0.0
        %1361 = vmatprep.subr.mxu0 0.0
        %1362 = vmatpush1.msra.mxu0 0.0
        %1363 = vmatprep.subr.mxu0 0.0
        %1364 = vmatpush1.msra.mxu0 0.0
        %1365 = vmatprep.subr.mxu0 0.0
        %1366 = vmatpush1.msra.mxu0 0.0
        %1367 = vmatprep.subr.mxu0 0.0
        %1368 = vmatpush1.msra.mxu0 0.0
        %1369 = vmatprep.subr.mxu0 0.0
        %1370 = vmatpush1.msra.mxu0 0.0
        %1371 = vmatprep.subr.mxu0 0.0
        %1372 = vmatpush1.msra.mxu0 0.0
        %1373 = vmatprep.subr.mxu0 0.0
        %1374 = vmatpush1.msra.mxu0 0.0
        %1375 = vmatprep.subr.mxu0 0.0
        %1376 = vmatpush1.msra.mxu0 0.0
        %1377 = vmatprep.subr.mxu0 0.0
        %1378 = vmatpush1.msra.mxu0 0.0
        %1379 = vmatprep.subr.mxu0 0.0
        %1380 = vmatpush1.msra.mxu0 0.0
        %1381 = vmatprep.subr.mxu0 0.0
        %1382 = vmatpush1.msra.mxu0 0.0
        %1383 = vmatprep.subr.mxu0 0.0
        %1384 = vmatpush1.msra.mxu0 0.0
        %1385 = vmatprep.subr.mxu0 0.0
        %1386 = vmatpush1.msra.mxu0 0.0
        %1387 = vmatprep.subr.mxu0 0.0
        %1388 = vmatpush1.msra.mxu0 0.0
        %1389 = vmatprep.subr.mxu0 0.0
        %1390 = vmatpush1.msra.mxu0 0.0
        %1391 = vmatprep.subr.mxu0 0.0
        %1392 = vmatpush1.msra.mxu0 0.0
        %1393 = vmatprep.subr.mxu0 0.0
        %1394 = vmatpush1.msra.mxu0 0.0
        %1395 = vmatprep.subr.mxu0 0.0
        %1396 = vmatpush1.msra.mxu0 0.0
        %1397 = vmatprep.subr.mxu0 0.0
        %1398 = vmatpush1.msra.mxu0 0.0
        %1399 = vmatprep.subr.mxu0 0.0
        %1400 = vmatpush1.msra.mxu0 0.0
        %1401 = vmatprep.subr.mxu0 0.0
        %1402 = vmatpush1.msra.mxu0 0.0
        %1403 = vmatprep.mubr.f32.mxu0 0.0
        %1404 = vmatmul.mubr.f32.gmra.mrb[0].mxu0 %v1337
        %v1405 = vpop.f32.mrb[0].mxu0
        %v1406 = vadd.f32 0.0, %v1405
        %v1407 = vpop.f32.mrb[0].mxu0
        %1408 = vdwg.mxu0
        %1409 = vrot.lane.b32.xlu0 %v585, 64
        %v1410 = vpop.permute.xlu0 %1409
        %v1413 = vsel %vm638, %v1326, 0
        %1415 = vmatprep.subr.mxu0 0.0
        %1416 = vmatpush1.msra.mxu0 %v1410
        %1417 = vmatprep.subr.mxu0 0.0
        %1418 = vmatpush1.msra.mxu0 0.0
        %1419 = vmatprep.subr.mxu0 0.0
        %1420 = vmatpush1.msra.mxu0 0.0
        %1421 = vmatprep.subr.mxu0 0.0
        %1422 = vmatpush1.msra.mxu0 0.0
        %1423 = vmatprep.subr.mxu0 0.0
        %1424 = vmatpush1.msra.mxu0 0.0
        %1425 = vmatprep.subr.mxu0 0.0
        %1426 = vmatpush1.msra.mxu0 0.0
        %1427 = vmatprep.subr.mxu0 0.0
        %1428 = vmatpush1.msra.mxu0 0.0
        %1429 = vmatprep.subr.mxu0 0.0
        %1430 = vmatpush1.msra.mxu0 0.0
        %1431 = vmatprep.subr.mxu0 0.0
        %1432 = vmatpush1.msra.mxu0 0.0
        %1433 = vmatprep.subr.mxu0 0.0
        %1434 = vmatpush1.msra.mxu0 0.0
        %1435 = vmatprep.subr.mxu0 0.0
        %1436 = vmatpush1.msra.mxu0 0.0
        %1437 = vmatprep.subr.mxu0 0.0
        %1438 = vmatpush1.msra.mxu0 0.0
        %1439 = vmatprep.subr.mxu0 0.0
        %1440 = vmatpush1.msra.mxu0 0.0
        %1441 = vmatprep.subr.mxu0 0.0
        %1442 = vmatpush1.msra.mxu0 0.0
        %1443 = vmatprep.subr.mxu0 0.0
        %1444 = vmatpush1.msra.mxu0 0.0
        %1445 = vmatprep.subr.mxu0 0.0
        %1446 = vmatpush1.msra.mxu0 0.0
        %1447 = vmatprep.subr.mxu0 0.0
        %1448 = vmatpush1.msra.mxu0 0.0
        %1449 = vmatprep.subr.mxu0 0.0
        %1450 = vmatpush1.msra.mxu0 0.0
        %1451 = vmatprep.subr.mxu0 0.0
        %1452 = vmatpush1.msra.mxu0 0.0
        %1453 = vmatprep.subr.mxu0 0.0
        %1454 = vmatpush1.msra.mxu0 0.0
        %1455 = vmatprep.subr.mxu0 0.0
        %1456 = vmatpush1.msra.mxu0 0.0
        %1457 = vmatprep.subr.mxu0 0.0
        %1458 = vmatpush1.msra.mxu0 0.0
        %1459 = vmatprep.subr.mxu0 0.0
        %1460 = vmatpush1.msra.mxu0 0.0
        %1461 = vmatprep.subr.mxu0 0.0
        %1462 = vmatpush1.msra.mxu0 0.0
        %1463 = vmatprep.subr.mxu0 0.0
        %1464 = vmatpush1.msra.mxu0 0.0
        %1465 = vmatprep.subr.mxu0 0.0
        %1466 = vmatpush1.msra.mxu0 0.0
        %1467 = vmatprep.subr.mxu0 0.0
        %1468 = vmatpush1.msra.mxu0 0.0
        %1469 = vmatprep.subr.mxu0 0.0
        %1470 = vmatpush1.msra.mxu0 0.0
        %1471 = vmatprep.subr.mxu0 0.0
        %1472 = vmatpush1.msra.mxu0 0.0
        %1473 = vmatprep.subr.mxu0 0.0
        %1474 = vmatpush1.msra.mxu0 0.0
        %1475 = vmatprep.subr.mxu0 0.0
        %1476 = vmatpush1.msra.mxu0 0.0
        %1477 = vmatprep.subr.mxu0 0.0
        %1478 = vmatpush1.msra.mxu0 0.0
        %1479 = vmatprep.mubr.f32.mxu0 0.0
        %1480 = vmatmul.mubr.f32.gmra.mrb[0].mxu0 %v1413
        %v1481 = vpop.f32.mrb[0].mxu0
        %v1482 = vadd.f32 0.0, %v1481
        %v1483 = vpop.f32.mrb[0].mxu0
        %1484 = vdwg.mxu0
        %1485 = vrot.lane.b32.xlu0 %v607, 64
        %v1486 = vpop.permute.xlu0 %1485
        %v1489 = vsel %vm638, %v1327, 0
        %1491 = vmatprep.subr.mxu0 0.0
        %1492 = vmatpush1.msra.mxu0 %v1486
        %1493 = vmatprep.subr.mxu0 0.0
        %1494 = vmatpush1.msra.mxu0 0.0
        %1495 = vmatprep.subr.mxu0 0.0
        %1496 = vmatpush1.msra.mxu0 0.0
        %1497 = vmatprep.subr.mxu0 0.0
        %1498 = vmatpush1.msra.mxu0 0.0
        %1499 = vmatprep.subr.mxu0 0.0
        %1500 = vmatpush1.msra.mxu0 0.0
        %1501 = vmatprep.subr.mxu0 0.0
        %1502 = vmatpush1.msra.mxu0 0.0
        %1503 = vmatprep.subr.mxu0 0.0
        %1504 = vmatpush1.msra.mxu0 0.0
        %1505 = vmatprep.subr.mxu0 0.0
        %1506 = vmatpush1.msra.mxu0 0.0
        %1507 = vmatprep.subr.mxu0 0.0
        %1508 = vmatpush1.msra.mxu0 0.0
        %1509 = vmatprep.subr.mxu0 0.0
        %1510 = vmatpush1.msra.mxu0 0.0
        %1511 = vmatprep.subr.mxu0 0.0
        %1512 = vmatpush1.msra.mxu0 0.0
        %1513 = vmatprep.subr.mxu0 0.0
        %1514 = vmatpush1.msra.mxu0 0.0
        %1515 = vmatprep.subr.mxu0 0.0
        %1516 = vmatpush1.msra.mxu0 0.0
        %1517 = vmatprep.subr.mxu0 0.0
        %1518 = vmatpush1.msra.mxu0 0.0
        %1519 = vmatprep.subr.mxu0 0.0
        %1520 = vmatpush1.msra.mxu0 0.0
        %1521 = vmatprep.subr.mxu0 0.0
        %1522 = vmatpush1.msra.mxu0 0.0
        %1523 = vmatprep.subr.mxu0 0.0
        %1524 = vmatpush1.msra.mxu0 0.0
        %1525 = vmatprep.subr.mxu0 0.0
        %1526 = vmatpush1.msra.mxu0 0.0
        %1527 = vmatprep.subr.mxu0 0.0
        %1528 = vmatpush1.msra.mxu0 0.0
        %1529 = vmatprep.subr.mxu0 0.0
        %1530 = vmatpush1.msra.mxu0 0.0
        %1531 = vmatprep.subr.mxu0 0.0
        %1532 = vmatpush1.msra.mxu0 0.0
        %1533 = vmatprep.subr.mxu0 0.0
        %1534 = vmatpush1.msra.mxu0 0.0
        %1535 = vmatprep.subr.mxu0 0.0
        %1536 = vmatpush1.msra.mxu0 0.0
        %1537 = vmatprep.subr.mxu0 0.0
        %1538 = vmatpush1.msra.mxu0 0.0
        %1539 = vmatprep.subr.mxu0 0.0
        %1540 = vmatpush1.msra.mxu0 0.0
        %1541 = vmatprep.subr.mxu0 0.0
        %1542 = vmatpush1.msra.mxu0 0.0
        %1543 = vmatprep.subr.mxu0 0.0
        %1544 = vmatpush1.msra.mxu0 0.0
        %1545 = vmatprep.subr.mxu0 0.0
        %1546 = vmatpush1.msra.mxu0 0.0
        %1547 = vmatprep.subr.mxu0 0.0
        %1548 = vmatpush1.msra.mxu0 0.0
        %1549 = vmatprep.subr.mxu0 0.0
        %1550 = vmatpush1.msra.mxu0 0.0
        %1551 = vmatprep.subr.mxu0 0.0
        %1552 = vmatpush1.msra.mxu0 0.0
        %1553 = vmatprep.subr.mxu0 0.0
        %1554 = vmatpush1.msra.mxu0 0.0
        %1555 = vmatprep.mubr.f32.mxu0 0.0
        %1556 = vmatmul.mubr.f32.gmra.mrb[0].mxu0 %v1489
        %v1557 = vpop.f32.mrb[0].mxu0
        %v1558 = vadd.f32 0.0, %v1557
        %v1559 = vpop.f32.mrb[0].mxu0
        %1560 = vdwg.mxu0
        %1561 = vrot.lane.b32.xlu0 %v609, 64
        %v1562 = vpop.permute.xlu0 %1561
        %v1565 = vsel %vm638, %v1328, 0
        %1567 = vmatprep.subr.mxu0 0.0
        %1568 = vmatpush1.msra.mxu0 %v1562
        %1569 = vmatprep.subr.mxu0 0.0
        %1570 = vmatpush1.msra.mxu0 0.0
        %1571 = vmatprep.subr.mxu0 0.0
        %1572 = vmatpush1.msra.mxu0 0.0
        %1573 = vmatprep.subr.mxu0 0.0
        %1574 = vmatpush1.msra.mxu0 0.0
        %1575 = vmatprep.subr.mxu0 0.0
        %1576 = vmatpush1.msra.mxu0 0.0
        %1577 = vmatprep.subr.mxu0 0.0
        %1578 = vmatpush1.msra.mxu0 0.0
        %1579 = vmatprep.subr.mxu0 0.0
        %1580 = vmatpush1.msra.mxu0 0.0
        %1581 = vmatprep.subr.mxu0 0.0
        %1582 = vmatpush1.msra.mxu0 0.0
        %1583 = vmatprep.subr.mxu0 0.0
        %1584 = vmatpush1.msra.mxu0 0.0
        %1585 = vmatprep.subr.mxu0 0.0
        %1586 = vmatpush1.msra.mxu0 0.0
        %1587 = vmatprep.subr.mxu0 0.0
        %1588 = vmatpush1.msra.mxu0 0.0
        %1589 = vmatprep.subr.mxu0 0.0
        %1590 = vmatpush1.msra.mxu0 0.0
        %1591 = vmatprep.subr.mxu0 0.0
        %1592 = vmatpush1.msra.mxu0 0.0
        %1593 = vmatprep.subr.mxu0 0.0
        %1594 = vmatpush1.msra.mxu0 0.0
        %1595 = vmatprep.subr.mxu0 0.0
        %1596 = vmatpush1.msra.mxu0 0.0
        %1597 = vmatprep.subr.mxu0 0.0
        %1598 = vmatpush1.msra.mxu0 0.0
        %1599 = vmatprep.subr.mxu0 0.0
        %1600 = vmatpush1.msra.mxu0 0.0
        %1601 = vmatprep.subr.mxu0 0.0
        %1602 = vmatpush1.msra.mxu0 0.0
        %1603 = vmatprep.subr.mxu0 0.0
        %1604 = vmatpush1.msra.mxu0 0.0
        %1605 = vmatprep.subr.mxu0 0.0
        %1606 = vmatpush1.msra.mxu0 0.0
        %1607 = vmatprep.subr.mxu0 0.0
        %1608 = vmatpush1.msra.mxu0 0.0
        %1609 = vmatprep.subr.mxu0 0.0
        %1610 = vmatpush1.msra.mxu0 0.0
        %1611 = vmatprep.subr.mxu0 0.0
        %1612 = vmatpush1.msra.mxu0 0.0
        %1613 = vmatprep.subr.mxu0 0.0
        %1614 = vmatpush1.msra.mxu0 0.0
        %1615 = vmatprep.subr.mxu0 0.0
        %1616 = vmatpush1.msra.mxu0 0.0
        %1617 = vmatprep.subr.mxu0 0.0
        %1618 = vmatpush1.msra.mxu0 0.0
        %1619 = vmatprep.subr.mxu0 0.0
        %1620 = vmatpush1.msra.mxu0 0.0
        %1621 = vmatprep.subr.mxu0 0.0
        %1622 = vmatpush1.msra.mxu0 0.0
        %1623 = vmatprep.subr.mxu0 0.0
        %1624 = vmatpush1.msra.mxu0 0.0
        %1625 = vmatprep.subr.mxu0 0.0
        %1626 = vmatpush1.msra.mxu0 0.0
        %1627 = vmatprep.subr.mxu0 0.0
        %1628 = vmatpush1.msra.mxu0 0.0
        %1629 = vmatprep.subr.mxu0 0.0
        %1630 = vmatpush1.msra.mxu0 0.0
        %1631 = vmatprep.mubr.f32.mxu0 0.0
        %1632 = vmatmul.mubr.f32.gmra.mrb[0].mxu0 %v1565
        %v1633 = vpop.f32.mrb[0].mxu0
        %v1634 = vadd.f32 0.0, %v1633
        %v1635 = vpop.f32.mrb[0].mxu0
        %1636 = vdwg.mxu0
        %1637 = vrot.lane.b32.xlu0 %v611, 64
        %v1638 = vpop.permute.xlu0 %1637
        %v1641 = vsel %vm638, %v1329, 0
        %1643 = vmatprep.subr.mxu0 0.0
        %1644 = vmatpush1.msra.mxu0 %v1638
        %1645 = vmatprep.subr.mxu0 0.0
        %1646 = vmatpush1.msra.mxu0 0.0
        %1647 = vmatprep.subr.mxu0 0.0
        %1648 = vmatpush1.msra.mxu0 0.0
        %1649 = vmatprep.subr.mxu0 0.0
        %1650 = vmatpush1.msra.mxu0 0.0
        %1651 = vmatprep.subr.mxu0 0.0
        %1652 = vmatpush1.msra.mxu0 0.0
        %1653 = vmatprep.subr.mxu0 0.0
        %1654 = vmatpush1.msra.mxu0 0.0
        %1655 = vmatprep.subr.mxu0 0.0
        %1656 = vmatpush1.msra.mxu0 0.0
        %1657 = vmatprep.subr.mxu0 0.0
        %1658 = vmatpush1.msra.mxu0 0.0
        %1659 = vmatprep.subr.mxu0 0.0
        %1660 = vmatpush1.msra.mxu0 0.0
        %1661 = vmatprep.subr.mxu0 0.0
        %1662 = vmatpush1.msra.mxu0 0.0
        %1663 = vmatprep.subr.mxu0 0.0
        %1664 = vmatpush1.msra.mxu0 0.0
        %1665 = vmatprep.subr.mxu0 0.0
        %1666 = vmatpush1.msra.mxu0 0.0
        %1667 = vmatprep.subr.mxu0 0.0
        %1668 = vmatpush1.msra.mxu0 0.0
        %1669 = vmatprep.subr.mxu0 0.0
        %1670 = vmatpush1.msra.mxu0 0.0
        %1671 = vmatprep.subr.mxu0 0.0
        %1672 = vmatpush1.msra.mxu0 0.0
        %1673 = vmatprep.subr.mxu0 0.0
        %1674 = vmatpush1.msra.mxu0 0.0
        %1675 = vmatprep.subr.mxu0 0.0
        %1676 = vmatpush1.msra.mxu0 0.0
        %1677 = vmatprep.subr.mxu0 0.0
        %1678 = vmatpush1.msra.mxu0 0.0
        %1679 = vmatprep.subr.mxu0 0.0
        %1680 = vmatpush1.msra.mxu0 0.0
        %1681 = vmatprep.subr.mxu0 0.0
        %1682 = vmatpush1.msra.mxu0 0.0
        %1683 = vmatprep.subr.mxu0 0.0
        %1684 = vmatpush1.msra.mxu0 0.0
        %1685 = vmatprep.subr.mxu0 0.0
        %1686 = vmatpush1.msra.mxu0 0.0
        %1687 = vmatprep.subr.mxu0 0.0
        %1688 = vmatpush1.msra.mxu0 0.0
        %1689 = vmatprep.subr.mxu0 0.0
        %1690 = vmatpush1.msra.mxu0 0.0
        %1691 = vmatprep.subr.mxu0 0.0
        %1692 = vmatpush1.msra.mxu0 0.0
        %1693 = vmatprep.subr.mxu0 0.0
        %1694 = vmatpush1.msra.mxu0 0.0
        %1695 = vmatprep.subr.mxu0 0.0
        %1696 = vmatpush1.msra.mxu0 0.0
        %1697 = vmatprep.subr.mxu0 0.0
        %1698 = vmatpush1.msra.mxu0 0.0
        %1699 = vmatprep.subr.mxu0 0.0
        %1700 = vmatpush1.msra.mxu0 0.0
        %1701 = vmatprep.subr.mxu0 0.0
        %1702 = vmatpush1.msra.mxu0 0.0
        %1703 = vmatprep.subr.mxu0 0.0
        %1704 = vmatpush1.msra.mxu0 0.0
        %1705 = vmatprep.subr.mxu0 0.0
        %1706 = vmatpush1.msra.mxu0 0.0
        %1707 = vmatprep.mubr.f32.mxu0 0.0
        %1708 = vmatmul.mubr.f32.gmra.mrb[0].mxu0 %v1641
        %v1709 = vpop.f32.mrb[0].mxu0
        %v1710 = vadd.f32 0.0, %v1709
        %v1711 = vpop.f32.mrb[0].mxu0
        %1712 = vdwg.mxu0
        %1713 = vrot.lane.b32.xlu0 %v613, 64
        %v1714 = vpop.permute.xlu0 %1713
        %v1717 = vsel %vm638, %v1330, 0
        %1719 = vmatprep.subr.mxu0 0.0
        %1720 = vmatpush1.msra.mxu0 %v1714
        %1721 = vmatprep.subr.mxu0 0.0
        %1722 = vmatpush1.msra.mxu0 0.0
        %1723 = vmatprep.subr.mxu0 0.0
        %1724 = vmatpush1.msra.mxu0 0.0
        %1725 = vmatprep.subr.mxu0 0.0
        %1726 = vmatpush1.msra.mxu0 0.0
        %1727 = vmatprep.subr.mxu0 0.0
        %1728 = vmatpush1.msra.mxu0 0.0
        %1729 = vmatprep.subr.mxu0 0.0
        %1730 = vmatpush1.msra.mxu0 0.0
        %1731 = vmatprep.subr.mxu0 0.0
        %1732 = vmatpush1.msra.mxu0 0.0
        %1733 = vmatprep.subr.mxu0 0.0
        %1734 = vmatpush1.msra.mxu0 0.0
        %1735 = vmatprep.subr.mxu0 0.0
        %1736 = vmatpush1.msra.mxu0 0.0
        %1737 = vmatprep.subr.mxu0 0.0
        %1738 = vmatpush1.msra.mxu0 0.0
        %1739 = vmatprep.subr.mxu0 0.0
        %1740 = vmatpush1.msra.mxu0 0.0
        %1741 = vmatprep.subr.mxu0 0.0
        %1742 = vmatpush1.msra.mxu0 0.0
        %1743 = vmatprep.subr.mxu0 0.0
        %1744 = vmatpush1.msra.mxu0 0.0
        %1745 = vmatprep.subr.mxu0 0.0
        %1746 = vmatpush1.msra.mxu0 0.0
        %1747 = vmatprep.subr.mxu0 0.0
        %1748 = vmatpush1.msra.mxu0 0.0
        %1749 = vmatprep.subr.mxu0 0.0
        %1750 = vmatpush1.msra.mxu0 0.0
        %1751 = vmatprep.subr.mxu0 0.0
        %1752 = vmatpush1.msra.mxu0 0.0
        %1753 = vmatprep.subr.mxu0 0.0
        %1754 = vmatpush1.msra.mxu0 0.0
        %1755 = vmatprep.subr.mxu0 0.0
        %1756 = vmatpush1.msra.mxu0 0.0
        %1757 = vmatprep.subr.mxu0 0.0
        %1758 = vmatpush1.msra.mxu0 0.0
        %1759 = vmatprep.subr.mxu0 0.0
        %1760 = vmatpush1.msra.mxu0 0.0
        %1761 = vmatprep.subr.mxu0 0.0
        %1762 = vmatpush1.msra.mxu0 0.0
        %1763 = vmatprep.subr.mxu0 0.0
        %1764 = vmatpush1.msra.mxu0 0.0
        %1765 = vmatprep.subr.mxu0 0.0
        %1766 = vmatpush1.msra.mxu0 0.0
        %1767 = vmatprep.subr.mxu0 0.0
        %1768 = vmatpush1.msra.mxu0 0.0
        %1769 = vmatprep.subr.mxu0 0.0
        %1770 = vmatpush1.msra.mxu0 0.0
        %1771 = vmatprep.subr.mxu0 0.0
        %1772 = vmatpush1.msra.mxu0 0.0
        %1773 = vmatprep.subr.mxu0 0.0
        %1774 = vmatpush1.msra.mxu0 0.0
        %1775 = vmatprep.subr.mxu0 0.0
        %1776 = vmatpush1.msra.mxu0 0.0
        %1777 = vmatprep.subr.mxu0 0.0
        %1778 = vmatpush1.msra.mxu0 0.0
        %1779 = vmatprep.subr.mxu0 0.0
        %1780 = vmatpush1.msra.mxu0 0.0
        %1781 = vmatprep.subr.mxu0 0.0
        %1782 = vmatpush1.msra.mxu0 0.0
        %1783 = vmatprep.mubr.f32.mxu0 0.0
        %1784 = vmatmul.mubr.f32.gmra.mrb[0].mxu0 %v1717
        %v1785 = vpop.f32.mrb[0].mxu0
        %v1786 = vadd.f32 0.0, %v1785
        %v1787 = vpop.f32.mrb[0].mxu0
        %1788 = vdwg.mxu0
        %1789 = vrot.lane.b32.xlu0 %v615, 64
        %v1790 = vpop.permute.xlu0 %1789
        %v1793 = vsel %vm638, %v1331, 0
        %1795 = vmatprep.subr.mxu0 0.0
        %1796 = vmatpush1.msra.mxu0 %v1790
        %1797 = vmatprep.subr.mxu0 0.0
        %1798 = vmatpush1.msra.mxu0 0.0
        %1799 = vmatprep.subr.mxu0 0.0
        %1800 = vmatpush1.msra.mxu0 0.0
        %1801 = vmatprep.subr.mxu0 0.0
        %1802 = vmatpush1.msra.mxu0 0.0
        %1803 = vmatprep.subr.mxu0 0.0
        %1804 = vmatpush1.msra.mxu0 0.0
        %1805 = vmatprep.subr.mxu0 0.0
        %1806 = vmatpush1.msra.mxu0 0.0
        %1807 = vmatprep.subr.mxu0 0.0
        %1808 = vmatpush1.msra.mxu0 0.0
        %1809 = vmatprep.subr.mxu0 0.0
        %1810 = vmatpush1.msra.mxu0 0.0
        %1811 = vmatprep.subr.mxu0 0.0
        %1812 = vmatpush1.msra.mxu0 0.0
        %1813 = vmatprep.subr.mxu0 0.0
        %1814 = vmatpush1.msra.mxu0 0.0
        %1815 = vmatprep.subr.mxu0 0.0
        %1816 = vmatpush1.msra.mxu0 0.0
        %1817 = vmatprep.subr.mxu0 0.0
        %1818 = vmatpush1.msra.mxu0 0.0
        %1819 = vmatprep.subr.mxu0 0.0
        %1820 = vmatpush1.msra.mxu0 0.0
        %1821 = vmatprep.subr.mxu0 0.0
        %1822 = vmatpush1.msra.mxu0 0.0
        %1823 = vmatprep.subr.mxu0 0.0
        %1824 = vmatpush1.msra.mxu0 0.0
        %1825 = vmatprep.subr.mxu0 0.0
        %1826 = vmatpush1.msra.mxu0 0.0
        %1827 = vmatprep.subr.mxu0 0.0
        %1828 = vmatpush1.msra.mxu0 0.0
        %1829 = vmatprep.subr.mxu0 0.0
        %1830 = vmatpush1.msra.mxu0 0.0
        %1831 = vmatprep.subr.mxu0 0.0
        %1832 = vmatpush1.msra.mxu0 0.0
        %1833 = vmatprep.subr.mxu0 0.0
        %1834 = vmatpush1.msra.mxu0 0.0
        %1835 = vmatprep.subr.mxu0 0.0
        %1836 = vmatpush1.msra.mxu0 0.0
        %1837 = vmatprep.subr.mxu0 0.0
        %1838 = vmatpush1.msra.mxu0 0.0
        %1839 = vmatprep.subr.mxu0 0.0
        %1840 = vmatpush1.msra.mxu0 0.0
        %1841 = vmatprep.subr.mxu0 0.0
        %1842 = vmatpush1.msra.mxu0 0.0
        %1843 = vmatprep.subr.mxu0 0.0
        %1844 = vmatpush1.msra.mxu0 0.0
        %1845 = vmatprep.subr.mxu0 0.0
        %1846 = vmatpush1.msra.mxu0 0.0
        %1847 = vmatprep.subr.mxu0 0.0
        %1848 = vmatpush1.msra.mxu0 0.0
        %1849 = vmatprep.subr.mxu0 0.0
        %1850 = vmatpush1.msra.mxu0 0.0
        %1851 = vmatprep.subr.mxu0 0.0
        %1852 = vmatpush1.msra.mxu0 0.0
        %1853 = vmatprep.subr.mxu0 0.0
        %1854 = vmatpush1.msra.mxu0 0.0
        %1855 = vmatprep.subr.mxu0 0.0
        %1856 = vmatpush1.msra.mxu0 0.0
        %1857 = vmatprep.subr.mxu0 0.0
        %1858 = vmatpush1.msra.mxu0 0.0
        %1859 = vmatprep.mubr.f32.mxu0 0.0
        %1860 = vmatmul.mubr.f32.gmra.mrb[0].mxu0 %v1793
        %v1861 = vpop.f32.mrb[0].mxu0
        %v1862 = vadd.f32 0.0, %v1861
        %v1863 = vpop.f32.mrb[0].mxu0
        %1864 = vdwg.mxu0
        %1865 = vrot.lane.b32.xlu0 %v617, 64
        %v1866 = vpop.permute.xlu0 %1865
        %v1869 = vsel %vm638, %v1332, 0
        %1871 = vmatprep.subr.mxu0 0.0
        %1872 = vmatpush1.msra.mxu0 %v1866
        %1873 = vmatprep.subr.mxu0 0.0
        %1874 = vmatpush1.msra.mxu0 0.0
        %1875 = vmatprep.subr.mxu0 0.0
        %1876 = vmatpush1.msra.mxu0 0.0
        %1877 = vmatprep.subr.mxu0 0.0
        %1878 = vmatpush1.msra.mxu0 0.0
        %1879 = vmatprep.subr.mxu0 0.0
        %1880 = vmatpush1.msra.mxu0 0.0
        %1881 = vmatprep.subr.mxu0 0.0
        %1882 = vmatpush1.msra.mxu0 0.0
        %1883 = vmatprep.subr.mxu0 0.0
        %1884 = vmatpush1.msra.mxu0 0.0
        %1885 = vmatprep.subr.mxu0 0.0
        %1886 = vmatpush1.msra.mxu0 0.0
        %1887 = vmatprep.subr.mxu0 0.0
        %1888 = vmatpush1.msra.mxu0 0.0
        %1889 = vmatprep.subr.mxu0 0.0
        %1890 = vmatpush1.msra.mxu0 0.0
        %1891 = vmatprep.subr.mxu0 0.0
        %1892 = vmatpush1.msra.mxu0 0.0
        %1893 = vmatprep.subr.mxu0 0.0
        %1894 = vmatpush1.msra.mxu0 0.0
        %1895 = vmatprep.subr.mxu0 0.0
        %1896 = vmatpush1.msra.mxu0 0.0
        %1897 = vmatprep.subr.mxu0 0.0
        %1898 = vmatpush1.msra.mxu0 0.0
        %1899 = vmatprep.subr.mxu0 0.0
        %1900 = vmatpush1.msra.mxu0 0.0
        %1901 = vmatprep.subr.mxu0 0.0
        %1902 = vmatpush1.msra.mxu0 0.0
        %1903 = vmatprep.subr.mxu0 0.0
        %1904 = vmatpush1.msra.mxu0 0.0
        %1905 = vmatprep.subr.mxu0 0.0
        %1906 = vmatpush1.msra.mxu0 0.0
        %1907 = vmatprep.subr.mxu0 0.0
        %1908 = vmatpush1.msra.mxu0 0.0
        %1909 = vmatprep.subr.mxu0 0.0
        %1910 = vmatpush1.msra.mxu0 0.0
        %1911 = vmatprep.subr.mxu0 0.0
        %1912 = vmatpush1.msra.mxu0 0.0
        %1913 = vmatprep.subr.mxu0 0.0
        %1914 = vmatpush1.msra.mxu0 0.0
        %1915 = vmatprep.subr.mxu0 0.0
        %1916 = vmatpush1.msra.mxu0 0.0
        %1917 = vmatprep.subr.mxu0 0.0
        %1918 = vmatpush1.msra.mxu0 0.0
        %1919 = vmatprep.subr.mxu0 0.0
        %1920 = vmatpush1.msra.mxu0 0.0
        %1921 = vmatprep.subr.mxu0 0.0
        %1922 = vmatpush1.msra.mxu0 0.0
        %1923 = vmatprep.subr.mxu0 0.0
        %1924 = vmatpush1.msra.mxu0 0.0
        %1925 = vmatprep.subr.mxu0 0.0
        %1926 = vmatpush1.msra.mxu0 0.0
        %1927 = vmatprep.subr.mxu0 0.0
        %1928 = vmatpush1.msra.mxu0 0.0
        %1929 = vmatprep.subr.mxu0 0.0
        %1930 = vmatpush1.msra.mxu0 0.0
        %1931 = vmatprep.subr.mxu0 0.0
        %1932 = vmatpush1.msra.mxu0 0.0
        %1933 = vmatprep.subr.mxu0 0.0
        %1934 = vmatpush1.msra.mxu0 0.0
        %1935 = vmatprep.mubr.f32.mxu0 0.0
        %1936 = vmatmul.mubr.f32.gmra.mrb[0].mxu0 %v1869
        %v1937 = vpop.f32.mrb[0].mxu0
        %v1938 = vadd.f32 0.0, %v1937
        %v1939 = vpop.f32.mrb[0].mxu0
        %1940 = vdwg.mxu0
        %v1941 = vld [vmem:[%s4] sm:$0xff]
        %v1942 = vld [vmem:[%s4 + $0x8] sm:$0xff]
        %v1943 = vld [vmem:[%s4 + $0x10] sm:$0xff]
        %v1944 = vld [vmem:[%s4 + $0x18] sm:$0xff]
        %v1946 = vsel %vm638, %v1406, 0
        %1948 = vmatprep.subr.mxu0 0.0
        %1949 = vmatpush1.msra.mxu0 %v1941
        %1950 = vmatprep.subr.mxu0 0.0
        %1951 = vmatpush1.msra.mxu0 0.0
        %1952 = vmatprep.subr.mxu0 0.0
        %1953 = vmatpush1.msra.mxu0 0.0
        %1954 = vmatprep.subr.mxu0 0.0
        %1955 = vmatpush1.msra.mxu0 0.0
        %1956 = vmatprep.subr.mxu0 0.0
        %1957 = vmatpush1.msra.mxu0 0.0
        %1958 = vmatprep.subr.mxu0 0.0
        %1959 = vmatpush1.msra.mxu0 0.0
        %1960 = vmatprep.subr.mxu0 0.0
        %1961 = vmatpush1.msra.mxu0 0.0
        %1962 = vmatprep.subr.mxu0 0.0
        %1963 = vmatpush1.msra.mxu0 0.0
        %1964 = vmatprep.subr.mxu0 0.0
        %1965 = vmatpush1.msra.mxu0 0.0
        %1966 = vmatprep.subr.mxu0 0.0
        %1967 = vmatpush1.msra.mxu0 0.0
        %1968 = vmatprep.subr.mxu0 0.0
        %1969 = vmatpush1.msra.mxu0 0.0
        %1970 = vmatprep.subr.mxu0 0.0
        %1971 = vmatpush1.msra.mxu0 0.0
        %1972 = vmatprep.subr.mxu0 0.0
        %1973 = vmatpush1.msra.mxu0 0.0
        %1974 = vmatprep.subr.mxu0 0.0
        %1975 = vmatpush1.msra.mxu0 0.0
        %1976 = vmatprep.subr.mxu0 0.0
        %1977 = vmatpush1.msra.mxu0 0.0
        %1978 = vmatprep.subr.mxu0 0.0
        %1979 = vmatpush1.msra.mxu0 0.0
        %1980 = vmatprep.subr.mxu0 0.0
        %1981 = vmatpush1.msra.mxu0 0.0
        %1982 = vmatprep.subr.mxu0 0.0
        %1983 = vmatpush1.msra.mxu0 0.0
        %1984 = vmatprep.subr.mxu0 0.0
        %1985 = vmatpush1.msra.mxu0 0.0
        %1986 = vmatprep.subr.mxu0 0.0
        %1987 = vmatpush1.msra.mxu0 0.0
        %1988 = vmatprep.subr.mxu0 0.0
        %1989 = vmatpush1.msra.mxu0 0.0
        %1990 = vmatprep.subr.mxu0 0.0
        %1991 = vmatpush1.msra.mxu0 0.0
        %1992 = vmatprep.subr.mxu0 0.0
        %1993 = vmatpush1.msra.mxu0 0.0
        %1994 = vmatprep.subr.mxu0 0.0
        %1995 = vmatpush1.msra.mxu0 0.0
        %1996 = vmatprep.subr.mxu0 0.0
        %1997 = vmatpush1.msra.mxu0 0.0
        %1998 = vmatprep.subr.mxu0 0.0
        %1999 = vmatpush1.msra.mxu0 0.0
        %2000 = vmatprep.subr.mxu0 0.0
        %2001 = vmatpush1.msra.mxu0 0.0
        %2002 = vmatprep.subr.mxu0 0.0
        %2003 = vmatpush1.msra.mxu0 0.0
        %2004 = vmatprep.subr.mxu0 0.0
        %2005 = vmatpush1.msra.mxu0 0.0
        %2006 = vmatprep.subr.mxu0 0.0
        %2007 = vmatpush1.msra.mxu0 0.0
        %2008 = vmatprep.subr.mxu0 0.0
        %2009 = vmatpush1.msra.mxu0 0.0
        %2010 = vmatprep.subr.mxu0 0.0
        %2011 = vmatpush1.msra.mxu0 0.0
        %2012 = vmatprep.mubr.f32.mxu0 0.0
        %2013 = vmatmul.mubr.f32.gmra.mrb[0].mxu0 %v1946
        %v2014 = vpop.f32.mrb[0].mxu0
        %v2015 = vadd.f32 0.0, %v2014
        %v2016 = vpop.f32.mrb[0].mxu0
        %2017 = vdwg.mxu0
        %v2019 = vsel %vm638, %v1482, 0
        %2021 = vmatprep.subr.mxu0 0.0
        %2022 = vmatpush1.msra.mxu0 %v1941
        %2023 = vmatprep.subr.mxu0 0.0
        %2024 = vmatpush1.msra.mxu0 0.0
        %2025 = vmatprep.subr.mxu0 0.0
        %2026 = vmatpush1.msra.mxu0 0.0
        %2027 = vmatprep.subr.mxu0 0.0
        %2028 = vmatpush1.msra.mxu0 0.0
        %2029 = vmatprep.subr.mxu0 0.0
        %2030 = vmatpush1.msra.mxu0 0.0
        %2031 = vmatprep.subr.mxu0 0.0
        %2032 = vmatpush1.msra.mxu0 0.0
        %2033 = vmatprep.subr.mxu0 0.0
        %2034 = vmatpush1.msra.mxu0 0.0
        %2035 = vmatprep.subr.mxu0 0.0
        %2036 = vmatpush1.msra.mxu0 0.0
        %2037 = vmatprep.subr.mxu0 0.0
        %2038 = vmatpush1.msra.mxu0 0.0
        %2039 = vmatprep.subr.mxu0 0.0
        %2040 = vmatpush1.msra.mxu0 0.0
        %2041 = vmatprep.subr.mxu0 0.0
        %2042 = vmatpush1.msra.mxu0 0.0
        %2043 = vmatprep.subr.mxu0 0.0
        %2044 = vmatpush1.msra.mxu0 0.0
        %2045 = vmatprep.subr.mxu0 0.0
        %2046 = vmatpush1.msra.mxu0 0.0
        %2047 = vmatprep.subr.mxu0 0.0
        %2048 = vmatpush1.msra.mxu0 0.0
        %2049 = vmatprep.subr.mxu0 0.0
        %2050 = vmatpush1.msra.mxu0 0.0
        %2051 = vmatprep.subr.mxu0 0.0
        %2052 = vmatpush1.msra.mxu0 0.0
        %2053 = vmatprep.subr.mxu0 0.0
        %2054 = vmatpush1.msra.mxu0 0.0
        %2055 = vmatprep.subr.mxu0 0.0
        %2056 = vmatpush1.msra.mxu0 0.0
        %2057 = vmatprep.subr.mxu0 0.0
        %2058 = vmatpush1.msra.mxu0 0.0
        %2059 = vmatprep.subr.mxu0 0.0
        %2060 = vmatpush1.msra.mxu0 0.0
        %2061 = vmatprep.subr.mxu0 0.0
        %2062 = vmatpush1.msra.mxu0 0.0
        %2063 = vmatprep.subr.mxu0 0.0
        %2064 = vmatpush1.msra.mxu0 0.0
        %2065 = vmatprep.subr.mxu0 0.0
        %2066 = vmatpush1.msra.mxu0 0.0
        %2067 = vmatprep.subr.mxu0 0.0
        %2068 = vmatpush1.msra.mxu0 0.0
        %2069 = vmatprep.subr.mxu0 0.0
        %2070 = vmatpush1.msra.mxu0 0.0
        %2071 = vmatprep.subr.mxu0 0.0
        %2072 = vmatpush1.msra.mxu0 0.0
        %2073 = vmatprep.subr.mxu0 0.0
        %2074 = vmatpush1.msra.mxu0 0.0
        %2075 = vmatprep.subr.mxu0 0.0
        %2076 = vmatpush1.msra.mxu0 0.0
        %2077 = vmatprep.subr.mxu0 0.0
        %2078 = vmatpush1.msra.mxu0 0.0
        %2079 = vmatprep.subr.mxu0 0.0
        %2080 = vmatpush1.msra.mxu0 0.0
        %2081 = vmatprep.subr.mxu0 0.0
        %2082 = vmatpush1.msra.mxu0 0.0
        %2083 = vmatprep.subr.mxu0 0.0
        %2084 = vmatpush1.msra.mxu0 0.0
        %2085 = vmatprep.mubr.f32.mxu0 0.0
        %2086 = vmatmul.mubr.f32.gmra.mrb[0].mxu0 %v2019
        %v2087 = vpop.f32.mrb[0].mxu0
        %v2088 = vadd.f32 0.0, %v2087
        %v2089 = vpop.f32.mrb[0].mxu0
        %2090 = vdwg.mxu0
        %v2092 = vsel %vm638, %v1558, 0
        %2094 = vmatprep.subr.mxu0 0.0
        %2095 = vmatpush1.msra.mxu0 %v1942
        %2096 = vmatprep.subr.mxu0 0.0
        %2097 = vmatpush1.msra.mxu0 0.0
        %2098 = vmatprep.subr.mxu0 0.0
        %2099 = vmatpush1.msra.mxu0 0.0
        %2100 = vmatprep.subr.mxu0 0.0
        %2101 = vmatpush1.msra.mxu0 0.0
        %2102 = vmatprep.subr.mxu0 0.0
        %2103 = vmatpush1.msra.mxu0 0.0
        %2104 = vmatprep.subr.mxu0 0.0
        %2105 = vmatpush1.msra.mxu0 0.0
        %2106 = vmatprep.subr.mxu0 0.0
        %2107 = vmatpush1.msra.mxu0 0.0
        %2108 = vmatprep.subr.mxu0 0.0
        %2109 = vmatpush1.msra.mxu0 0.0
        %2110 = vmatprep.subr.mxu0 0.0
        %2111 = vmatpush1.msra.mxu0 0.0
        %2112 = vmatprep.subr.mxu0 0.0
        %2113 = vmatpush1.msra.mxu0 0.0
        %2114 = vmatprep.subr.mxu0 0.0
        %2115 = vmatpush1.msra.mxu0 0.0
        %2116 = vmatprep.subr.mxu0 0.0
        %2117 = vmatpush1.msra.mxu0 0.0
        %2118 = vmatprep.subr.mxu0 0.0
        %2119 = vmatpush1.msra.mxu0 0.0
        %2120 = vmatprep.subr.mxu0 0.0
        %2121 = vmatpush1.msra.mxu0 0.0
        %2122 = vmatprep.subr.mxu0 0.0
        %2123 = vmatpush1.msra.mxu0 0.0
        %2124 = vmatprep.subr.mxu0 0.0
        %2125 = vmatpush1.msra.mxu0 0.0
        %2126 = vmatprep.subr.mxu0 0.0
        %2127 = vmatpush1.msra.mxu0 0.0
        %2128 = vmatprep.subr.mxu0 0.0
        %2129 = vmatpush1.msra.mxu0 0.0
        %2130 = vmatprep.subr.mxu0 0.0
        %2131 = vmatpush1.msra.mxu0 0.0
        %2132 = vmatprep.subr.mxu0 0.0
        %2133 = vmatpush1.msra.mxu0 0.0
        %2134 = vmatprep.subr.mxu0 0.0
        %2135 = vmatpush1.msra.mxu0 0.0
        %2136 = vmatprep.subr.mxu0 0.0
        %2137 = vmatpush1.msra.mxu0 0.0
        %2138 = vmatprep.subr.mxu0 0.0
        %2139 = vmatpush1.msra.mxu0 0.0
        %2140 = vmatprep.subr.mxu0 0.0
        %2141 = vmatpush1.msra.mxu0 0.0
        %2142 = vmatprep.subr.mxu0 0.0
        %2143 = vmatpush1.msra.mxu0 0.0
        %2144 = vmatprep.subr.mxu0 0.0
        %2145 = vmatpush1.msra.mxu0 0.0
        %2146 = vmatprep.subr.mxu0 0.0
        %2147 = vmatpush1.msra.mxu0 0.0
        %2148 = vmatprep.subr.mxu0 0.0
        %2149 = vmatpush1.msra.mxu0 0.0
        %2150 = vmatprep.subr.mxu0 0.0
        %2151 = vmatpush1.msra.mxu0 0.0
        %2152 = vmatprep.subr.mxu0 0.0
        %2153 = vmatpush1.msra.mxu0 0.0
        %2154 = vmatprep.subr.mxu0 0.0
        %2155 = vmatpush1.msra.mxu0 0.0
        %2156 = vmatprep.subr.mxu0 0.0
        %2157 = vmatpush1.msra.mxu0 0.0
        %2158 = vmatprep.mubr.f32.mxu0 0.0
        %2159 = vmatmul.mubr.f32.gmra.mrb[0].mxu0 %v2092
        %v2160 = vpop.f32.mrb[0].mxu0
        %v2161 = vadd.f32 0.0, %v2160
        %v2162 = vpop.f32.mrb[0].mxu0
        %2163 = vdwg.mxu0
        %v2165 = vsel %vm638, %v1634, 0
        %2167 = vmatprep.subr.mxu0 0.0
        %2168 = vmatpush1.msra.mxu0 %v1942
        %2169 = vmatprep.subr.mxu0 0.0
        %2170 = vmatpush1.msra.mxu0 0.0
        %2171 = vmatprep.subr.mxu0 0.0
        %2172 = vmatpush1.msra.mxu0 0.0
        %2173 = vmatprep.subr.mxu0 0.0
        %2174 = vmatpush1.msra.mxu0 0.0
        %2175 = vmatprep.subr.mxu0 0.0
        %2176 = vmatpush1.msra.mxu0 0.0
        %2177 = vmatprep.subr.mxu0 0.0
        %2178 = vmatpush1.msra.mxu0 0.0
        %2179 = vmatprep.subr.mxu0 0.0
        %2180 = vmatpush1.msra.mxu0 0.0
        %2181 = vmatprep.subr.mxu0 0.0
        %2182 = vmatpush1.msra.mxu0 0.0
        %2183 = vmatprep.subr.mxu0 0.0
        %2184 = vmatpush1.msra.mxu0 0.0
        %2185 = vmatprep.subr.mxu0 0.0
        %2186 = vmatpush1.msra.mxu0 0.0
        %2187 = vmatprep.subr.mxu0 0.0
        %2188 = vmatpush1.msra.mxu0 0.0
        %2189 = vmatprep.subr.mxu0 0.0
        %2190 = vmatpush1.msra.mxu0 0.0
        %2191 = vmatprep.subr.mxu0 0.0
        %2192 = vmatpush1.msra.mxu0 0.0
        %2193 = vmatprep.subr.mxu0 0.0
        %2194 = vmatpush1.msra.mxu0 0.0
        %2195 = vmatprep.subr.mxu0 0.0
        %2196 = vmatpush1.msra.mxu0 0.0
        %2197 = vmatprep.subr.mxu0 0.0
        %2198 = vmatpush1.msra.mxu0 0.0
        %2199 = vmatprep.subr.mxu0 0.0
        %2200 = vmatpush1.msra.mxu0 0.0
        %2201 = vmatprep.subr.mxu0 0.0
        %2202 = vmatpush1.msra.mxu0 0.0
        %2203 = vmatprep.subr.mxu0 0.0
        %2204 = vmatpush1.msra.mxu0 0.0
        %2205 = vmatprep.subr.mxu0 0.0
        %2206 = vmatpush1.msra.mxu0 0.0
        %2207 = vmatprep.subr.mxu0 0.0
        %2208 = vmatpush1.msra.mxu0 0.0
        %2209 = vmatprep.subr.mxu0 0.0
        %2210 = vmatpush1.msra.mxu0 0.0
        %2211 = vmatprep.subr.mxu0 0.0
        %2212 = vmatpush1.msra.mxu0 0.0
        %2213 = vmatprep.subr.mxu0 0.0
        %2214 = vmatpush1.msra.mxu0 0.0
        %2215 = vmatprep.subr.mxu0 0.0
        %2216 = vmatpush1.msra.mxu0 0.0
        %2217 = vmatprep.subr.mxu0 0.0
        %2218 = vmatpush1.msra.mxu0 0.0
        %2219 = vmatprep.subr.mxu0 0.0
        %2220 = vmatpush1.msra.mxu0 0.0
        %2221 = vmatprep.subr.mxu0 0.0
        %2222 = vmatpush1.msra.mxu0 0.0
        %2223 = vmatprep.subr.mxu0 0.0
        %2224 = vmatpush1.msra.mxu0 0.0
        %2225 = vmatprep.subr.mxu0 0.0
        %2226 = vmatpush1.msra.mxu0 0.0
        %2227 = vmatprep.subr.mxu0 0.0
        %2228 = vmatpush1.msra.mxu0 0.0
        %2229 = vmatprep.subr.mxu0 0.0
        %2230 = vmatpush1.msra.mxu0 0.0
        %2231 = vmatprep.mubr.f32.mxu0 0.0
        %2232 = vmatmul.mubr.f32.gmra.mrb[0].mxu0 %v2165
        %v2233 = vpop.f32.mrb[0].mxu0
        %v2234 = vadd.f32 0.0, %v2233
        %v2235 = vpop.f32.mrb[0].mxu0
        %2236 = vdwg.mxu0
        %v2238 = vsel %vm638, %v1710, 0
        %2240 = vmatprep.subr.mxu0 0.0
        %2241 = vmatpush1.msra.mxu0 %v1943
        %2242 = vmatprep.subr.mxu0 0.0
        %2243 = vmatpush1.msra.mxu0 0.0
        %2244 = vmatprep.subr.mxu0 0.0
        %2245 = vmatpush1.msra.mxu0 0.0
        %2246 = vmatprep.subr.mxu0 0.0
        %2247 = vmatpush1.msra.mxu0 0.0
        %2248 = vmatprep.subr.mxu0 0.0
        %2249 = vmatpush1.msra.mxu0 0.0
        %2250 = vmatprep.subr.mxu0 0.0
        %2251 = vmatpush1.msra.mxu0 0.0
        %2252 = vmatprep.subr.mxu0 0.0
        %2253 = vmatpush1.msra.mxu0 0.0
        %2254 = vmatprep.subr.mxu0 0.0
        %2255 = vmatpush1.msra.mxu0 0.0
        %2256 = vmatprep.subr.mxu0 0.0
        %2257 = vmatpush1.msra.mxu0 0.0
        %2258 = vmatprep.subr.mxu0 0.0
        %2259 = vmatpush1.msra.mxu0 0.0
        %2260 = vmatprep.subr.mxu0 0.0
        %2261 = vmatpush1.msra.mxu0 0.0
        %2262 = vmatprep.subr.mxu0 0.0
        %2263 = vmatpush1.msra.mxu0 0.0
        %2264 = vmatprep.subr.mxu0 0.0
        %2265 = vmatpush1.msra.mxu0 0.0
        %2266 = vmatprep.subr.mxu0 0.0
        %2267 = vmatpush1.msra.mxu0 0.0
        %2268 = vmatprep.subr.mxu0 0.0
        %2269 = vmatpush1.msra.mxu0 0.0
        %2270 = vmatprep.subr.mxu0 0.0
        %2271 = vmatpush1.msra.mxu0 0.0
        %2272 = vmatprep.subr.mxu0 0.0
        %2273 = vmatpush1.msra.mxu0 0.0
        %2274 = vmatprep.subr.mxu0 0.0
        %2275 = vmatpush1.msra.mxu0 0.0
        %2276 = vmatprep.subr.mxu0 0.0
        %2277 = vmatpush1.msra.mxu0 0.0
        %2278 = vmatprep.subr.mxu0 0.0
        %2279 = vmatpush1.msra.mxu0 0.0
        %2280 = vmatprep.subr.mxu0 0.0
        %2281 = vmatpush1.msra.mxu0 0.0
        %2282 = vmatprep.subr.mxu0 0.0
        %2283 = vmatpush1.msra.mxu0 0.0
        %2284 = vmatprep.subr.mxu0 0.0
        %2285 = vmatpush1.msra.mxu0 0.0
        %2286 = vmatprep.subr.mxu0 0.0
        %2287 = vmatpush1.msra.mxu0 0.0
        %2288 = vmatprep.subr.mxu0 0.0
        %2289 = vmatpush1.msra.mxu0 0.0
        %2290 = vmatprep.subr.mxu0 0.0
        %2291 = vmatpush1.msra.mxu0 0.0
        %2292 = vmatprep.subr.mxu0 0.0
        %2293 = vmatpush1.msra.mxu0 0.0
        %2294 = vmatprep.subr.mxu0 0.0
        %2295 = vmatpush1.msra.mxu0 0.0
        %2296 = vmatprep.subr.mxu0 0.0
        %2297 = vmatpush1.msra.mxu0 0.0
        %2298 = vmatprep.subr.mxu0 0.0
        %2299 = vmatpush1.msra.mxu0 0.0
        %2300 = vmatprep.subr.mxu0 0.0
        %2301 = vmatpush1.msra.mxu0 0.0
        %2302 = vmatprep.subr.mxu0 0.0
        %2303 = vmatpush1.msra.mxu0 0.0
        %2304 = vmatprep.mubr.f32.mxu0 0.0
        %2305 = vmatmul.mubr.f32.gmra.mrb[0].mxu0 %v2238
        %v2306 = vpop.f32.mrb[0].mxu0
        %v2307 = vadd.f32 0.0, %v2306
        %v2308 = vpop.f32.mrb[0].mxu0
        %2309 = vdwg.mxu0
        %v2311 = vsel %vm638, %v1786, 0
        %2313 = vmatprep.subr.mxu0 0.0
        %2314 = vmatpush1.msra.mxu0 %v1943
        %2315 = vmatprep.subr.mxu0 0.0
        %2316 = vmatpush1.msra.mxu0 0.0
        %2317 = vmatprep.subr.mxu0 0.0
        %2318 = vmatpush1.msra.mxu0 0.0
        %2319 = vmatprep.subr.mxu0 0.0
        %2320 = vmatpush1.msra.mxu0 0.0
        %2321 = vmatprep.subr.mxu0 0.0
        %2322 = vmatpush1.msra.mxu0 0.0
        %2323 = vmatprep.subr.mxu0 0.0
        %2324 = vmatpush1.msra.mxu0 0.0
        %2325 = vmatprep.subr.mxu0 0.0
        %2326 = vmatpush1.msra.mxu0 0.0
        %2327 = vmatprep.subr.mxu0 0.0
        %2328 = vmatpush1.msra.mxu0 0.0
        %2329 = vmatprep.subr.mxu0 0.0
        %2330 = vmatpush1.msra.mxu0 0.0
        %2331 = vmatprep.subr.mxu0 0.0
        %2332 = vmatpush1.msra.mxu0 0.0
        %2333 = vmatprep.subr.mxu0 0.0
        %2334 = vmatpush1.msra.mxu0 0.0
        %2335 = vmatprep.subr.mxu0 0.0
        %2336 = vmatpush1.msra.mxu0 0.0
        %2337 = vmatprep.subr.mxu0 0.0
        %2338 = vmatpush1.msra.mxu0 0.0
        %2339 = vmatprep.subr.mxu0 0.0
        %2340 = vmatpush1.msra.mxu0 0.0
        %2341 = vmatprep.subr.mxu0 0.0
        %2342 = vmatpush1.msra.mxu0 0.0
        %2343 = vmatprep.subr.mxu0 0.0
        %2344 = vmatpush1.msra.mxu0 0.0
        %2345 = vmatprep.subr.mxu0 0.0
        %2346 = vmatpush1.msra.mxu0 0.0
        %2347 = vmatprep.subr.mxu0 0.0
        %2348 = vmatpush1.msra.mxu0 0.0
        %2349 = vmatprep.subr.mxu0 0.0
        %2350 = vmatpush1.msra.mxu0 0.0
        %2351 = vmatprep.subr.mxu0 0.0
        %2352 = vmatpush1.msra.mxu0 0.0
        %2353 = vmatprep.subr.mxu0 0.0
        %2354 = vmatpush1.msra.mxu0 0.0
        %2355 = vmatprep.subr.mxu0 0.0
        %2356 = vmatpush1.msra.mxu0 0.0
        %2357 = vmatprep.subr.mxu0 0.0
        %2358 = vmatpush1.msra.mxu0 0.0
        %2359 = vmatprep.subr.mxu0 0.0
        %2360 = vmatpush1.msra.mxu0 0.0
        %2361 = vmatprep.subr.mxu0 0.0
        %2362 = vmatpush1.msra.mxu0 0.0
        %2363 = vmatprep.subr.mxu0 0.0
        %2364 = vmatpush1.msra.mxu0 0.0
        %2365 = vmatprep.subr.mxu0 0.0
        %2366 = vmatpush1.msra.mxu0 0.0
        %2367 = vmatprep.subr.mxu0 0.0
        %2368 = vmatpush1.msra.mxu0 0.0
        %2369 = vmatprep.subr.mxu0 0.0
        %2370 = vmatpush1.msra.mxu0 0.0
        %2371 = vmatprep.subr.mxu0 0.0
        %2372 = vmatpush1.msra.mxu0 0.0
        %2373 = vmatprep.subr.mxu0 0.0
        %2374 = vmatpush1.msra.mxu0 0.0
        %2375 = vmatprep.subr.mxu0 0.0
        %2376 = vmatpush1.msra.mxu0 0.0
        %2377 = vmatprep.mubr.f32.mxu0 0.0
        %2378 = vmatmul.mubr.f32.gmra.mrb[0].mxu0 %v2311
        %v2379 = vpop.f32.mrb[0].mxu0
        %v2380 = vadd.f32 0.0, %v2379
        %v2381 = vpop.f32.mrb[0].mxu0
        %2382 = vdwg.mxu0
        %v2384 = vsel %vm638, %v1862, 0
        %2386 = vmatprep.subr.mxu0 0.0
        %2387 = vmatpush1.msra.mxu0 %v1944
        %2388 = vmatprep.subr.mxu0 0.0
        %2389 = vmatpush1.msra.mxu0 0.0
        %2390 = vmatprep.subr.mxu0 0.0
        %2391 = vmatpush1.msra.mxu0 0.0
        %2392 = vmatprep.subr.mxu0 0.0
        %2393 = vmatpush1.msra.mxu0 0.0
        %2394 = vmatprep.subr.mxu0 0.0
        %2395 = vmatpush1.msra.mxu0 0.0
        %2396 = vmatprep.subr.mxu0 0.0
        %2397 = vmatpush1.msra.mxu0 0.0
        %2398 = vmatprep.subr.mxu0 0.0
        %2399 = vmatpush1.msra.mxu0 0.0
        %2400 = vmatprep.subr.mxu0 0.0
        %2401 = vmatpush1.msra.mxu0 0.0
        %2402 = vmatprep.subr.mxu0 0.0
        %2403 = vmatpush1.msra.mxu0 0.0
        %2404 = vmatprep.subr.mxu0 0.0
        %2405 = vmatpush1.msra.mxu0 0.0
        %2406 = vmatprep.subr.mxu0 0.0
        %2407 = vmatpush1.msra.mxu0 0.0
        %2408 = vmatprep.subr.mxu0 0.0
        %2409 = vmatpush1.msra.mxu0 0.0
        %2410 = vmatprep.subr.mxu0 0.0
        %2411 = vmatpush1.msra.mxu0 0.0
        %2412 = vmatprep.subr.mxu0 0.0
        %2413 = vmatpush1.msra.mxu0 0.0
        %2414 = vmatprep.subr.mxu0 0.0
        %2415 = vmatpush1.msra.mxu0 0.0
        %2416 = vmatprep.subr.mxu0 0.0
        %2417 = vmatpush1.msra.mxu0 0.0
        %2418 = vmatprep.subr.mxu0 0.0
        %2419 = vmatpush1.msra.mxu0 0.0
        %2420 = vmatprep.subr.mxu0 0.0
        %2421 = vmatpush1.msra.mxu0 0.0
        %2422 = vmatprep.subr.mxu0 0.0
        %2423 = vmatpush1.msra.mxu0 0.0
        %2424 = vmatprep.subr.mxu0 0.0
        %2425 = vmatpush1.msra.mxu0 0.0
        %2426 = vmatprep.subr.mxu0 0.0
        %2427 = vmatpush1.msra.mxu0 0.0
        %2428 = vmatprep.subr.mxu0 0.0
        %2429 = vmatpush1.msra.mxu0 0.0
        %2430 = vmatprep.subr.mxu0 0.0
        %2431 = vmatpush1.msra.mxu0 0.0
        %2432 = vmatprep.subr.mxu0 0.0
        %2433 = vmatpush1.msra.mxu0 0.0
        %2434 = vmatprep.subr.mxu0 0.0
        %2435 = vmatpush1.msra.mxu0 0.0
        %2436 = vmatprep.subr.mxu0 0.0
        %2437 = vmatpush1.msra.mxu0 0.0
        %2438 = vmatprep.subr.mxu0 0.0
        %2439 = vmatpush1.msra.mxu0 0.0
        %2440 = vmatprep.subr.mxu0 0.0
        %2441 = vmatpush1.msra.mxu0 0.0
        %2442 = vmatprep.subr.mxu0 0.0
        %2443 = vmatpush1.msra.mxu0 0.0
        %2444 = vmatprep.subr.mxu0 0.0
        %2445 = vmatpush1.msra.mxu0 0.0
        %2446 = vmatprep.subr.mxu0 0.0
        %2447 = vmatpush1.msra.mxu0 0.0
        %2448 = vmatprep.subr.mxu0 0.0
        %2449 = vmatpush1.msra.mxu0 0.0
        %2450 = vmatprep.mubr.f32.mxu0 0.0
        %2451 = vmatmul.mubr.f32.gmra.mrb[0].mxu0 %v2384
        %v2452 = vpop.f32.mrb[0].mxu0
        %v2453 = vadd.f32 0.0, %v2452
        %v2454 = vpop.f32.mrb[0].mxu0
        %2455 = vdwg.mxu0
        %v2457 = vsel %vm638, %v1938, 0
        %2459 = vmatprep.subr.mxu0 0.0
        %2460 = vmatpush1.msra.mxu0 %v1944
        %2461 = vmatprep.subr.mxu0 0.0
        %2462 = vmatpush1.msra.mxu0 0.0
        %2463 = vmatprep.subr.mxu0 0.0
        %2464 = vmatpush1.msra.mxu0 0.0
        %2465 = vmatprep.subr.mxu0 0.0
        %2466 = vmatpush1.msra.mxu0 0.0
        %2467 = vmatprep.subr.mxu0 0.0
        %2468 = vmatpush1.msra.mxu0 0.0
        %2469 = vmatprep.subr.mxu0 0.0
        %2470 = vmatpush1.msra.mxu0 0.0
        %2471 = vmatprep.subr.mxu0 0.0
        %2472 = vmatpush1.msra.mxu0 0.0
        %2473 = vmatprep.subr.mxu0 0.0
        %2474 = vmatpush1.msra.mxu0 0.0
        %2475 = vmatprep.subr.mxu0 0.0
        %2476 = vmatpush1.msra.mxu0 0.0
        %2477 = vmatprep.subr.mxu0 0.0
        %2478 = vmatpush1.msra.mxu0 0.0
        %2479 = vmatprep.subr.mxu0 0.0
        %2480 = vmatpush1.msra.mxu0 0.0
        %2481 = vmatprep.subr.mxu0 0.0
        %2482 = vmatpush1.msra.mxu0 0.0
        %2483 = vmatprep.subr.mxu0 0.0
        %2484 = vmatpush1.msra.mxu0 0.0
        %2485 = vmatprep.subr.mxu0 0.0
        %2486 = vmatpush1.msra.mxu0 0.0
        %2487 = vmatprep.subr.mxu0 0.0
        %2488 = vmatpush1.msra.mxu0 0.0
        %2489 = vmatprep.subr.mxu0 0.0
        %2490 = vmatpush1.msra.mxu0 0.0
        %2491 = vmatprep.subr.mxu0 0.0
        %2492 = vmatpush1.msra.mxu0 0.0
        %2493 = vmatprep.subr.mxu0 0.0
        %2494 = vmatpush1.msra.mxu0 0.0
        %2495 = vmatprep.subr.mxu0 0.0
        %2496 = vmatpush1.msra.mxu0 0.0
        %2497 = vmatprep.subr.mxu0 0.0
        %2498 = vmatpush1.msra.mxu0 0.0
        %2499 = vmatprep.subr.mxu0 0.0
        %2500 = vmatpush1.msra.mxu0 0.0
        %2501 = vmatprep.subr.mxu0 0.0
        %2502 = vmatpush1.msra.mxu0 0.0
        %2503 = vmatprep.subr.mxu0 0.0
        %2504 = vmatpush1.msra.mxu0 0.0
        %2505 = vmatprep.subr.mxu0 0.0
        %2506 = vmatpush1.msra.mxu0 0.0
        %2507 = vmatprep.subr.mxu0 0.0
        %2508 = vmatpush1.msra.mxu0 0.0
        %2509 = vmatprep.subr.mxu0 0.0
        %2510 = vmatpush1.msra.mxu0 0.0
        %2511 = vmatprep.subr.mxu0 0.0
        %2512 = vmatpush1.msra.mxu0 0.0
        %2513 = vmatprep.subr.mxu0 0.0
        %2514 = vmatpush1.msra.mxu0 0.0
        %2515 = vmatprep.subr.mxu0 0.0
        %2516 = vmatpush1.msra.mxu0 0.0
        %2517 = vmatprep.subr.mxu0 0.0
        %2518 = vmatpush1.msra.mxu0 0.0
        %2519 = vmatprep.subr.mxu0 0.0
        %2520 = vmatpush1.msra.mxu0 0.0
        %2521 = vmatprep.subr.mxu0 0.0
        %2522 = vmatpush1.msra.mxu0 0.0
        %2523 = vmatprep.mubr.f32.mxu0 0.0
        %2524 = vmatmul.mubr.f32.gmra.mrb[0].mxu0 %v2457
        %v2525 = vpop.f32.mrb[0].mxu0
        %v2526 = vadd.f32 0.0, %v2525
        %v2527 = vpop.f32.mrb[0].mxu0
        %2528 = vdwg.mxu0
        %v2529 = vadd.f32 %v2015, %v2161
        %v2530 = vadd.f32 %v2529, %v2307
        %v2531 = vadd.f32 %v2530, %v2453
        %v2532 = vadd.f32 %v2088, %v2234
        %v2533 = vadd.f32 %v2532, %v2380
        %v2534 = vadd.f32 %v2533, %v2526
        %v2535 = vld [vmem:[%s5] sm:$0x1]
        %v2537 = vlaneseq
        %v2538 = vshrl.u32 %v2537, 7
        %v2539 = vsub.s32 0, %v2538
        %v2540 = vrot.slane %v2535, %v2539
        %v2542 = vadd.f32 %v2531, %v2540
        %v2543 = vadd.f32 %v2534, %v2540
        %v2544 = vadd.f32 %v488, %v2542
        %v2545 = vadd.f32 %v489, %v2543
        %v2546 = vld [vmem:[%s6] sm:$0x1]
        %v2547 = vld [vmem:[%s7] sm:$0x1]
        %2548 = vadd.xlane.f32.xlu0 %v2544
        %v2549 = vpop.xlane.xlu0 %2548
        %2550 = vadd.xlane.f32.xlu0 %v2545
        %v2551 = vpop.xlane.xlu0 %2550
        %v2552 = vrcp.pop 32.0
        %v2553 = vmul.f32 %v2549, %v2552
        %v2554 = vmul.f32 %v2551, %v2552
        %v2555 = vsub.f32 %v2544, %v2553
        %v2556 = vsub.f32 %v2545, %v2554
        %v2557 = vmul.f32 %v2555, %v2555
        %v2558 = vmul.f32 %v2556, %v2556
        %2559 = vadd.xlane.f32.xlu0 %v2557
        %v2560 = vpop.xlane.xlu0 %2559
        %2561 = vadd.xlane.f32.xlu0 %v2558
        %v2562 = vpop.xlane.xlu0 %2561
        %v2563 = vmul.f32 %v2553, 96.0
        %v2564 = vmul.f32 %v2554, 96.0
        %v2565 = vmul.f32 %v2563, %v2553
        %v2566 = vmul.f32 %v2564, %v2554
        %v2567 = vsub.f32 %v2560, %v2565
        %v2568 = vsub.f32 %v2562, %v2566
        %v2569 = vmul.f32 %v2567, %v2552
        %v2570 = vmul.f32 %v2568, %v2552
        %v2571 = vadd.f32 %v2569, 1e-05
        %v2572 = vadd.f32 %v2570, 1e-05
        %v2573 = vrsqrt.pop %v2571
        %v2574 = vrsqrt.pop %v2572
        %v2575 = vmul.f32 %v2555, %v2573
        %v2576 = vmul.f32 %v2556, %v2574
        %v2578 = vlaneseq
        %v2579 = vshrl.u32 %v2578, 7
        %v2580 = vsub.s32 0, %v2579
        %v2581 = vrot.slane %v2546, %v2580
        %v2583 = vmul.f32 %v2575, %v2581
        %v2584 = vmul.f32 %v2576, %v2581
        %v2586 = vlaneseq
        %v2587 = vshrl.u32 %v2586, 7
        %v2588 = vsub.s32 0, %v2587
        %v2589 = vrot.slane %v2547, %v2588
        %v2591 = vadd.f32 %v2583, %v2589
        %v2592 = vadd.f32 %v2584, %v2589
        %v2593 = vld [vmem:[%s8] sm:$0xff]
        %v2594 = vld [vmem:[%s8 + $0x8] sm:$0xff]
        %v2595 = vld [vmem:[%s8 + $0x10] sm:$0xff]
        %v2596 = vld [vmem:[%s8 + $0x18] sm:$0xff]
        %v2597 = vld [vmem:[%s8 + $0x20] sm:$0xff]
        %v2598 = vld [vmem:[%s8 + $0x28] sm:$0xff]
        %v2599 = vld [vmem:[%s8 + $0x30] sm:$0xff]
        %v2600 = vld [vmem:[%s8 + $0x38] sm:$0xff]
        %v2601 = vld [vmem:[%s8 + $0x40] sm:$0xff]
        %v2602 = vld [vmem:[%s8 + $0x48] sm:$0xff]
        %v2603 = vld [vmem:[%s8 + $0x50] sm:$0xff]
        %v2604 = vld [vmem:[%s8 + $0x58] sm:$0xff]
        %v2605 = vld [vmem:[%s8 + $0x60] sm:$0xff]
        %v2606 = vld [vmem:[%s8 + $0x68] sm:$0xff]
        %v2607 = vld [vmem:[%s8 + $0x70] sm:$0xff]
        %v2608 = vld [vmem:[%s8 + $0x78] sm:$0xff]
        %v2609 = vld [vmem:[%s9] sm:$0x1]
        %v2611 = vlaneseq
        %v2612 = vshrl.u32 %v2611, 7
        %v2613 = vsub.s32 0, %v2612
        %v2614 = vrot.slane %v2609, %v2613
        %2616 = vmatprep.subr.mxu0 0.0
        %2617 = vmatpush1.msra.mxu0 %v2593
        %2618 = vmatprep.subr.mxu0 0.0
        %2619 = vmatpush1.msra.mxu0 %v2594
        %2620 = vmatprep.subr.mxu0 0.0
        %2621 = vmatpush1.msra.mxu0 %v2595
        %2622 = vmatprep.subr.mxu0 0.0
        %2623 = vmatpush1.msra.mxu0 %v2596
        %2624 = vmatprep.subr.mxu0 0.0
        %2625 = vmatpush1.msra.mxu0 %v2597
        %2626 = vmatprep.subr.mxu0 0.0
        %2627 = vmatpush1.msra.mxu0 %v2598
        %2628 = vmatprep.subr.mxu0 0.0
        %2629 = vmatpush1.msra.mxu0 %v2599
        %2630 = vmatprep.subr.mxu0 0.0
        %2631 = vmatpush1.msra.mxu0 %v2600
        %2632 = vmatprep.subr.mxu0 0.0
        %2633 = vmatpush1.msra.mxu0 %v2601
        %2634 = vmatprep.subr.mxu0 0.0
        %2635 = vmatpush1.msra.mxu0 %v2602
        %2636 = vmatprep.subr.mxu0 0.0
        %2637 = vmatpush1.msra.mxu0 %v2603
        %2638 = vmatprep.subr.mxu0 0.0
        %2639 = vmatpush1.msra.mxu0 %v2604
        %2640 = vmatprep.subr.mxu0 0.0
        %2641 = vmatpush1.msra.mxu0 %v2605
        %2642 = vmatprep.subr.mxu0 0.0
        %2643 = vmatpush1.msra.mxu0 %v2606
        %2644 = vmatprep.subr.mxu0 0.0
        %2645 = vmatpush1.msra.mxu0 %v2607
        %2646 = vmatprep.subr.mxu0 0.0
        %2647 = vmatpush1.msra.mxu0 %v2608
        %2648 = vmatprep.subr.mxu0 0.0
        %2649 = vmatpush1.msra.mxu0 0.0
        %2650 = vmatprep.subr.mxu0 0.0
        %2651 = vmatpush1.msra.mxu0 0.0
        %2652 = vmatprep.subr.mxu0 0.0
        %2653 = vmatpush1.msra.mxu0 0.0
        %2654 = vmatprep.subr.mxu0 0.0
        %2655 = vmatpush1.msra.mxu0 0.0
        %2656 = vmatprep.subr.mxu0 0.0
        %2657 = vmatpush1.msra.mxu0 0.0
        %2658 = vmatprep.subr.mxu0 0.0
        %2659 = vmatpush1.msra.mxu0 0.0
        %2660 = vmatprep.subr.mxu0 0.0
        %2661 = vmatpush1.msra.mxu0 0.0
        %2662 = vmatprep.subr.mxu0 0.0
        %2663 = vmatpush1.msra.mxu0 0.0
        %2664 = vmatprep.subr.mxu0 0.0
        %2665 = vmatpush1.msra.mxu0 0.0
        %2666 = vmatprep.subr.mxu0 0.0
        %2667 = vmatpush1.msra.mxu0 0.0
        %2668 = vmatprep.subr.mxu0 0.0
        %2669 = vmatpush1.msra.mxu0 0.0
        %2670 = vmatprep.subr.mxu0 0.0
        %2671 = vmatpush1.msra.mxu0 0.0
        %2672 = vmatprep.subr.mxu0 0.0
        %2673 = vmatpush1.msra.mxu0 0.0
        %2674 = vmatprep.subr.mxu0 0.0
        %2675 = vmatpush1.msra.mxu0 0.0
        %2676 = vmatprep.subr.mxu0 0.0
        %2677 = vmatpush1.msra.mxu0 0.0
        %2678 = vmatprep.subr.mxu0 0.0
        %2679 = vmatpush1.msra.mxu0 0.0
        %2680 = vmatprep.mubr.f32.mxu0 0.0
        %2681 = vmatmul.mubr.f32.gmra.mrb[0].mxu0 %v2591
        %v2682 = vpop.f32.mrb[0].mxu0
        %v2683 = vadd.f32 %v2614, %v2682
        %v2684 = vpop.f32.mrb[0].mxu0
        %2685 = vmatprep.mubr.f32.mxu0 0.0
        %2686 = vmatmul.mubr.f32.gmra.mrb[0].mxu0 %v2592
        %v2687 = vpop.f32.mrb[0].mxu0
        %v2688 = vadd.f32 %v2614, %v2687
        %v2689 = vpop.f32.mrb[0].mxu0
        %2690 = vdwg.mxu0
        %v2691 = vmax.f32 %v2683, 0.0
        %v2692 = vmax.f32 %v2688, 0.0
        %v2693 = vld [vmem:[%s10] sm:$0xff]
        %v2694 = vld [vmem:[%s10 + $0x8] sm:$0xff]
        %v2695 = vld [vmem:[%s10 + $0x10] sm:$0xff]
        %v2696 = vld [vmem:[%s10 + $0x18] sm:$0xff]
        %v2697 = vld [vmem:[%s10 + $0x20] sm:$0xff]
        %v2698 = vld [vmem:[%s10 + $0x28] sm:$0xff]
        %v2699 = vld [vmem:[%s10 + $0x30] sm:$0xff]
        %v2700 = vld [vmem:[%s10 + $0x38] sm:$0xff]
        %v2701 = vld [vmem:[%s11] sm:$0x1]
        %v2703 = vlaneseq
        %v2704 = vshrl.u32 %v2703, 7
        %v2705 = vsub.s32 0, %v2704
        %v2706 = vrot.slane %v2701, %v2705
        %vm2708 = vcmask 523264
        %v2710 = vsel %vm2708, %v2691, 0
        %v2713 = vsel %vm2708, %v2692, 0
        %2715 = vmatprep.subr.mxu0 0.0
        %2716 = vmatpush1.msra.mxu0 %v2693
        %2717 = vmatprep.subr.mxu0 0.0
        %2718 = vmatpush1.msra.mxu0 %v2694
        %2719 = vmatprep.subr.mxu0 0.0
        %2720 = vmatpush1.msra.mxu0 %v2695
        %2721 = vmatprep.subr.mxu0 0.0
        %2722 = vmatpush1.msra.mxu0 %v2696
        %2723 = vmatprep.subr.mxu0 0.0
        %2724 = vmatpush1.msra.mxu0 %v2697
        %2725 = vmatprep.subr.mxu0 0.0
        %2726 = vmatpush1.msra.mxu0 %v2698
        %2727 = vmatprep.subr.mxu0 0.0
        %2728 = vmatpush1.msra.mxu0 %v2699
        %2729 = vmatprep.subr.mxu0 0.0
        %2730 = vmatpush1.msra.mxu0 %v2700
        %2731 = vmatprep.subr.mxu0 0.0
        %2732 = vmatpush1.msra.mxu0 0.0
        %2733 = vmatprep.subr.mxu0 0.0
        %2734 = vmatpush1.msra.mxu0 0.0
        %2735 = vmatprep.subr.mxu0 0.0
        %2736 = vmatpush1.msra.mxu0 0.0
        %2737 = vmatprep.subr.mxu0 0.0
        %2738 = vmatpush1.msra.mxu0 0.0
        %2739 = vmatprep.subr.mxu0 0.0
        %2740 = vmatpush1.msra.mxu0 0.0
        %2741 = vmatprep.subr.mxu0 0.0
        %2742 = vmatpush1.msra.mxu0 0.0
        %2743 = vmatprep.subr.mxu0 0.0
        %2744 = vmatpush1.msra.mxu0 0.0
        %2745 = vmatprep.subr.mxu0 0.0
        %2746 = vmatpush1.msra.mxu0 0.0
        %2747 = vmatprep.subr.mxu0 0.0
        %2748 = vmatpush1.msra.mxu0 0.0
        %2749 = vmatprep.subr.mxu0 0.0
        %2750 = vmatpush1.msra.mxu0 0.0
        %2751 = vmatprep.subr.mxu0 0.0
        %2752 = vmatpush1.msra.mxu0 0.0
        %2753 = vmatprep.subr.mxu0 0.0
        %2754 = vmatpush1.msra.mxu0 0.0
        %2755 = vmatprep.subr.mxu0 0.0
        %2756 = vmatpush1.msra.mxu0 0.0
        %2757 = vmatprep.subr.mxu0 0.0
        %2758 = vmatpush1.msra.mxu0 0.0
        %2759 = vmatprep.subr.mxu0 0.0
        %2760 = vmatpush1.msra.mxu0 0.0
        %2761 = vmatprep.subr.mxu0 0.0
        %2762 = vmatpush1.msra.mxu0 0.0
        %2763 = vmatprep.subr.mxu0 0.0
        %2764 = vmatpush1.msra.mxu0 0.0
        %2765 = vmatprep.subr.mxu0 0.0
        %2766 = vmatpush1.msra.mxu0 0.0
        %2767 = vmatprep.subr.mxu0 0.0
        %2768 = vmatpush1.msra.mxu0 0.0
        %2769 = vmatprep.subr.mxu0 0.0
        %2770 = vmatpush1.msra.mxu0 0.0
        %2771 = vmatprep.subr.mxu0 0.0
        %2772 = vmatpush1.msra.mxu0 0.0
        %2773 = vmatprep.subr.mxu0 0.0
        %2774 = vmatpush1.msra.mxu0 0.0
        %2775 = vmatprep.subr.mxu0 0.0
        %2776 = vmatpush1.msra.mxu0 0.0
        %2777 = vmatprep.subr.mxu0 0.0
        %2778 = vmatpush1.msra.mxu0 0.0
        %2779 = vmatprep.mubr.f32.mxu0 0.0
        %2780 = vmatmul.mubr.f32.gmra.mrb[0].mxu0 %v2710
        %v2781 = vpop.f32.mrb[0].mxu0
        %v2782 = vadd.f32 %v2706, %v2781
        %v2783 = vpop.f32.mrb[0].mxu0
        %2784 = vmatprep.mubr.f32.mxu0 0.0
        %2785 = vmatmul.mubr.f32.gmra.mrb[0].mxu0 %v2713
        %v2786 = vpop.f32.mrb[0].mxu0
        %v2787 = vadd.f32 %v2706, %v2786
        %v2788 = vpop.f32.mrb[0].mxu0
        %2789 = vdwg.mxu0
        %v2790 = vadd.f32 %v2591, %v2782
        %v2791 = vadd.f32 %v2592, %v2787
        %v2792 = vld [vmem:[%s12] sm:$0x1]
        %v2793 = vld [vmem:[%s13] sm:$0x1]
        %2794 = vadd.xlane.f32.xlu0 %v2790
        %v2795 = vpop.xlane.xlu0 %2794
        %2796 = vadd.xlane.f32.xlu0 %v2791
        %v2797 = vpop.xlane.xlu0 %2796
        %v2798 = vmul.f32 %v2795, %v2552
        %v2799 = vmul.f32 %v2797, %v2552
        %v2800 = vsub.f32 %v2790, %v2798
        %v2801 = vsub.f32 %v2791, %v2799
        %v2802 = vmul.f32 %v2800, %v2800
        %v2803 = vmul.f32 %v2801, %v2801
        %2804 = vadd.xlane.f32.xlu0 %v2802
        %v2805 = vpop.xlane.xlu0 %2804
        %2806 = vadd.xlane.f32.xlu0 %v2803
        %v2807 = vpop.xlane.xlu0 %2806
        %v2808 = vmul.f32 %v2798, 96.0
        %v2809 = vmul.f32 %v2799, 96.0
        %v2810 = vmul.f32 %v2808, %v2798
        %v2811 = vmul.f32 %v2809, %v2799
        %v2812 = vsub.f32 %v2805, %v2810
        %v2813 = vsub.f32 %v2807, %v2811
        %v2814 = vmul.f32 %v2812, %v2552
        %v2815 = vmul.f32 %v2813, %v2552
        %v2816 = vadd.f32 %v2814, 1e-05
        %v2817 = vadd.f32 %v2815, 1e-05
        %v2818 = vrsqrt.pop %v2816
        %v2819 = vrsqrt.pop %v2817
        %v2820 = vmul.f32 %v2800, %v2818
        %v2821 = vmul.f32 %v2801, %v2819
        %v2823 = vlaneseq
        %v2824 = vshrl.u32 %v2823, 7
        %v2825 = vsub.s32 0, %v2824
        %v2826 = vrot.slane %v2792, %v2825
        %v2828 = vmul.f32 %v2820, %v2826
        %v2829 = vmul.f32 %v2821, %v2826
        %v2831 = vlaneseq
        %v2832 = vshrl.u32 %v2831, 7
        %v2833 = vsub.s32 0, %v2832
        %v2834 = vrot.slane %v2793, %v2833
        %v2836 = vadd.f32 %v2828, %v2834
        %v2837 = vadd.f32 %v2829, %v2834
        %2838 = vst [vmem:[%s475] sm:$0xff] %v2836
        %2839 = vst [vmem:[%s475 + $0x8] sm:$0xff] %v2837
        %s2840 = sand.u32 %s340, 1
        %s2841 = scalar_lea.sflag [#allocation3], %s2840
        %s2842 = sand.u32 %s340, 1
        %s2843 = smul.addr %s2842, 16
        %s2844 = scalar_lea.vmem [#allocation2], %s2843
        // Predicated region
        $region77: #{tpu_custom_call.1} parent=75 // pred_check
          %p2845 = pneg %p350
        $region78: #{tpu_custom_call.1} parent=75 // pred_check_branch
          %2847 = sbr.rel (%p2845) target = $region80
        $region79: #{tpu_custom_call.1} parent=75 // pred_region
          %s2848 = smul.u32 2, %s28
          %s2850 = ssub.s32 256, 256
          %2851 = vsyncadd %s2841, %s2850
          %s2852 = smul.addr %s2848, 128
          %s2853 = scalar_lea.hbm %s14, %s2852
          %s2854 = sshll.u32 %s2844, 4
          %s2855 = int_to_ptr.vmem [resolvable:$true] %s2854
          %2860 = dma.vmem_to_hbm [thread:$0]  %s2855, 256, %s2853, %s2841, 128, 128, 8
        $region80: #{tpu_custom_call.1} parent=75 // pred_fallthru
          _
      $region76: #{tpu_custom_call.1} parent=5 // pred_fallthru
        _
      %p2861 = scmp.le.s32.totalorder 2, %s23
      // Predicated region
      $region81: #{tpu_custom_call.1} parent=5 // pred_check
        %p2862 = pneg %p2861
      $region82: #{tpu_custom_call.1} parent=5 // pred_check_branch
        %2864 = sbr.rel (%p2862) target = $region84
      $region83: #{tpu_custom_call.1} parent=5 // pred_region
        %s2865 = ssub.s32 %s23, 2
        // Predicated region
        $region85: #{tpu_custom_call.1} parent=83 // pred_check
          %p2866 = pneg %p356
        $region86: #{tpu_custom_call.1} parent=83 // pred_check_branch
          %2868 = sbr.rel (%p2866) target = $region88
        $region87: #{tpu_custom_call.1} parent=83 // pred_region
          %s2869 = sand.u32 %s341, 1
          %s2870 = scalar_lea.sflag [#allocation3], %s2869
          %s2871 = sand.u32 %s341, 1
          %s2872 = smul.addr %s2871, 16
          %s2873 = scalar_lea.vmem [#allocation2], %s2872
          %2874 = dma.done %s2870, 256
        $region88: #{tpu_custom_call.1} parent=83 // pred_fallthru
          _
      $region84: #{tpu_custom_call.1} parent=5 // pred_fallthru
        _
    $region6: #{tpu_custom_call.1} parent=1 // loop_footer
      %s27 = sadd.s32 1, %s23
    $region7: #{tpu_custom_call.1} parent=1 // loop_footer_branch
      %22 = sbr.rel target = $region3
    $region8: #{tpu_custom_call.1} parent=1 // loop_exit
      _
    %2875 = vsyncpa [#allocation3], 1
    %s2876 = scalar_lea.sflag [#allocation3], 1
    %2877 = vsyncpa %s2876, 1

</llo_original>
